<compile_context>
chip_gen: v7x
topology: tpu7x:2x2x1
jax: 0.10.0
libtpu: 0.0.40
codegen_flags: <defaults>
</compile_context>

<pallas_src>
import functools

import jax
import jax.numpy as jnp
from jax.experimental import pallas as pl
from jax.experimental.pallas import tpu as pltpu


def _round_up(x, m):
    return ((x + m - 1) // m) * m


# ----------------------------------------------------------------------------
# Pallas kernels
# ----------------------------------------------------------------------------
def _matmul_bias_kernel(a_ref, w_ref, b_ref, o_ref, *, relu):
    # a: (TM, K) bf16, w: (K, N) bf16, b: (1, N) f32 -> o: (TM, N) f32
    acc = jnp.dot(a_ref[...], w_ref[...], preferred_element_type=jnp.float32)
    acc = acc + b_ref[...]
    if relu:
        acc = jnp.maximum(acc, 0.0)
    o_ref[...] = acc.astype(o_ref.dtype)


def _max9_kernel(x_ref, o_ref):
    # x: (9, TM, C) pooling-window taps -> o: (TM, C) = max over taps.
    m = x_ref[0]
    for k in range(1, 9):
        m = jnp.maximum(m, x_ref[k])
    o_ref[...] = m


def _fc_head_kernel(x_ref, w1_ref, b1_ref, w2_ref, b2_ref, w3_ref, b3_ref,
                    o_ref):
    # Fused fc1 -> ReLU -> fc2 -> ReLU -> fc3 -> log_softmax.
    h = jnp.dot(x_ref[...], w1_ref[...], preferred_element_type=jnp.float32)
    h = jnp.maximum(h + b1_ref[...], 0.0)
    h = jnp.dot(h.astype(w2_ref.dtype), w2_ref[...],
                preferred_element_type=jnp.float32)
    h = jnp.maximum(h + b2_ref[...], 0.0)
    z = jnp.dot(h.astype(w3_ref.dtype), w3_ref[...],
                preferred_element_type=jnp.float32)
    z = z + b3_ref[...]
    m = jnp.max(z, axis=-1, keepdims=True)
    s = jnp.sum(jnp.exp(z - m), axis=-1, keepdims=True)
    o_ref[...] = (z - m - jnp.log(s)).astype(o_ref.dtype)


# ----------------------------------------------------------------------------
# Wrappers (im2col / pool-window extraction = XLA glue, compute = Pallas)
# ----------------------------------------------------------------------------
def conv2d_relu_nhwc(x, w_packed, b_packed, *, kh=5, kw=5, tile_m=512):
    """x: (B, H, W, C) bf16 NHWC.  w_packed: (Kp, Np) bf16 with (i, j, c)
    K-ordering, zero-padded to multiples of 128.  b_packed: (1, Np) f32.
    Returns (B, Ho, Wo, Np) f32 after bias + ReLU (padded channels are 0)."""
    B, H, W, C = x.shape
    Kp, Np = w_packed.shape
    Ho, Wo = H - kh + 1, W - kw + 1

    taps = [x[:, i:i + Ho, j:j + Wo, :] for i in range(kh) for j in range(kw)]
    cols = jnp.stack(taps, axis=3).reshape(B * Ho * Wo, kh * kw * C)
    M, K = cols.shape

    tm = min(tile_m, _round_up(M, 8))
    Mp = _round_up(M, tm)
    cols = jnp.pad(cols, ((0, Mp - M), (0, Kp - K)))

    out = pl.pallas_call(
        functools.partial(_matmul_bias_kernel, relu=True),
        out_shape=jax.ShapeDtypeStruct((Mp, Np), jnp.float32),
        grid=(Mp // tm,),
        in_specs=[
            pl.BlockSpec((tm, Kp), lambda i: (i, 0)),
            pl.BlockSpec((Kp, Np), lambda i: (0, 0)),
            pl.BlockSpec((1, Np), lambda i: (0, 0)),
        ],
        out_specs=pl.BlockSpec((tm, Np), lambda i: (i, 0)),
        compiler_params=pltpu.CompilerParams(
            dimension_semantics=("parallel",)),
    )(cols, w_packed, b_packed)
    return out[:M].reshape(B, Ho, Wo, Np)


def maxpool_3x2_nhwc(x, *, tile_m=512):
    """MaxPool2d(kernel_size=3, stride=2) on NHWC input (lane-dense channels)."""
    B, H, W, C = x.shape
    Ho = (H - 3) // 2 + 1
    Wo = (W - 3) // 2 + 1
    taps = [x[:, i:i + 2 * Ho - 1:2, j:j + 2 * Wo - 1:2, :]
            for i in range(3) for j in range(3)]
    stacked = jnp.stack(taps, axis=0).reshape(9, B * Ho * Wo, C)
    M = B * Ho * Wo

    tm = min(tile_m, _round_up(M, 8))
    Mp = _round_up(M, tm)
    stacked = jnp.pad(stacked, ((0, 0), (0, Mp - M), (0, 0)))

    out = pl.pallas_call(
        _max9_kernel,
        out_shape=jax.ShapeDtypeStruct((Mp, C), jnp.float32),
        grid=(Mp // tm,),
        in_specs=[pl.BlockSpec((9, tm, C), lambda i: (0, i, 0))],
        out_specs=pl.BlockSpec((tm, C), lambda i: (i, 0)),
        compiler_params=pltpu.CompilerParams(
            dimension_semantics=("parallel",)),
    )(stacked)
    return out[:M].reshape(B, Ho, Wo, C)


def fc_head(x, packed, *, tile_b=256):
    """x: (B, 1024) bf16.  Fused fc1/fc2/fc3/log_softmax.  Returns (B, nc) f32."""
    B, K = x.shape
    N1 = packed["fc1_w"].shape[1]
    N2 = packed["fc2_w"].shape[1]
    N3 = packed["fc3_w"].shape[1]

    tb = min(tile_b, _round_up(B, 8))
    Bp = _round_up(B, tb)
    xp = jnp.pad(x, ((0, Bp - B), (0, 0)))

    full = lambda i: (0, 0)
    out = pl.pallas_call(
        _fc_head_kernel,
        out_shape=jax.ShapeDtypeStruct((Bp, N3), jnp.float32),
        grid=(Bp // tb,),
        in_specs=[
            pl.BlockSpec((tb, K), lambda i: (i, 0)),
            pl.BlockSpec((K, N1), full), pl.BlockSpec((1, N1), full),
            pl.BlockSpec((N1, N2), full), pl.BlockSpec((1, N2), full),
            pl.BlockSpec((N2, N3), full), pl.BlockSpec((1, N3), full),
        ],
        out_specs=pl.BlockSpec((tb, N3), lambda i: (i, 0)),
        compiler_params=pltpu.CompilerParams(
            dimension_semantics=("parallel",)),
    )(xp, packed["fc1_w"], packed["fc1_b"], packed["fc2_w"], packed["fc2_b"],
      packed["fc3_w"], packed["fc3_b"])
    return out[:B]


# ----------------------------------------------------------------------------
# Parameters: PyTorch-style init, then one-time packing (transpose/pad/bf16)
# ----------------------------------------------------------------------------
def init_params(key, num_classes):
    """PyTorch-style uniform(-1/sqrt(fan_in), 1/sqrt(fan_in)), PyTorch layouts."""
    def uni(k, shape, fan_in):
        bound = 1.0 / jnp.sqrt(jnp.float32(fan_in))
        return jax.random.uniform(k, shape, jnp.float32, -bound, bound)

    ks = jax.random.split(key, 10)
    return {
        "conv1_w": uni(ks[0], (64, 3, 5, 5), 3 * 5 * 5),
        "conv1_b": uni(ks[1], (64,), 3 * 5 * 5),
        "conv2_w": uni(ks[2], (64, 64, 5, 5), 64 * 5 * 5),
        "conv2_b": uni(ks[3], (64,), 64 * 5 * 5),
        "fc1_w": uni(ks[4], (384, 64 * 4 * 4), 64 * 4 * 4),
        "fc1_b": uni(ks[5], (384,), 64 * 4 * 4),
        "fc2_w": uni(ks[6], (192, 384), 384),
        "fc2_b": uni(ks[7], (192,), 384),
        "fc3_w": uni(ks[8], (num_classes, 192), 192),
        "fc3_b": uni(ks[9], (num_classes,), 192),
    }


def pack_params(p):
    """One-time packing: conv weights -> (K, O) with (i, j, c) ordering, zero
    padded to 128-multiples, bf16; FC weights pre-transposed to (K, N) bf16."""
    def pack_conv(w, b):
        o, c_in, kh, kw = w.shape
        wk = jnp.transpose(w, (2, 3, 1, 0)).reshape(kh * kw * c_in, o)
        kp = _round_up(wk.shape[0], 128)
        np_ = _round_up(o, 128)
        wk = jnp.pad(wk, ((0, kp - wk.shape[0]), (0, np_ - o)))
        bk = jnp.pad(b, (0, np_ - o)).reshape(1, np_).astype(jnp.float32)
        return wk.astype(jnp.bfloat16), bk

    packed = {}
    packed["conv1_w"], packed["conv1_b"] = pack_conv(p["conv1_w"], p["conv1_b"])
    packed["conv2_w"], packed["conv2_b"] = pack_conv(p["conv2_w"], p["conv2_b"])
    packed["fc1_w"] = p["fc1_w"].T.astype(jnp.bfloat16)
    packed["fc1_b"] = p["fc1_b"].reshape(1, -1).astype(jnp.float32)
    packed["fc2_w"] = p["fc2_w"].T.astype(jnp.bfloat16)
    packed["fc2_b"] = p["fc2_b"].reshape(1, -1).astype(jnp.float32)
    packed["fc3_w"] = p["fc3_w"].T.astype(jnp.bfloat16)
    packed["fc3_b"] = p["fc3_b"].reshape(1, -1).astype(jnp.float32)
    return packed


# ----------------------------------------------------------------------------
# Forward pass
# ----------------------------------------------------------------------------
def cnn_cifar_forward(packed, x):
    """x: (B, 3, 32, 32) float32 NCHW. Returns (B, num_classes) log-probs."""
    x = jnp.transpose(x, (0, 2, 3, 1)).astype(jnp.bfloat16)          # NHWC
    y = conv2d_relu_nhwc(x, packed["conv1_w"], packed["conv1_b"])    # (B,28,28,128)
    y = maxpool_3x2_nhwc(y)                                          # (B,13,13,128)
    y = y[..., :64].astype(jnp.bfloat16)                             # drop pad chans
    y = conv2d_relu_nhwc(y, packed["conv2_w"], packed["conv2_b"])    # (B,9,9,128)
    y = maxpool_3x2_nhwc(y)                                          # (B,4,4,128)
    y = y[..., :64]                                                  # (B,4,4,64)
    B = y.shape[0]
    # PyTorch x.view(-1, 64*4*4) flattens NCHW -> (C, H, W) order.
    y = jnp.transpose(y, (0, 3, 1, 2)).reshape(B, 64 * 4 * 4)
    return fc_head(y.astype(jnp.bfloat16), packed)


if __name__ == "__main__":
    num_classes = 10
    key = jax.random.PRNGKey(0)
    k_param, k_x = jax.random.split(key)
    params = init_params(k_param, num_classes)
    packed = pack_params(params)

    # 32x32 spatial is required by the module (fc1 expects 64*4*4 features).
    x = jax.random.normal(k_x, (2, 3, 32, 32), dtype=jnp.float32)

    out = jax.jit(cnn_cifar_forward)(packed, x)
    out = jax.block_until_ready(out)

    assert out.shape == (2, num_classes)
    # log_softmax sanity: rows exponentiate-sum to 1.
    assert jnp.allclose(jnp.sum(jnp.exp(out), axis=1), 1.0, atol=1e-3)
    print("KERNEL_OK")
</pallas_src>

<mosaic_0001>
module attributes {stable_mosaic.version = 11 : i64} {
  func.func @_matmul_bias_kernel(%arg0: i32, %arg1: memref<512x128xbf16, #tpu.memory_space<vmem>>, %arg2: memref<128x128xbf16, #tpu.memory_space<vmem>>, %arg3: memref<1x128xf32, #tpu.memory_space<vmem>>, %arg4: memref<512x128xf32, #tpu.memory_space<vmem>>) attributes {dimension_semantics = [#tpu.dimension_semantics<parallel>], iteration_bounds = array<i64: 4>, scalar_prefetch = 0 : i64, scratch_operands = 0 : i64, tpu.core_type = #tpu.core_type<tc>, window_params = [{transform_indices = @transform_0, window_bounds = array<i64: 512, 128>}, {pipeline_mode = #tpu.pipeline_mode<synchronous>, transform_indices = @transform_1, window_bounds = array<i64: 128, 128>}, {pipeline_mode = #tpu.pipeline_mode<synchronous>, transform_indices = @transform_2, window_bounds = array<i64: 1, 128>}, {transform_indices = @transform_3, window_bounds = array<i64: 512, 128>}]} {
    %c0 = arith.constant 0 : index
    %c0_0 = arith.constant 0 : index
    %0 = vector.load %arg1[%c0, %c0_0] : memref<512x128xbf16, #tpu.memory_space<vmem>>, vector<512x128xbf16>
    %c0_1 = arith.constant 0 : index
    %c0_2 = arith.constant 0 : index
    %1 = vector.load %arg2[%c0_1, %c0_2] : memref<128x128xbf16, #tpu.memory_space<vmem>>, vector<128x128xbf16>
    %cst = arith.constant dense<0.000000e+00> : vector<512x128xf32>
    %2 = tpu.matmul %0, %1, %cst {dimension_numbers = #tpu.dot_dimension_numbers<[1], [0], [0], [1], [0, 0, 1, 1], [], []>} : vector<512x128xbf16>, vector<128x128xbf16>, vector<512x128xf32> -> vector<512x128xf32>
    %c0_3 = arith.constant 0 : index
    %c0_4 = arith.constant 0 : index
    %3 = vector.load %arg3[%c0_3, %c0_4] : memref<1x128xf32, #tpu.memory_space<vmem>>, vector<1x128xf32>
    %4 = vector.broadcast %3 : vector<1x128xf32> to vector<512x128xf32>
    %5 = arith.addf %2, %4 : vector<512x128xf32>
    %cst_5 = arith.constant 0.000000e+00 : f32
    %6 = vector.broadcast %cst_5 : f32 to vector<512x128xf32>
    %7 = arith.maximumf %5, %6 : vector<512x128xf32>
    %c0_6 = arith.constant 0 : index
    %c0_7 = arith.constant 0 : index
    %8 = vector.load %arg4[%c0_6, %c0_7] : memref<512x128xf32, #tpu.memory_space<vmem>>, vector<512x128xf32>
    tpu.vector_store %arg4[%c0_6, %c0_7], %7 {strides = array<i32>} : memref<512x128xf32, #tpu.memory_space<vmem>>, vector<512x128xf32>,
    return
  }
  func.func @transform_0(%arg0: i32) -> (i32, i32) {
    %c0_i32 = arith.constant 0 : i32
    %c0_i32_0 = arith.constant 0 : i32
    return %arg0, %c0_i32 : i32, i32
  }
  func.func @transform_1(%arg0: i32) -> (i32, i32) {
    %c0_i32 = arith.constant 0 : i32
    %c0_i32_0 = arith.constant 0 : i32
    %c0_i32_1 = arith.constant 0 : i32
    return %c0_i32, %c0_i32_0 : i32, i32
  }
  func.func @transform_2(%arg0: i32) -> (i32, i32) {
    %c0_i32 = arith.constant 0 : i32
    %c0_i32_0 = arith.constant 0 : i32
    %c0_i32_1 = arith.constant 0 : i32
    return %c0_i32, %c0_i32_0 : i32, i32
  }
  func.func @transform_3(%arg0: i32) -> (i32, i32) {
    %c0_i32 = arith.constant 0 : i32
    %c0_i32_0 = arith.constant 0 : i32
    return %arg0, %c0_i32 : i32, i32
  }
}

module attributes {stable_mosaic.version = 11 : i64} {
  func.func @_max9_kernel(%arg0: i32, %arg1: memref<9x344x128xf32, #tpu.memory_space<vmem>>, %arg2: memref<344x128xf32, #tpu.memory_space<vmem>>) attributes {dimension_semantics = [#tpu.dimension_semantics<parallel>], iteration_bounds = array<i64: 1>, scalar_prefetch = 0 : i64, scratch_operands = 0 : i64, tpu.core_type = #tpu.core_type<tc>, window_params = [{transform_indices = @transform_0, window_bounds = array<i64: 9, 344, 128>}, {transform_indices = @transform_1, window_bounds = array<i64: 344, 128>}]} {
    %c0 = arith.constant 0 : index
    %c0_0 = arith.constant 0 : index
    %c0_1 = arith.constant 0 : index
    %0 = vector.load %arg1[%c0, %c0_0, %c0_1] : memref<9x344x128xf32, #tpu.memory_space<vmem>>, vector<1x344x128xf32>
    %1 = vector.shape_cast %0 : vector<1x344x128xf32> to vector<344x128xf32>
    %c1 = arith.constant 1 : index
    %c0_2 = arith.constant 0 : index
    %c0_3 = arith.constant 0 : index
    %2 = vector.load %arg1[%c1, %c0_2, %c0_3] : memref<9x344x128xf32, #tpu.memory_space<vmem>>, vector<1x344x128xf32>
    %3 = vector.shape_cast %2 : vector<1x344x128xf32> to vector<344x128xf32>
    %4 = arith.maximumf %1, %3 : vector<344x128xf32>
    %c2 = arith.constant 2 : index
    %c0_4 = arith.constant 0 : index
    %c0_5 = arith.constant 0 : index
    %5 = vector.load %arg1[%c2, %c0_4, %c0_5] : memref<9x344x128xf32, #tpu.memory_space<vmem>>, vector<1x344x128xf32>
    %6 = vector.shape_cast %5 : vector<1x344x128xf32> to vector<344x128xf32>
    %7 = arith.maximumf %4, %6 : vector<344x128xf32>
    %c3 = arith.constant 3 : index
    %c0_6 = arith.constant 0 : index
    %c0_7 = arith.constant 0 : index
    %8 = vector.load %arg1[%c3, %c0_6, %c0_7] : memref<9x344x128xf32, #tpu.memory_space<vmem>>, vector<1x344x128xf32>
    %9 = vector.shape_cast %8 : vector<1x344x128xf32> to vector<344x128xf32>
    %10 = arith.maximumf %7, %9 : vector<344x128xf32>
    %c4 = arith.constant 4 : index
    %c0_8 = arith.constant 0 : index
    %c0_9 = arith.constant 0 : index
    %11 = vector.load %arg1[%c4, %c0_8, %c0_9] : memref<9x344x128xf32, #tpu.memory_space<vmem>>, vector<1x344x128xf32>
    %12 = vector.shape_cast %11 : vector<1x344x128xf32> to vector<344x128xf32>
    %13 = arith.maximumf %10, %12 : vector<344x128xf32>
    %c5 = arith.constant 5 : index
    %c0_10 = arith.constant 0 : index
    %c0_11 = arith.constant 0 : index
    %14 = vector.load %arg1[%c5, %c0_10, %c0_11] : memref<9x344x128xf32, #tpu.memory_space<vmem>>, vector<1x344x128xf32>
    %15 = vector.shape_cast %14 : vector<1x344x128xf32> to vector<344x128xf32>
    %16 = arith.maximumf %13, %15 : vector<344x128xf32>
    %c6 = arith.constant 6 : index
    %c0_12 = arith.constant 0 : index
    %c0_13 = arith.constant 0 : index
    %17 = vector.load %arg1[%c6, %c0_12, %c0_13] : memref<9x344x128xf32, #tpu.memory_space<vmem>>, vector<1x344x128xf32>
    %18 = vector.shape_cast %17 : vector<1x344x128xf32> to vector<344x128xf32>
    %19 = arith.maximumf %16, %18 : vector<344x128xf32>
    %c7 = arith.constant 7 : index
    %c0_14 = arith.constant 0 : index
    %c0_15 = arith.constant 0 : index
    %20 = vector.load %arg1[%c7, %c0_14, %c0_15] : memref<9x344x128xf32, #tpu.memory_space<vmem>>, vector<1x344x128xf32>
    %21 = vector.shape_cast %20 : vector<1x344x128xf32> to vector<344x128xf32>
    %22 = arith.maximumf %19, %21 : vector<344x128xf32>
    %c8 = arith.constant 8 : index
    %c0_16 = arith.constant 0 : index
    %c0_17 = arith.constant 0 : index
    %23 = vector.load %arg1[%c8, %c0_16, %c0_17] : memref<9x344x128xf32, #tpu.memory_space<vmem>>, vector<1x344x128xf32>
    %24 = vector.shape_cast %23 : vector<1x344x128xf32> to vector<344x128xf32>
    %25 = arith.maximumf %22, %24 : vector<344x128xf32>
    %c0_18 = arith.constant 0 : index
    %c0_19 = arith.constant 0 : index
    %26 = vector.load %arg2[%c0_18, %c0_19] : memref<344x128xf32, #tpu.memory_space<vmem>>, vector<344x128xf32>
    tpu.vector_store %arg2[%c0_18, %c0_19], %25 {strides = array<i32>} : memref<344x128xf32, #tpu.memory_space<vmem>>, vector<344x128xf32>,
    return
  }
  func.func @transform_0(%arg0: i32) -> (i32, i32, i32) {
    %c0_i32 = arith.constant 0 : i32
    %c0_i32_0 = arith.constant 0 : i32
    %c0_i32_1 = arith.constant 0 : i32
    return %c0_i32, %arg0, %c0_i32_0 : i32, i32, i32
  }
  func.func @transform_1(%arg0: i32) -> (i32, i32) {
    %c0_i32 = arith.constant 0 : i32
    %c0_i32_0 = arith.constant 0 : i32
    return %arg0, %c0_i32 : i32, i32
  }
}

module attributes {stable_mosaic.version = 11 : i64} {
  func.func @_matmul_bias_kernel(%arg0: i32, %arg1: memref<168x1664xbf16, #tpu.memory_space<vmem>>, %arg2: memref<1664x128xbf16, #tpu.memory_space<vmem>>, %arg3: memref<1x128xf32, #tpu.memory_space<vmem>>, %arg4: memref<168x128xf32, #tpu.memory_space<vmem>>) attributes {dimension_semantics = [#tpu.dimension_semantics<parallel>], iteration_bounds = array<i64: 1>, scalar_prefetch = 0 : i64, scratch_operands = 0 : i64, tpu.core_type = #tpu.core_type<tc>, window_params = [{transform_indices = @transform_0, window_bounds = array<i64: 168, 1664>}, {pipeline_mode = #tpu.pipeline_mode<synchronous>, transform_indices = @transform_1, window_bounds = array<i64: 1664, 128>}, {pipeline_mode = #tpu.pipeline_mode<synchronous>, transform_indices = @transform_2, window_bounds = array<i64: 1, 128>}, {transform_indices = @transform_3, window_bounds = array<i64: 168, 128>}]} {
    %c0 = arith.constant 0 : index
    %c0_0 = arith.constant 0 : index
    %0 = vector.load %arg1[%c0, %c0_0] : memref<168x1664xbf16, #tpu.memory_space<vmem>>, vector<168x1664xbf16>
    %c0_1 = arith.constant 0 : index
    %c0_2 = arith.constant 0 : index
    %1 = vector.load %arg2[%c0_1, %c0_2] : memref<1664x128xbf16, #tpu.memory_space<vmem>>, vector<1664x128xbf16>
    %cst = arith.constant dense<0.000000e+00> : vector<168x128xf32>
    %2 = tpu.matmul %0, %1, %cst {dimension_numbers = #tpu.dot_dimension_numbers<[1], [0], [0], [1], [0, 0, 1, 1], [], []>} : vector<168x1664xbf16>, vector<1664x128xbf16>, vector<168x128xf32> -> vector<168x128xf32>
    %c0_3 = arith.constant 0 : index
    %c0_4 = arith.constant 0 : index
    %3 = vector.load %arg3[%c0_3, %c0_4] : memref<1x128xf32, #tpu.memory_space<vmem>>, vector<1x128xf32>
    %4 = vector.broadcast %3 : vector<1x128xf32> to vector<168x128xf32>
    %5 = arith.addf %2, %4 : vector<168x128xf32>
    %cst_5 = arith.constant 0.000000e+00 : f32
    %6 = vector.broadcast %cst_5 : f32 to vector<168x128xf32>
    %7 = arith.maximumf %5, %6 : vector<168x128xf32>
    %c0_6 = arith.constant 0 : index
    %c0_7 = arith.constant 0 : index
    %8 = vector.load %arg4[%c0_6, %c0_7] : memref<168x128xf32, #tpu.memory_space<vmem>>, vector<168x128xf32>
    tpu.vector_store %arg4[%c0_6, %c0_7], %7 {strides = array<i32>} : memref<168x128xf32, #tpu.memory_space<vmem>>, vector<168x128xf32>,
    return
  }
  func.func @transform_0(%arg0: i32) -> (i32, i32) {
    %c0_i32 = arith.constant 0 : i32
    %c0_i32_0 = arith.constant 0 : i32
    return %arg0, %c0_i32 : i32, i32
  }
  func.func @transform_1(%arg0: i32) -> (i32, i32) {
    %c0_i32 = arith.constant 0 : i32
    %c0_i32_0 = arith.constant 0 : i32
    %c0_i32_1 = arith.constant 0 : i32
    return %c0_i32, %c0_i32_0 : i32, i32
  }
  func.func @transform_2(%arg0: i32) -> (i32, i32) {
    %c0_i32 = arith.constant 0 : i32
    %c0_i32_0 = arith.constant 0 : i32
    %c0_i32_1 = arith.constant 0 : i32
    return %c0_i32, %c0_i32_0 : i32, i32
  }
  func.func @transform_3(%arg0: i32) -> (i32, i32) {
    %c0_i32 = arith.constant 0 : i32
    %c0_i32_0 = arith.constant 0 : i32
    return %arg0, %c0_i32 : i32, i32
  }
}

module attributes {stable_mosaic.version = 11 : i64} {
  func.func @_max9_kernel(%arg0: i32, %arg1: memref<9x32x128xf32, #tpu.memory_space<vmem>>, %arg2: memref<32x128xf32, #tpu.memory_space<vmem>>) attributes {dimension_semantics = [#tpu.dimension_semantics<parallel>], iteration_bounds = array<i64: 1>, scalar_prefetch = 0 : i64, scratch_operands = 0 : i64, tpu.core_type = #tpu.core_type<tc>, window_params = [{transform_indices = @transform_0, window_bounds = array<i64: 9, 32, 128>}, {transform_indices = @transform_1, window_bounds = array<i64: 32, 128>}]} {
    %c0 = arith.constant 0 : index
    %c0_0 = arith.constant 0 : index
    %c0_1 = arith.constant 0 : index
    %0 = vector.load %arg1[%c0, %c0_0, %c0_1] : memref<9x32x128xf32, #tpu.memory_space<vmem>>, vector<1x32x128xf32>
    %1 = vector.shape_cast %0 : vector<1x32x128xf32> to vector<32x128xf32>
    %c1 = arith.constant 1 : index
    %c0_2 = arith.constant 0 : index
    %c0_3 = arith.constant 0 : index
    %2 = vector.load %arg1[%c1, %c0_2, %c0_3] : memref<9x32x128xf32, #tpu.memory_space<vmem>>, vector<1x32x128xf32>
    %3 = vector.shape_cast %2 : vector<1x32x128xf32> to vector<32x128xf32>
    %4 = arith.maximumf %1, %3 : vector<32x128xf32>
    %c2 = arith.constant 2 : index
    %c0_4 = arith.constant 0 : index
    %c0_5 = arith.constant 0 : index
    %5 = vector.load %arg1[%c2, %c0_4, %c0_5] : memref<9x32x128xf32, #tpu.memory_space<vmem>>, vector<1x32x128xf32>
    %6 = vector.shape_cast %5 : vector<1x32x128xf32> to vector<32x128xf32>
    %7 = arith.maximumf %4, %6 : vector<32x128xf32>
    %c3 = arith.constant 3 : index
    %c0_6 = arith.constant 0 : index
    %c0_7 = arith.constant 0 : index
    %8 = vector.load %arg1[%c3, %c0_6, %c0_7] : memref<9x32x128xf32, #tpu.memory_space<vmem>>, vector<1x32x128xf32>
    %9 = vector.shape_cast %8 : vector<1x32x128xf32> to vector<32x128xf32>
    %10 = arith.maximumf %7, %9 : vector<32x128xf32>
    %c4 = arith.constant 4 : index
    %c0_8 = arith.constant 0 : index
    %c0_9 = arith.constant 0 : index
    %11 = vector.load %arg1[%c4, %c0_8, %c0_9] : memref<9x32x128xf32, #tpu.memory_space<vmem>>, vector<1x32x128xf32>
    %12 = vector.shape_cast %11 : vector<1x32x128xf32> to vector<32x128xf32>
    %13 = arith.maximumf %10, %12 : vector<32x128xf32>
    %c5 = arith.constant 5 : index
    %c0_10 = arith.constant 0 : index
    %c0_11 = arith.constant 0 : index
    %14 = vector.load %arg1[%c5, %c0_10, %c0_11] : memref<9x32x128xf32, #tpu.memory_space<vmem>>, vector<1x32x128xf32>
    %15 = vector.shape_cast %14 : vector<1x32x128xf32> to vector<32x128xf32>
    %16 = arith.maximumf %13, %15 : vector<32x128xf32>
    %c6 = arith.constant 6 : index
    %c0_12 = arith.constant 0 : index
    %c0_13 = arith.constant 0 : index
    %17 = vector.load %arg1[%c6, %c0_12, %c0_13] : memref<9x32x128xf32, #tpu.memory_space<vmem>>, vector<1x32x128xf32>
    %18 = vector.shape_cast %17 : vector<1x32x128xf32> to vector<32x128xf32>
    %19 = arith.maximumf %16, %18 : vector<32x128xf32>
    %c7 = arith.constant 7 : index
    %c0_14 = arith.constant 0 : index
    %c0_15 = arith.constant 0 : index
    %20 = vector.load %arg1[%c7, %c0_14, %c0_15] : memref<9x32x128xf32, #tpu.memory_space<vmem>>, vector<1x32x128xf32>
    %21 = vector.shape_cast %20 : vector<1x32x128xf32> to vector<32x128xf32>
    %22 = arith.maximumf %19, %21 : vector<32x128xf32>
    %c8 = arith.constant 8 : index
    %c0_16 = arith.constant 0 : index
    %c0_17 = arith.constant 0 : index
    %23 = vector.load %arg1[%c8, %c0_16, %c0_17] : memref<9x32x128xf32, #tpu.memory_space<vmem>>, vector<1x32x128xf32>
    %24 = vector.shape_cast %23 : vector<1x32x128xf32> to vector<32x128xf32>
    %25 = arith.maximumf %22, %24 : vector<32x128xf32>
    %c0_18 = arith.constant 0 : index
    %c0_19 = arith.constant 0 : index
    %26 = vector.load %arg2[%c0_18, %c0_19] : memref<32x128xf32, #tpu.memory_space<vmem>>, vector<32x128xf32>
    tpu.vector_store %arg2[%c0_18, %c0_19], %25 {strides = array<i32>} : memref<32x128xf32, #tpu.memory_space<vmem>>, vector<32x128xf32>,
    return
  }
  func.func @transform_0(%arg0: i32) -> (i32, i32, i32) {
    %c0_i32 = arith.constant 0 : i32
    %c0_i32_0 = arith.constant 0 : i32
    %c0_i32_1 = arith.constant 0 : i32
    return %c0_i32, %arg0, %c0_i32_0 : i32, i32, i32
  }
  func.func @transform_1(%arg0: i32) -> (i32, i32) {
    %c0_i32 = arith.constant 0 : i32
    %c0_i32_0 = arith.constant 0 : i32
    return %arg0, %c0_i32 : i32, i32
  }
}

module attributes {stable_mosaic.version = 11 : i64} {
  func.func @_fc_head_kernel(%arg0: i32, %arg1: memref<8x1024xbf16, #tpu.memory_space<vmem>>, %arg2: memref<1024x384xbf16, #tpu.memory_space<vmem>>, %arg3: memref<1x384xf32, #tpu.memory_space<vmem>>, %arg4: memref<384x192xbf16, #tpu.memory_space<vmem>>, %arg5: memref<1x192xf32, #tpu.memory_space<vmem>>, %arg6: memref<192x10xbf16, #tpu.memory_space<vmem>>, %arg7: memref<1x10xf32, #tpu.memory_space<vmem>>, %arg8: memref<8x10xf32, #tpu.memory_space<vmem>>) attributes {dimension_semantics = [#tpu.dimension_semantics<parallel>], iteration_bounds = array<i64: 1>, scalar_prefetch = 0 : i64, scratch_operands = 0 : i64, tpu.core_type = #tpu.core_type<tc>, window_params = [{transform_indices = @transform_0, window_bounds = array<i64: 8, 1024>}, {pipeline_mode = #tpu.pipeline_mode<synchronous>, transform_indices = @transform_1, window_bounds = array<i64: 1024, 384>}, {pipeline_mode = #tpu.pipeline_mode<synchronous>, transform_indices = @transform_2, window_bounds = array<i64: 1, 384>}, {pipeline_mode = #tpu.pipeline_mode<synchronous>, transform_indices = @transform_3, window_bounds = array<i64: 384, 192>}, {pipeline_mode = #tpu.pipeline_mode<synchronous>, transform_indices = @transform_4, window_bounds = array<i64: 1, 192>}, {pipeline_mode = #tpu.pipeline_mode<synchronous>, transform_indices = @transform_5, window_bounds = array<i64: 192, 10>}, {pipeline_mode = #tpu.pipeline_mode<synchronous>, transform_indices = @transform_6, window_bounds = array<i64: 1, 10>}, {transform_indices = @transform_7, window_bounds = array<i64: 8, 10>}]} {
    %c0 = arith.constant 0 : index
    %c0_0 = arith.constant 0 : index
    %0 = vector.load %arg1[%c0, %c0_0] : memref<8x1024xbf16, #tpu.memory_space<vmem>>, vector<8x1024xbf16>
    %c0_1 = arith.constant 0 : index
    %c0_2 = arith.constant 0 : index
    %1 = vector.load %arg2[%c0_1, %c0_2] : memref<1024x384xbf16, #tpu.memory_space<vmem>>, vector<1024x384xbf16>
    %cst = arith.constant dense<0.000000e+00> : vector<8x384xf32>
    %2 = tpu.matmul %0, %1, %cst {dimension_numbers = #tpu.dot_dimension_numbers<[1], [0], [0], [1], [0, 0, 1, 1], [], []>} : vector<8x1024xbf16>, vector<1024x384xbf16>, vector<8x384xf32> -> vector<8x384xf32>
    %c0_3 = arith.constant 0 : index
    %c0_4 = arith.constant 0 : index
    %3 = vector.load %arg3[%c0_3, %c0_4] : memref<1x384xf32, #tpu.memory_space<vmem>>, vector<1x384xf32>
    %4 = vector.broadcast %3 : vector<1x384xf32> to vector<8x384xf32>
    %5 = arith.addf %2, %4 : vector<8x384xf32>
    %cst_5 = arith.constant 0.000000e+00 : f32
    %6 = vector.broadcast %cst_5 : f32 to vector<8x384xf32>
    %7 = arith.maximumf %5, %6 : vector<8x384xf32>
    %8 = arith.truncf %7 : vector<8x384xf32> to vector<8x384xbf16>
    %c0_6 = arith.constant 0 : index
    %c0_7 = arith.constant 0 : index
    %9 = vector.load %arg4[%c0_6, %c0_7] : memref<384x192xbf16, #tpu.memory_space<vmem>>, vector<384x192xbf16>
    %cst_8 = arith.constant dense<0.000000e+00> : vector<8x192xf32>
    %10 = tpu.matmul %8, %9, %cst_8 {dimension_numbers = #tpu.dot_dimension_numbers<[1], [0], [0], [1], [0, 0, 1, 1], [], []>} : vector<8x384xbf16>, vector<384x192xbf16>, vector<8x192xf32> -> vector<8x192xf32>
    %c0_9 = arith.constant 0 : index
    %c0_10 = arith.constant 0 : index
    %11 = vector.load %arg5[%c0_9, %c0_10] : memref<1x192xf32, #tpu.memory_space<vmem>>, vector<1x192xf32>
    %12 = vector.broadcast %11 : vector<1x192xf32> to vector<8x192xf32>
    %13 = arith.addf %10, %12 : vector<8x192xf32>
    %cst_11 = arith.constant 0.000000e+00 : f32
    %14 = vector.broadcast %cst_11 : f32 to vector<8x192xf32>
    %15 = arith.maximumf %13, %14 : vector<8x192xf32>
    %16 = arith.truncf %15 : vector<8x192xf32> to vector<8x192xbf16>
    %c0_12 = arith.constant 0 : index
    %c0_13 = arith.constant 0 : index
    %17 = vector.load %arg6[%c0_12, %c0_13] : memref<192x10xbf16, #tpu.memory_space<vmem>>, vector<192x10xbf16>
    %cst_14 = arith.constant dense<0.000000e+00> : vector<8x10xf32>
    %18 = tpu.matmul %16, %17, %cst_14 {dimension_numbers = #tpu.dot_dimension_numbers<[1], [0], [0], [1], [0, 0, 1, 1], [], []>} : vector<8x192xbf16>, vector<192x10xbf16>, vector<8x10xf32> -> vector<8x10xf32>
    %c0_15 = arith.constant 0 : index
    %c0_16 = arith.constant 0 : index
    %19 = vector.load %arg7[%c0_15, %c0_16] : memref<1x10xf32, #tpu.memory_space<vmem>>, vector<1x10xf32>
    %20 = vector.broadcast %19 : vector<1x10xf32> to vector<8x10xf32>
    %21 = arith.addf %18, %20 : vector<8x10xf32>
    %cst_17 = arith.constant dense<0xFF800000> : vector<8xf32>
    %22 = vector.multi_reduction <maximumf>, %21, %cst_17 [1] : vector<8x10xf32> to vector<8xf32>
    %23 = vector.shape_cast %22 : vector<8xf32> to vector<8x1xf32>
    %24 = vector.broadcast %23 : vector<8x1xf32> to vector<8x10xf32>
    %25 = arith.subf %21, %24 : vector<8x10xf32>
    %26 = math.exp %25 : vector<8x10xf32>
    %cst_18 = arith.constant dense<0.000000e+00> : vector<8xf32>
    %27 = vector.multi_reduction <add>, %26, %cst_18 [1] : vector<8x10xf32> to vector<8xf32>
    %28 = vector.shape_cast %27 : vector<8xf32> to vector<8x1xf32>
    %29 = vector.broadcast %23 : vector<8x1xf32> to vector<8x10xf32>
    %30 = arith.subf %21, %29 : vector<8x10xf32>
    %31 = math.log %28 : vector<8x1xf32>
    %32 = vector.broadcast %31 : vector<8x1xf32> to vector<8x10xf32>
    %33 = arith.subf %30, %32 : vector<8x10xf32>
    %c0_19 = arith.constant 0 : index
    %c0_20 = arith.constant 0 : index
    %34 = vector.load %arg8[%c0_19, %c0_20] : memref<8x10xf32, #tpu.memory_space<vmem>>, vector<8x10xf32>
    tpu.vector_store %arg8[%c0_19, %c0_20], %33 {strides = array<i32>} : memref<8x10xf32, #tpu.memory_space<vmem>>, vector<8x10xf32>,
    return
  }
  func.func @transform_0(%arg0: i32) -> (i32, i32) {
    %c0_i32 = arith.constant 0 : i32
    %c0_i32_0 = arith.constant 0 : i32
    return %arg0, %c0_i32 : i32, i32
  }
  func.func @transform_1(%arg0: i32) -> (i32, i32) {
    %c0_i32 = arith.constant 0 : i32
    %c0_i32_0 = arith.constant 0 : i32
    %c0_i32_1 = arith.constant 0 : i32
    return %c0_i32, %c0_i32_0 : i32, i32
  }
  func.func @transform_2(%arg0: i32) -> (i32, i32) {
    %c0_i32 = arith.constant 0 : i32
    %c0_i32_0 = arith.constant 0 : i32
    %c0_i32_1 = arith.constant 0 : i32
    return %c0_i32, %c0_i32_0 : i32, i32
  }
  func.func @transform_3(%arg0: i32) -> (i32, i32) {
    %c0_i32 = arith.constant 0 : i32
    %c0_i32_0 = arith.constant 0 : i32
    %c0_i32_1 = arith.constant 0 : i32
    return %c0_i32, %c0_i32_0 : i32, i32
  }
  func.func @transform_4(%arg0: i32) -> (i32, i32) {
    %c0_i32 = arith.constant 0 : i32
    %c0_i32_0 = arith.constant 0 : i32
    %c0_i32_1 = arith.constant 0 : i32
    return %c0_i32, %c0_i32_0 : i32, i32
  }
  func.func @transform_5(%arg0: i32) -> (i32, i32) {
    %c0_i32 = arith.constant 0 : i32
    %c0_i32_0 = arith.constant 0 : i32
    %c0_i32_1 = arith.constant 0 : i32
    return %c0_i32, %c0_i32_0 : i32, i32
  }
  func.func @transform_6(%arg0: i32) -> (i32, i32) {
    %c0_i32 = arith.constant 0 : i32
    %c0_i32_0 = arith.constant 0 : i32
    %c0_i32_1 = arith.constant 0 : i32
    return %c0_i32, %c0_i32_0 : i32, i32
  }
  func.func @transform_7(%arg0: i32) -> (i32, i32) {
    %c0_i32 = arith.constant 0 : i32
    %c0_i32_0 = arith.constant 0 : i32
    return %arg0, %c0_i32 : i32, i32
  }
}

</mosaic_0001>

<llo_original>
// kernel: cnn_cifar_forward.5
$region0: #{cnn_cifar_forward.5}
  #allocation0 [shape = 'u32[]', space=smem, size = 0x4, offset = 0x4, fixed_abs, tag = 'smem constant byte address 0x4 - core index']
  #allocation1 [shape = 'u32[144,128]{1,0:T(1,128)}', space=vmem, size = 0x12000, scoped, tag = 'internal scratch']
  %s0 = inlined_call_operand.vmem [shape: bf16[2048,128], index: 0, kind: input, shape index: {}]
  %s1 = inlined_call_operand.vmem [shape: bf16[128,128], index: 1, kind: input, shape index: {}]
  %s2 = inlined_call_operand.vmem [shape: f32[1,128], index: 2, kind: input, shape index: {}]
  %s3 = inlined_call_operand.vmem [shape: f32[2048,128], index: 3, kind: output, shape index: {}]
  %s4 = sld [smem:[#allocation0]]
  $region45: #{cnn_cifar_forward.5} parent=0
    _
  %s6 = ssub.s32 1, %s4
  %s7 = scalar_select 0, %s6, %s4
  loop: start=0, step=1, limit=6
  $region2: #{cnn_cifar_forward.5} parent=0 // loop_pre_header
    _
  $region3: #{cnn_cifar_forward.5} parent=0 // loop_header
    %s9 = sphi 0, %s13
    %p10 = scmp.ge.s32.totalorder %s9, 6
    %s19 = sphi 0, %s21
    %s22 = sphi 0, %s19
    %s23 = sphi 0, %s22
    %s39 = sphi 0, %s23
    %s43 = sphi 0, %s43
    %s45 = sphi 0, %s43
    %s46 = sphi 0, %s45
    %s60 = sphi 0, %s46
    %s64 = sphi 0, %s64
    %s66 = sphi 0, %s64
    %s67 = sphi 0, %s66
    %s81 = sphi 0, %s67
    %s87 = sphi 0, %s89
    %s90 = sphi 0, %s87
    %s91 = sphi 0, %s90
    %s107 = sphi 0, %s91
  $region4: #{cnn_cifar_forward.5} parent=0 // loop_header_branch
    %12 = sbr.rel (%p10) target = $region8
  $region5: #{cnn_cifar_forward.5} parent=0 // loop_body
    %s14 = ssub.s32 %s9, 1
    %s15 = ssub.s32 %s9, 2
    %s16 = sadd.s32 %s9, 1
    %s17 = ssub.s32 %s9, %s16
    %p18 = scmp.eq.s32.totalorder %s17, 0
    %s20 = sadd.s32 %s19, 1
    %s21 = scalar_select %p18, %s19, %s20
    %p24 = pneg %p18
    %p25 = scmp.eq.s32.totalorder %s9, 3
    %p26 = por %p24, %p25
    %p27 = scmp.ne.s32.totalorder %s19, %s22
    %p28 = scmp.eq.s32.totalorder %s9, 0
    %p29 = por %p27, %p28
    %p30 = scmp.ne.s32.totalorder %s19, %s22
    %p31 = scmp.eq.s32.totalorder %s14, 3
    %p32 = por %p30, %p31
    %p33 = scmp.ne.s32.totalorder %s22, %s23
    %p34 = scmp.eq.s32.totalorder %s14, 0
    %p35 = por %p33, %p34
    %p36 = scmp.ne.s32.totalorder %s22, %s23
    %p37 = scmp.eq.s32.totalorder %s15, 3
    %p38 = por %p36, %p37
    %p40 = scmp.ne.s32.totalorder %s23, %s39
    %p41 = scmp.eq.s32.totalorder %s15, 0
    %p42 = por %p40, %p41
    %s44 = sadd.s32 %s43, 1
    %p47 = scmp.eq.s32.totalorder %s9, 3
    %p48 = scmp.ne.s32.totalorder %s43, %s45
    %p49 = scmp.eq.s32.totalorder %s9, 0
    %p50 = por %p48, %p49
    %p51 = scmp.ne.s32.totalorder %s43, %s45
    %p52 = scmp.eq.s32.totalorder %s14, 3
    %p53 = por %p51, %p52
    %p54 = scmp.ne.s32.totalorder %s45, %s46
    %p55 = scmp.eq.s32.totalorder %s14, 0
    %p56 = por %p54, %p55
    %p57 = scmp.ne.s32.totalorder %s45, %s46
    %p58 = scmp.eq.s32.totalorder %s15, 3
    %p59 = por %p57, %p58
    %p61 = scmp.ne.s32.totalorder %s46, %s60
    %p62 = scmp.eq.s32.totalorder %s15, 0
    %p63 = por %p61, %p62
    %s65 = sadd.s32 %s64, 1
    %p68 = scmp.eq.s32.totalorder %s9, 3
    %p69 = scmp.ne.s32.totalorder %s64, %s66
    %p70 = scmp.eq.s32.totalorder %s9, 0
    %p71 = por %p69, %p70
    %p72 = scmp.ne.s32.totalorder %s64, %s66
    %p73 = scmp.eq.s32.totalorder %s14, 3
    %p74 = por %p72, %p73
    %p75 = scmp.ne.s32.totalorder %s66, %s67
    %p76 = scmp.eq.s32.totalorder %s14, 0
    %p77 = por %p75, %p76
    %p78 = scmp.ne.s32.totalorder %s66, %s67
    %p79 = scmp.eq.s32.totalorder %s15, 3
    %p80 = por %p78, %p79
    %p82 = scmp.ne.s32.totalorder %s67, %s81
    %p83 = scmp.eq.s32.totalorder %s15, 0
    %p84 = por %p82, %p83
    %s85 = ssub.s32 %s9, %s16
    %p86 = scmp.eq.s32.totalorder %s85, 0
    %s88 = sadd.s32 %s87, 1
    %s89 = scalar_select %p86, %s87, %s88
    %p92 = pneg %p86
    %p93 = scmp.eq.s32.totalorder %s9, 3
    %p94 = por %p92, %p93
    %p95 = scmp.ne.s32.totalorder %s87, %s90
    %p96 = scmp.eq.s32.totalorder %s9, 0
    %p97 = por %p95, %p96
    %p98 = scmp.ne.s32.totalorder %s87, %s90
    %p99 = scmp.eq.s32.totalorder %s14, 3
    %p100 = por %p98, %p99
    %p101 = scmp.ne.s32.totalorder %s90, %s91
    %p102 = scmp.eq.s32.totalorder %s14, 0
    %p103 = por %p101, %p102
    %p104 = scmp.ne.s32.totalorder %s90, %s91
    %p105 = scmp.eq.s32.totalorder %s15, 3
    %p106 = por %p104, %p105
    %p108 = scmp.ne.s32.totalorder %s91, %s107
    %p109 = scmp.eq.s32.totalorder %s15, 0
    %p110 = por %p108, %p109
    %p111 = scmp.le.s32.totalorder 1, %s9
    %p112 = scmp.lt.s32.totalorder %s9, 5
    %p113 = pnand %p111, %p112
    %p114 = pneg %p113
    // Predicated region
    $region9: #{cnn_cifar_forward.5} parent=5 // pred_check
      _
    $region10: #{cnn_cifar_forward.5} parent=5 // pred_check_branch
      %116 = sbr.rel (%p113) target = $region12
    $region11: #{cnn_cifar_forward.5} parent=5 // pred_region
      %s117 = ssub.s32 %s9, 1
      // Predicated region
      $region13: #{cnn_cifar_forward.5} parent=11 // pred_check
        %p118 = pneg %p56
      $region14: #{cnn_cifar_forward.5} parent=11 // pred_check_branch
        %120 = sbr.rel (%p118) target = $region16
      $region15: #{cnn_cifar_forward.5} parent=11 // pred_region
        _
      $region16: #{cnn_cifar_forward.5} parent=11 // pred_fallthru
        _
      // Predicated region
      $region17: #{cnn_cifar_forward.5} parent=11 // pred_check
        %p121 = pneg %p77
      $region18: #{cnn_cifar_forward.5} parent=11 // pred_check_branch
        %123 = sbr.rel (%p121) target = $region20
      $region19: #{cnn_cifar_forward.5} parent=11 // pred_region
        _
      $region20: #{cnn_cifar_forward.5} parent=11 // pred_fallthru
        _
    $region12: #{cnn_cifar_forward.5} parent=5 // pred_fallthru
      _
    %p124 = scmp.lt.s32.totalorder %s9, 4
    // Predicated region
    $region21: #{cnn_cifar_forward.5} parent=5 // pred_check
      %p125 = pneg %p124
    $region22: #{cnn_cifar_forward.5} parent=5 // pred_check_branch
      %127 = sbr.rel (%p125) target = $region24
    $region23: #{cnn_cifar_forward.5} parent=5 // pred_region
      // Predicated region
      $region25: #{cnn_cifar_forward.5} parent=23 // pred_check
        %p128 = pneg %p29
      $region26: #{cnn_cifar_forward.5} parent=23 // pred_check_branch
        %130 = sbr.rel (%p128) target = $region28
      $region27: #{cnn_cifar_forward.5} parent=23 // pred_region
        %s131 = smul.u32 64, %s9
        %p132 = scmp.lt.s32.totalorder %s131, 255
        %s133 = scalar_select %p132, %s131, 255
        %s134 = smul.addr %s133, 4
        %s135 = scalar_lea.vmem %s0, %s134
        %s136 = smul.u32 64, %s9
      $region28: #{cnn_cifar_forward.5} parent=23 // pred_fallthru
        _
    $region24: #{cnn_cifar_forward.5} parent=5 // pred_fallthru
      _
    %p137 = scmp.le.s32.totalorder 1, %s9
    %p138 = scmp.lt.s32.totalorder %s9, 5
    %p139 = pnand %p137, %p138
    %p140 = pneg %p139
    // Predicated region
    $region29: #{cnn_cifar_forward.5} parent=5 // pred_check
      _
    $region30: #{cnn_cifar_forward.5} parent=5 // pred_check_branch
      %142 = sbr.rel (%p139) target = $region32
    $region31: #{cnn_cifar_forward.5} parent=5 // pred_region
      %s143 = ssub.s32 %s9, 1
      %s144 = smul.u32 64, %s14
      %p145 = scmp.lt.s32.totalorder %s144, 255
      %s146 = scalar_select %p145, %s144, 255
      %s147 = smul.addr %s146, 4
      %s148 = scalar_lea.vmem %s0, %s147
      %p149 = pneg %p35
      %p150 = pneg %p32
      %p151 = pneg %p56
      %p152 = pneg %p53
      %p153 = pneg %p77
      %p154 = pneg %p74
      %p155 = pneg %p103
      %p156 = pneg %p100
      %s157 = smul.u32 64, %s14
      %p158 = scmp.lt.s32.totalorder %s157, 255
      %s159 = scalar_select %p158, %s157, 255
      %s160 = smul.addr %s159, 8
      %s161 = scalar_lea.vmem %s3, %s160
      %s162 = smul.u32 64, %s14
      %p163 = scmp.lt.s32.totalorder %s162, 255
      %s164 = scalar_select %p163, %s162, 255
      %s165 = smul.addr %s164, 4
      %s166 = scalar_lea.vmem %s0, %s165
      %s167 = smul.u32 64, %s14
      %s168 = smul.u32 64, %s14
      %p169 = scmp.lt.s32.totalorder %s168, 255
      %s170 = scalar_select %p169, %s168, 255
      %s171 = smul.addr %s170, 8
      %s172 = scalar_lea.vmem %s3, %s171
      %s173 = smul.u32 64, %s14
      %v175 = vld [vmem:[%s166] sm:$0xf]
      %v176 = vld [vmem:[%s166 + $0x4] sm:$0xf]
      %v177 = vld [vmem:[%s166 + $0x8] sm:$0xf]
      %v178 = vld [vmem:[%s166 + $0xc] sm:$0xf]
      %v179 = vld [vmem:[%s166 + $0x10] sm:$0xf]
      %v180 = vld [vmem:[%s166 + $0x14] sm:$0xf]
      %v181 = vld [vmem:[%s166 + $0x18] sm:$0xf]
      %v182 = vld [vmem:[%s166 + $0x1c] sm:$0xf]
      %v183 = vld [vmem:[%s166 + $0x20] sm:$0xf]
      %v184 = vld [vmem:[%s166 + $0x24] sm:$0xf]
      %v185 = vld [vmem:[%s166 + $0x28] sm:$0xf]
      %v186 = vld [vmem:[%s166 + $0x2c] sm:$0xf]
      %v187 = vld [vmem:[%s166 + $0x30] sm:$0xf]
      %v188 = vld [vmem:[%s166 + $0x34] sm:$0xf]
      %v189 = vld [vmem:[%s166 + $0x38] sm:$0xf]
      %v190 = vld [vmem:[%s166 + $0x3c] sm:$0xf]
      %v191 = vld [vmem:[%s166 + $0x40] sm:$0xf]
      %v192 = vld [vmem:[%s166 + $0x44] sm:$0xf]
      %v193 = vld [vmem:[%s166 + $0x48] sm:$0xf]
      %v194 = vld [vmem:[%s166 + $0x4c] sm:$0xf]
      %v195 = vld [vmem:[%s166 + $0x50] sm:$0xf]
      %v196 = vld [vmem:[%s166 + $0x54] sm:$0xf]
      %v197 = vld [vmem:[%s166 + $0x58] sm:$0xf]
      %v198 = vld [vmem:[%s166 + $0x5c] sm:$0xf]
      %v199 = vld [vmem:[%s166 + $0x60] sm:$0xf]
      %v200 = vld [vmem:[%s166 + $0x64] sm:$0xf]
      %v201 = vld [vmem:[%s166 + $0x68] sm:$0xf]
      %v202 = vld [vmem:[%s166 + $0x6c] sm:$0xf]
      %v203 = vld [vmem:[%s166 + $0x70] sm:$0xf]
      %v204 = vld [vmem:[%s166 + $0x74] sm:$0xf]
      %v205 = vld [vmem:[%s166 + $0x78] sm:$0xf]
      %v206 = vld [vmem:[%s166 + $0x7c] sm:$0xf]
      %v207 = vld [vmem:[%s166 + $0x80] sm:$0xf]
      %v208 = vld [vmem:[%s166 + $0x84] sm:$0xf]
      %v209 = vld [vmem:[%s166 + $0x88] sm:$0xf]
      %v210 = vld [vmem:[%s166 + $0x8c] sm:$0xf]
      %v211 = vld [vmem:[%s166 + $0x90] sm:$0xf]
      %v212 = vld [vmem:[%s166 + $0x94] sm:$0xf]
      %v213 = vld [vmem:[%s166 + $0x98] sm:$0xf]
      %v214 = vld [vmem:[%s166 + $0x9c] sm:$0xf]
      %v215 = vld [vmem:[%s166 + $0xa0] sm:$0xf]
      %v216 = vld [vmem:[%s166 + $0xa4] sm:$0xf]
      %v217 = vld [vmem:[%s166 + $0xa8] sm:$0xf]
      %v218 = vld [vmem:[%s166 + $0xac] sm:$0xf]
      %v219 = vld [vmem:[%s166 + $0xb0] sm:$0xf]
      %v220 = vld [vmem:[%s166 + $0xb4] sm:$0xf]
      %v221 = vld [vmem:[%s166 + $0xb8] sm:$0xf]
      %v222 = vld [vmem:[%s166 + $0xbc] sm:$0xf]
      %v223 = vld [vmem:[%s166 + $0xc0] sm:$0xf]
      %v224 = vld [vmem:[%s166 + $0xc4] sm:$0xf]
      %v225 = vld [vmem:[%s166 + $0xc8] sm:$0xf]
      %v226 = vld [vmem:[%s166 + $0xcc] sm:$0xf]
      %v227 = vld [vmem:[%s166 + $0xd0] sm:$0xf]
      %v228 = vld [vmem:[%s166 + $0xd4] sm:$0xf]
      %v229 = vld [vmem:[%s166 + $0xd8] sm:$0xf]
      %v230 = vld [vmem:[%s166 + $0xdc] sm:$0xf]
      %v231 = vld [vmem:[%s166 + $0xe0] sm:$0xf]
      %v232 = vld [vmem:[%s166 + $0xe4] sm:$0xf]
      %v233 = vld [vmem:[%s166 + $0xe8] sm:$0xf]
      %v234 = vld [vmem:[%s166 + $0xec] sm:$0xf]
      %v235 = vld [vmem:[%s166 + $0xf0] sm:$0xf]
      %v236 = vld [vmem:[%s166 + $0xf4] sm:$0xf]
      %v237 = vld [vmem:[%s166 + $0xf8] sm:$0xf]
      %v238 = vld [vmem:[%s166 + $0xfc] sm:$0xf]
      %v239 = vld [vmem:[%s1] sm:$0xf]
      %v240 = vld [vmem:[%s1 + $0x4] sm:$0xf]
      %v241 = vld [vmem:[%s1 + $0x8] sm:$0xf]
      %v242 = vld [vmem:[%s1 + $0xc] sm:$0xf]
      %v243 = vld [vmem:[%s1 + $0x10] sm:$0xf]
      %v244 = vld [vmem:[%s1 + $0x14] sm:$0xf]
      %v245 = vld [vmem:[%s1 + $0x18] sm:$0xf]
      %v246 = vld [vmem:[%s1 + $0x1c] sm:$0xf]
      %v247 = vld [vmem:[%s1 + $0x20] sm:$0xf]
      %v248 = vld [vmem:[%s1 + $0x24] sm:$0xf]
      %v249 = vld [vmem:[%s1 + $0x28] sm:$0xf]
      %v250 = vld [vmem:[%s1 + $0x2c] sm:$0xf]
      %v251 = vld [vmem:[%s1 + $0x30] sm:$0xf]
      %v252 = vld [vmem:[%s1 + $0x34] sm:$0xf]
      %v253 = vld [vmem:[%s1 + $0x38] sm:$0xf]
      %v254 = vld [vmem:[%s1 + $0x3c] sm:$0xf]
      %v255 = vld [vmem:[%s2] sm:$0x1]
      %v257 = vlaneseq
      %v258 = vshrl.u32 %v257, 7
      %v259 = vsub.s32 0, %v258
      %v260 = vrot.slane %v255, %v259
      %v326 = vunpack.c.l.b16 %v175
      %v327 = vunpack.c.l.b16 %v176
      %v328 = vunpack.c.l.b16 %v177
      %v329 = vunpack.c.l.b16 %v178
      %v330 = vunpack.c.l.b16 %v179
      %v331 = vunpack.c.l.b16 %v180
      %v332 = vunpack.c.l.b16 %v181
      %v333 = vunpack.c.l.b16 %v182
      %v334 = vunpack.c.l.b16 %v183
      %v335 = vunpack.c.l.b16 %v184
      %v336 = vunpack.c.l.b16 %v185
      %v337 = vunpack.c.l.b16 %v186
      %v338 = vunpack.c.l.b16 %v187
      %v339 = vunpack.c.l.b16 %v188
      %v340 = vunpack.c.l.b16 %v189
      %v341 = vunpack.c.l.b16 %v190
      %v342 = vunpack.c.l.b16 %v191
      %v343 = vunpack.c.l.b16 %v192
      %v344 = vunpack.c.l.b16 %v193
      %v345 = vunpack.c.l.b16 %v194
      %v346 = vunpack.c.l.b16 %v195
      %v347 = vunpack.c.l.b16 %v196
      %v348 = vunpack.c.l.b16 %v197
      %v349 = vunpack.c.l.b16 %v198
      %v350 = vunpack.c.l.b16 %v199
      %v351 = vunpack.c.l.b16 %v200
      %v352 = vunpack.c.l.b16 %v201
      %v353 = vunpack.c.l.b16 %v202
      %v354 = vunpack.c.l.b16 %v203
      %v355 = vunpack.c.l.b16 %v204
      %v356 = vunpack.c.l.b16 %v205
      %v357 = vunpack.c.l.b16 %v206
      %v358 = vunpack.c.l.b16 %v207
      %v359 = vunpack.c.l.b16 %v208
      %v360 = vunpack.c.l.b16 %v209
      %v361 = vunpack.c.l.b16 %v210
      %v362 = vunpack.c.l.b16 %v211
      %v363 = vunpack.c.l.b16 %v212
      %v364 = vunpack.c.l.b16 %v213
      %v365 = vunpack.c.l.b16 %v214
      %v366 = vunpack.c.l.b16 %v215
      %v367 = vunpack.c.l.b16 %v216
      %v368 = vunpack.c.l.b16 %v217
      %v369 = vunpack.c.l.b16 %v218
      %v370 = vunpack.c.l.b16 %v219
      %v371 = vunpack.c.l.b16 %v220
      %v372 = vunpack.c.l.b16 %v221
      %v373 = vunpack.c.l.b16 %v222
      %v374 = vunpack.c.l.b16 %v223
      %v375 = vunpack.c.l.b16 %v224
      %v376 = vunpack.c.l.b16 %v225
      %v377 = vunpack.c.l.b16 %v226
      %v378 = vunpack.c.l.b16 %v227
      %v379 = vunpack.c.l.b16 %v228
      %v380 = vunpack.c.l.b16 %v229
      %v381 = vunpack.c.l.b16 %v230
      %v382 = vunpack.c.l.b16 %v231
      %v383 = vunpack.c.l.b16 %v232
      %v384 = vunpack.c.l.b16 %v233
      %v385 = vunpack.c.l.b16 %v234
      %v386 = vunpack.c.l.b16 %v235
      %v387 = vunpack.c.l.b16 %v236
      %v388 = vunpack.c.l.b16 %v237
      %v389 = vunpack.c.l.b16 %v238
      %v390 = vpack.c.b16 %v327, %v326
      %v391 = vpack.c.b16 %v329, %v328
      %v392 = vpack.c.b16 %v331, %v330
      %v393 = vpack.c.b16 %v333, %v332
      %v394 = vpack.c.b16 %v335, %v334
      %v395 = vpack.c.b16 %v337, %v336
      %v396 = vpack.c.b16 %v339, %v338
      %v397 = vpack.c.b16 %v341, %v340
      %v398 = vpack.c.b16 %v343, %v342
      %v399 = vpack.c.b16 %v345, %v344
      %v400 = vpack.c.b16 %v347, %v346
      %v401 = vpack.c.b16 %v349, %v348
      %v402 = vpack.c.b16 %v351, %v350
      %v403 = vpack.c.b16 %v353, %v352
      %v404 = vpack.c.b16 %v355, %v354
      %v405 = vpack.c.b16 %v357, %v356
      %v406 = vpack.c.b16 %v359, %v358
      %v407 = vpack.c.b16 %v361, %v360
      %v408 = vpack.c.b16 %v363, %v362
      %v409 = vpack.c.b16 %v365, %v364
      %v410 = vpack.c.b16 %v367, %v366
      %v411 = vpack.c.b16 %v369, %v368
      %v412 = vpack.c.b16 %v371, %v370
      %v413 = vpack.c.b16 %v373, %v372
      %v414 = vpack.c.b16 %v375, %v374
      %v415 = vpack.c.b16 %v377, %v376
      %v416 = vpack.c.b16 %v379, %v378
      %v417 = vpack.c.b16 %v381, %v380
      %v418 = vpack.c.b16 %v383, %v382
      %v419 = vpack.c.b16 %v385, %v384
      %v420 = vpack.c.b16 %v387, %v386
      %v421 = vpack.c.b16 %v389, %v388
      %v470 = vunpack.c.l.b16 %v239
      %v471 = vunpack.c.l.b16 %v240
      %v472 = vunpack.c.l.b16 %v241
      %v473 = vunpack.c.l.b16 %v242
      %v474 = vunpack.c.l.b16 %v243
      %v475 = vunpack.c.l.b16 %v244
      %v476 = vunpack.c.l.b16 %v245
      %v477 = vunpack.c.l.b16 %v246
      %v478 = vunpack.c.l.b16 %v247
      %v479 = vunpack.c.l.b16 %v248
      %v480 = vunpack.c.l.b16 %v249
      %v481 = vunpack.c.l.b16 %v250
      %v482 = vunpack.c.l.b16 %v251
      %v483 = vunpack.c.l.b16 %v252
      %v484 = vunpack.c.l.b16 %v253
      %v485 = vunpack.c.l.b16 %v254
      %v486 = vpack.c.b16 %v471, %v470
      %v487 = vpack.c.b16 %v473, %v472
      %v488 = vpack.c.b16 %v475, %v474
      %v489 = vpack.c.b16 %v477, %v476
      %v490 = vpack.c.b16 %v479, %v478
      %v491 = vpack.c.b16 %v481, %v480
      %v492 = vpack.c.b16 %v483, %v482
      %v493 = vpack.c.b16 %v485, %v484
      %502 = vmatprep.subr.bf16.mxu0 0
      %503 = vmatpush1.bf16.msra.mxu0 %v486
      %504 = vmatprep.subr.bf16.mxu0 0
      %505 = vmatpush1.bf16.msra.mxu0 %v487
      %506 = vmatprep.subr.bf16.mxu0 0
      %507 = vmatpush1.bf16.msra.mxu0 %v488
      %508 = vmatprep.subr.bf16.mxu0 0
      %509 = vmatpush1.bf16.msra.mxu0 %v489
      %510 = vmatprep.subr.bf16.mxu0 0
      %511 = vmatpush1.bf16.msra.mxu0 %v490
      %512 = vmatprep.subr.bf16.mxu0 0
      %513 = vmatpush1.bf16.msra.mxu0 %v491
      %514 = vmatprep.subr.bf16.mxu0 0
      %515 = vmatpush1.bf16.msra.mxu0 %v492
      %516 = vmatprep.subr.bf16.mxu0 0
      %517 = vmatpush1.bf16.msra.mxu0 %v493
      %518 = vmatprep.subr.bf16.mxu0 0
      %519 = vmatpush1.bf16.msra.mxu0 0
      %520 = vmatprep.subr.bf16.mxu0 0
      %521 = vmatpush1.bf16.msra.mxu0 0
      %522 = vmatprep.subr.bf16.mxu0 0
      %523 = vmatpush1.bf16.msra.mxu0 0
      %524 = vmatprep.subr.bf16.mxu0 0
      %525 = vmatpush1.bf16.msra.mxu0 0
      %526 = vmatprep.subr.bf16.mxu0 0
      %527 = vmatpush1.bf16.msra.mxu0 0
      %528 = vmatprep.subr.bf16.mxu0 0
      %529 = vmatpush1.bf16.msra.mxu0 0
      %530 = vmatprep.subr.bf16.mxu0 0
      %531 = vmatpush1.bf16.msra.mxu0 0
      %532 = vmatprep.subr.bf16.mxu0 0
      %533 = vmatpush1.bf16.msra.mxu0 0
      %534 = vmatprep.mubr.bf16.mxu0 0
      %535 = vmatmul.mubr.bf16.gmra.mrb[0].mxu0 %v390
      %v536 = vpop.f32.mrb[0].mxu0
      %v537 = vadd.f32 %v260, %v536
      %v538 = vpop.f32.mrb[0].mxu0
      %v539 = vpop.f32.mrb[0].mxu0
      %v540 = vadd.f32 %v260, %v539
      %v541 = vpop.f32.mrb[0].mxu0
      %542 = vmatprep.mubr.bf16.mxu0 0
      %543 = vmatmul.mubr.bf16.gmra.mrb[0].mxu0 %v391
      %v544 = vpop.f32.mrb[0].mxu0
      %v545 = vadd.f32 %v260, %v544
      %v546 = vpop.f32.mrb[0].mxu0
      %v547 = vpop.f32.mrb[0].mxu0
      %v548 = vadd.f32 %v260, %v547
      %v549 = vpop.f32.mrb[0].mxu0
      %550 = vmatprep.mubr.bf16.mxu0 0
      %551 = vmatmul.mubr.bf16.gmra.mrb[0].mxu0 %v392
      %v552 = vpop.f32.mrb[0].mxu0
      %v553 = vadd.f32 %v260, %v552
      %v554 = vpop.f32.mrb[0].mxu0
      %v555 = vpop.f32.mrb[0].mxu0
      %v556 = vadd.f32 %v260, %v555
      %v557 = vpop.f32.mrb[0].mxu0
      %558 = vmatprep.mubr.bf16.mxu0 0
      %559 = vmatmul.mubr.bf16.gmra.mrb[0].mxu0 %v393
      %v560 = vpop.f32.mrb[0].mxu0
      %v561 = vadd.f32 %v260, %v560
      %v562 = vpop.f32.mrb[0].mxu0
      %v563 = vpop.f32.mrb[0].mxu0
      %v564 = vadd.f32 %v260, %v563
      %v565 = vpop.f32.mrb[0].mxu0
      %566 = vmatprep.mubr.bf16.mxu0 0
      %567 = vmatmul.mubr.bf16.gmra.mrb[0].mxu0 %v394
      %v568 = vpop.f32.mrb[0].mxu0
      %v569 = vadd.f32 %v260, %v568
      %v570 = vpop.f32.mrb[0].mxu0
      %v571 = vpop.f32.mrb[0].mxu0
      %v572 = vadd.f32 %v260, %v571
      %v573 = vpop.f32.mrb[0].mxu0
      %574 = vmatprep.mubr.bf16.mxu0 0
      %575 = vmatmul.mubr.bf16.gmra.mrb[0].mxu0 %v395
      %v576 = vpop.f32.mrb[0].mxu0
      %v577 = vadd.f32 %v260, %v576
      %v578 = vpop.f32.mrb[0].mxu0
      %v579 = vpop.f32.mrb[0].mxu0
      %v580 = vadd.f32 %v260, %v579
      %v581 = vpop.f32.mrb[0].mxu0
      %582 = vmatprep.mubr.bf16.mxu0 0
      %583 = vmatmul.mubr.bf16.gmra.mrb[0].mxu0 %v396
      %v584 = vpop.f32.mrb[0].mxu0
      %v585 = vadd.f32 %v260, %v584
      %v586 = vpop.f32.mrb[0].mxu0
      %v587 = vpop.f32.mrb[0].mxu0
      %v588 = vadd.f32 %v260, %v587
      %v589 = vpop.f32.mrb[0].mxu0
      %590 = vmatprep.mubr.bf16.mxu0 0
      %591 = vmatmul.mubr.bf16.gmra.mrb[0].mxu0 %v397
      %v592 = vpop.f32.mrb[0].mxu0
      %v593 = vadd.f32 %v260, %v592
      %v594 = vpop.f32.mrb[0].mxu0
      %v595 = vpop.f32.mrb[0].mxu0
      %v596 = vadd.f32 %v260, %v595
      %v597 = vpop.f32.mrb[0].mxu0
      %598 = vmatprep.mubr.bf16.mxu0 0
      %599 = vmatmul.mubr.bf16.gmra.mrb[0].mxu0 %v398
      %v600 = vpop.f32.mrb[0].mxu0
      %v601 = vadd.f32 %v260, %v600
      %v602 = vpop.f32.mrb[0].mxu0
      %v603 = vpop.f32.mrb[0].mxu0
      %v604 = vadd.f32 %v260, %v603
      %v605 = vpop.f32.mrb[0].mxu0
      %606 = vmatprep.mubr.bf16.mxu0 0
      %607 = vmatmul.mubr.bf16.gmra.mrb[0].mxu0 %v399
      %v608 = vpop.f32.mrb[0].mxu0
      %v609 = vadd.f32 %v260, %v608
      %v610 = vpop.f32.mrb[0].mxu0
      %v611 = vpop.f32.mrb[0].mxu0
      %v612 = vadd.f32 %v260, %v611
      %v613 = vpop.f32.mrb[0].mxu0
      %614 = vmatprep.mubr.bf16.mxu0 0
      %615 = vmatmul.mubr.bf16.gmra.mrb[0].mxu0 %v400
      %v616 = vpop.f32.mrb[0].mxu0
      %v617 = vadd.f32 %v260, %v616
      %v618 = vpop.f32.mrb[0].mxu0
      %v619 = vpop.f32.mrb[0].mxu0
      %v620 = vadd.f32 %v260, %v619
      %v621 = vpop.f32.mrb[0].mxu0
      %622 = vmatprep.mubr.bf16.mxu0 0
      %623 = vmatmul.mubr.bf16.gmra.mrb[0].mxu0 %v401
      %v624 = vpop.f32.mrb[0].mxu0
      %v625 = vadd.f32 %v260, %v624
      %v626 = vpop.f32.mrb[0].mxu0
      %v627 = vpop.f32.mrb[0].mxu0
      %v628 = vadd.f32 %v260, %v627
      %v629 = vpop.f32.mrb[0].mxu0
      %630 = vmatprep.mubr.bf16.mxu0 0
      %631 = vmatmul.mubr.bf16.gmra.mrb[0].mxu0 %v402
      %v632 = vpop.f32.mrb[0].mxu0
      %v633 = vadd.f32 %v260, %v632
      %v634 = vpop.f32.mrb[0].mxu0
      %v635 = vpop.f32.mrb[0].mxu0
      %v636 = vadd.f32 %v260, %v635
      %v637 = vpop.f32.mrb[0].mxu0
      %638 = vmatprep.mubr.bf16.mxu0 0
      %639 = vmatmul.mubr.bf16.gmra.mrb[0].mxu0 %v403
      %v640 = vpop.f32.mrb[0].mxu0
      %v641 = vadd.f32 %v260, %v640
      %v642 = vpop.f32.mrb[0].mxu0
      %v643 = vpop.f32.mrb[0].mxu0
      %v644 = vadd.f32 %v260, %v643
      %v645 = vpop.f32.mrb[0].mxu0
      %646 = vmatprep.mubr.bf16.mxu0 0
      %647 = vmatmul.mubr.bf16.gmra.mrb[0].mxu0 %v404
      %v648 = vpop.f32.mrb[0].mxu0
      %v649 = vadd.f32 %v260, %v648
      %v650 = vpop.f32.mrb[0].mxu0
      %v651 = vpop.f32.mrb[0].mxu0
      %v652 = vadd.f32 %v260, %v651
      %v653 = vpop.f32.mrb[0].mxu0
      %654 = vmatprep.mubr.bf16.mxu0 0
      %655 = vmatmul.mubr.bf16.gmra.mrb[0].mxu0 %v405
      %v656 = vpop.f32.mrb[0].mxu0
      %v657 = vadd.f32 %v260, %v656
      %v658 = vpop.f32.mrb[0].mxu0
      %v659 = vpop.f32.mrb[0].mxu0
      %v660 = vadd.f32 %v260, %v659
      %v661 = vpop.f32.mrb[0].mxu0
      %662 = vmatprep.mubr.bf16.mxu0 0
      %663 = vmatmul.mubr.bf16.gmra.mrb[0].mxu0 %v406
      %v664 = vpop.f32.mrb[0].mxu0
      %v665 = vadd.f32 %v260, %v664
      %v666 = vpop.f32.mrb[0].mxu0
      %v667 = vpop.f32.mrb[0].mxu0
      %v668 = vadd.f32 %v260, %v667
      %v669 = vpop.f32.mrb[0].mxu0
      %670 = vmatprep.mubr.bf16.mxu0 0
      %671 = vmatmul.mubr.bf16.gmra.mrb[0].mxu0 %v407
      %v672 = vpop.f32.mrb[0].mxu0
      %v673 = vadd.f32 %v260, %v672
      %v674 = vpop.f32.mrb[0].mxu0
      %v675 = vpop.f32.mrb[0].mxu0
      %v676 = vadd.f32 %v260, %v675
      %v677 = vpop.f32.mrb[0].mxu0
      %678 = vmatprep.mubr.bf16.mxu0 0
      %679 = vmatmul.mubr.bf16.gmra.mrb[0].mxu0 %v408
      %v680 = vpop.f32.mrb[0].mxu0
      %v681 = vadd.f32 %v260, %v680
      %v682 = vpop.f32.mrb[0].mxu0
      %v683 = vpop.f32.mrb[0].mxu0
      %v684 = vadd.f32 %v260, %v683
      %v685 = vpop.f32.mrb[0].mxu0
      %686 = vmatprep.mubr.bf16.mxu0 0
      %687 = vmatmul.mubr.bf16.gmra.mrb[0].mxu0 %v409
      %v688 = vpop.f32.mrb[0].mxu0
      %v689 = vadd.f32 %v260, %v688
      %v690 = vpop.f32.mrb[0].mxu0
      %v691 = vpop.f32.mrb[0].mxu0
      %v692 = vadd.f32 %v260, %v691
      %v693 = vpop.f32.mrb[0].mxu0
      %694 = vmatprep.mubr.bf16.mxu0 0
      %695 = vmatmul.mubr.bf16.gmra.mrb[0].mxu0 %v410
      %v696 = vpop.f32.mrb[0].mxu0
      %v697 = vadd.f32 %v260, %v696
      %v698 = vpop.f32.mrb[0].mxu0
      %v699 = vpop.f32.mrb[0].mxu0
      %v700 = vadd.f32 %v260, %v699
      %v701 = vpop.f32.mrb[0].mxu0
      %702 = vmatprep.mubr.bf16.mxu0 0
      %703 = vmatmul.mubr.bf16.gmra.mrb[0].mxu0 %v411
      %v704 = vpop.f32.mrb[0].mxu0
      %v705 = vadd.f32 %v260, %v704
      %v706 = vpop.f32.mrb[0].mxu0
      %v707 = vpop.f32.mrb[0].mxu0
      %v708 = vadd.f32 %v260, %v707
      %v709 = vpop.f32.mrb[0].mxu0
      %710 = vmatprep.mubr.bf16.mxu0 0
      %711 = vmatmul.mubr.bf16.gmra.mrb[0].mxu0 %v412
      %v712 = vpop.f32.mrb[0].mxu0
      %v713 = vadd.f32 %v260, %v712
      %v714 = vpop.f32.mrb[0].mxu0
      %v715 = vpop.f32.mrb[0].mxu0
      %v716 = vadd.f32 %v260, %v715
      %v717 = vpop.f32.mrb[0].mxu0
      %718 = vmatprep.mubr.bf16.mxu0 0
      %719 = vmatmul.mubr.bf16.gmra.mrb[0].mxu0 %v413
      %v720 = vpop.f32.mrb[0].mxu0
      %v721 = vadd.f32 %v260, %v720
      %v722 = vpop.f32.mrb[0].mxu0
      %v723 = vpop.f32.mrb[0].mxu0
      %v724 = vadd.f32 %v260, %v723
      %v725 = vpop.f32.mrb[0].mxu0
      %726 = vmatprep.mubr.bf16.mxu0 0
      %727 = vmatmul.mubr.bf16.gmra.mrb[0].mxu0 %v414
      %v728 = vpop.f32.mrb[0].mxu0
      %v729 = vadd.f32 %v260, %v728
      %v730 = vpop.f32.mrb[0].mxu0
      %v731 = vpop.f32.mrb[0].mxu0
      %v732 = vadd.f32 %v260, %v731
      %v733 = vpop.f32.mrb[0].mxu0
      %734 = vmatprep.mubr.bf16.mxu0 0
      %735 = vmatmul.mubr.bf16.gmra.mrb[0].mxu0 %v415
      %v736 = vpop.f32.mrb[0].mxu0
      %v737 = vadd.f32 %v260, %v736
      %v738 = vpop.f32.mrb[0].mxu0
      %v739 = vpop.f32.mrb[0].mxu0
      %v740 = vadd.f32 %v260, %v739
      %v741 = vpop.f32.mrb[0].mxu0
      %742 = vmatprep.mubr.bf16.mxu0 0
      %743 = vmatmul.mubr.bf16.gmra.mrb[0].mxu0 %v416
      %v744 = vpop.f32.mrb[0].mxu0
      %v745 = vadd.f32 %v260, %v744
      %v746 = vpop.f32.mrb[0].mxu0
      %v747 = vpop.f32.mrb[0].mxu0
      %v748 = vadd.f32 %v260, %v747
      %v749 = vpop.f32.mrb[0].mxu0
      %750 = vmatprep.mubr.bf16.mxu0 0
      %751 = vmatmul.mubr.bf16.gmra.mrb[0].mxu0 %v417
      %v752 = vpop.f32.mrb[0].mxu0
      %v753 = vadd.f32 %v260, %v752
      %v754 = vpop.f32.mrb[0].mxu0
      %v755 = vpop.f32.mrb[0].mxu0
      %v756 = vadd.f32 %v260, %v755
      %v757 = vpop.f32.mrb[0].mxu0
      %758 = vmatprep.mubr.bf16.mxu0 0
      %759 = vmatmul.mubr.bf16.gmra.mrb[0].mxu0 %v418
      %v760 = vpop.f32.mrb[0].mxu0
      %v761 = vadd.f32 %v260, %v760
      %v762 = vpop.f32.mrb[0].mxu0
      %v763 = vpop.f32.mrb[0].mxu0
      %v764 = vadd.f32 %v260, %v763
      %v765 = vpop.f32.mrb[0].mxu0
      %766 = vmatprep.mubr.bf16.mxu0 0
      %767 = vmatmul.mubr.bf16.gmra.mrb[0].mxu0 %v419
      %v768 = vpop.f32.mrb[0].mxu0
      %v769 = vadd.f32 %v260, %v768
      %v770 = vpop.f32.mrb[0].mxu0
      %v771 = vpop.f32.mrb[0].mxu0
      %v772 = vadd.f32 %v260, %v771
      %v773 = vpop.f32.mrb[0].mxu0
      %774 = vmatprep.mubr.bf16.mxu0 0
      %775 = vmatmul.mubr.bf16.gmra.mrb[0].mxu0 %v420
      %v776 = vpop.f32.mrb[0].mxu0
      %v777 = vadd.f32 %v260, %v776
      %v778 = vpop.f32.mrb[0].mxu0
      %v779 = vpop.f32.mrb[0].mxu0
      %v780 = vadd.f32 %v260, %v779
      %v781 = vpop.f32.mrb[0].mxu0
      %782 = vmatprep.mubr.bf16.mxu0 0
      %783 = vmatmul.mubr.bf16.gmra.mrb[0].mxu0 %v421
      %v784 = vpop.f32.mrb[0].mxu0
      %v785 = vadd.f32 %v260, %v784
      %v786 = vpop.f32.mrb[0].mxu0
      %v787 = vpop.f32.mrb[0].mxu0
      %v788 = vadd.f32 %v260, %v787
      %v789 = vpop.f32.mrb[0].mxu0
      %790 = vdwg.mxu0
      %v791 = vmax.f32 %v537, 0.0
      %v792 = vmax.f32 %v540, 0.0
      %v793 = vmax.f32 %v545, 0.0
      %v794 = vmax.f32 %v548, 0.0
      %v795 = vmax.f32 %v553, 0.0
      %v796 = vmax.f32 %v556, 0.0
      %v797 = vmax.f32 %v561, 0.0
      %v798 = vmax.f32 %v564, 0.0
      %v799 = vmax.f32 %v569, 0.0
      %v800 = vmax.f32 %v572, 0.0
      %v801 = vmax.f32 %v577, 0.0
      %v802 = vmax.f32 %v580, 0.0
      %v803 = vmax.f32 %v585, 0.0
      %v804 = vmax.f32 %v588, 0.0
      %v805 = vmax.f32 %v593, 0.0
      %v806 = vmax.f32 %v596, 0.0
      %v807 = vmax.f32 %v601, 0.0
      %v808 = vmax.f32 %v604, 0.0
      %v809 = vmax.f32 %v609, 0.0
      %v810 = vmax.f32 %v612, 0.0
      %v811 = vmax.f32 %v617, 0.0
      %v812 = vmax.f32 %v620, 0.0
      %v813 = vmax.f32 %v625, 0.0
      %v814 = vmax.f32 %v628, 0.0
      %v815 = vmax.f32 %v633, 0.0
      %v816 = vmax.f32 %v636, 0.0
      %v817 = vmax.f32 %v641, 0.0
      %v818 = vmax.f32 %v644, 0.0
      %v819 = vmax.f32 %v649, 0.0
      %v820 = vmax.f32 %v652, 0.0
      %v821 = vmax.f32 %v657, 0.0
      %v822 = vmax.f32 %v660, 0.0
      %v823 = vmax.f32 %v665, 0.0
      %v824 = vmax.f32 %v668, 0.0
      %v825 = vmax.f32 %v673, 0.0
      %v826 = vmax.f32 %v676, 0.0
      %v827 = vmax.f32 %v681, 0.0
      %v828 = vmax.f32 %v684, 0.0
      %v829 = vmax.f32 %v689, 0.0
      %v830 = vmax.f32 %v692, 0.0
      %v831 = vmax.f32 %v697, 0.0
      %v832 = vmax.f32 %v700, 0.0
      %v833 = vmax.f32 %v705, 0.0
      %v834 = vmax.f32 %v708, 0.0
      %v835 = vmax.f32 %v713, 0.0
      %v836 = vmax.f32 %v716, 0.0
      %v837 = vmax.f32 %v721, 0.0
      %v838 = vmax.f32 %v724, 0.0
      %v839 = vmax.f32 %v729, 0.0
      %v840 = vmax.f32 %v732, 0.0
      %v841 = vmax.f32 %v737, 0.0
      %v842 = vmax.f32 %v740, 0.0
      %v843 = vmax.f32 %v745, 0.0
      %v844 = vmax.f32 %v748, 0.0
      %v845 = vmax.f32 %v753, 0.0
      %v846 = vmax.f32 %v756, 0.0
      %v847 = vmax.f32 %v761, 0.0
      %v848 = vmax.f32 %v764, 0.0
      %v849 = vmax.f32 %v769, 0.0
      %v850 = vmax.f32 %v772, 0.0
      %v851 = vmax.f32 %v777, 0.0
      %v852 = vmax.f32 %v780, 0.0
      %v853 = vmax.f32 %v785, 0.0
      %v854 = vmax.f32 %v788, 0.0
      %855 = vst [vmem:[%s172] sm:$0xff] %v791
      %856 = vst [vmem:[%s172 + $0x8] sm:$0xff] %v792
      %857 = vst [vmem:[%s172 + $0x10] sm:$0xff] %v793
      %858 = vst [vmem:[%s172 + $0x18] sm:$0xff] %v794
      %859 = vst [vmem:[%s172 + $0x20] sm:$0xff] %v795
      %860 = vst [vmem:[%s172 + $0x28] sm:$0xff] %v796
      %861 = vst [vmem:[%s172 + $0x30] sm:$0xff] %v797
      %862 = vst [vmem:[%s172 + $0x38] sm:$0xff] %v798
      %863 = vst [vmem:[%s172 + $0x40] sm:$0xff] %v799
      %864 = vst [vmem:[%s172 + $0x48] sm:$0xff] %v800
      %865 = vst [vmem:[%s172 + $0x50] sm:$0xff] %v801
      %866 = vst [vmem:[%s172 + $0x58] sm:$0xff] %v802
      %867 = vst [vmem:[%s172 + $0x60] sm:$0xff] %v803
      %868 = vst [vmem:[%s172 + $0x68] sm:$0xff] %v804
      %869 = vst [vmem:[%s172 + $0x70] sm:$0xff] %v805
      %870 = vst [vmem:[%s172 + $0x78] sm:$0xff] %v806
      %871 = vst [vmem:[%s172 + $0x80] sm:$0xff] %v807
      %872 = vst [vmem:[%s172 + $0x88] sm:$0xff] %v808
      %873 = vst [vmem:[%s172 + $0x90] sm:$0xff] %v809
      %874 = vst [vmem:[%s172 + $0x98] sm:$0xff] %v810
      %875 = vst [vmem:[%s172 + $0xa0] sm:$0xff] %v811
      %876 = vst [vmem:[%s172 + $0xa8] sm:$0xff] %v812
      %877 = vst [vmem:[%s172 + $0xb0] sm:$0xff] %v813
      %878 = vst [vmem:[%s172 + $0xb8] sm:$0xff] %v814
      %879 = vst [vmem:[%s172 + $0xc0] sm:$0xff] %v815
      %880 = vst [vmem:[%s172 + $0xc8] sm:$0xff] %v816
      %881 = vst [vmem:[%s172 + $0xd0] sm:$0xff] %v817
      %882 = vst [vmem:[%s172 + $0xd8] sm:$0xff] %v818
      %883 = vst [vmem:[%s172 + $0xe0] sm:$0xff] %v819
      %884 = vst [vmem:[%s172 + $0xe8] sm:$0xff] %v820
      %885 = vst [vmem:[%s172 + $0xf0] sm:$0xff] %v821
      %886 = vst [vmem:[%s172 + $0xf8] sm:$0xff] %v822
      %887 = vst [vmem:[%s172 + $0x100] sm:$0xff] %v823
      %888 = vst [vmem:[%s172 + $0x108] sm:$0xff] %v824
      %889 = vst [vmem:[%s172 + $0x110] sm:$0xff] %v825
      %890 = vst [vmem:[%s172 + $0x118] sm:$0xff] %v826
      %891 = vst [vmem:[%s172 + $0x120] sm:$0xff] %v827
      %892 = vst [vmem:[%s172 + $0x128] sm:$0xff] %v828
      %893 = vst [vmem:[%s172 + $0x130] sm:$0xff] %v829
      %894 = vst [vmem:[%s172 + $0x138] sm:$0xff] %v830
      %895 = vst [vmem:[%s172 + $0x140] sm:$0xff] %v831
      %896 = vst [vmem:[%s172 + $0x148] sm:$0xff] %v832
      %897 = vst [vmem:[%s172 + $0x150] sm:$0xff] %v833
      %898 = vst [vmem:[%s172 + $0x158] sm:$0xff] %v834
      %899 = vst [vmem:[%s172 + $0x160] sm:$0xff] %v835
      %900 = vst [vmem:[%s172 + $0x168] sm:$0xff] %v836
      %901 = vst [vmem:[%s172 + $0x170] sm:$0xff] %v837
      %902 = vst [vmem:[%s172 + $0x178] sm:$0xff] %v838
      %903 = vst [vmem:[%s172 + $0x180] sm:$0xff] %v839
      %904 = vst [vmem:[%s172 + $0x188] sm:$0xff] %v840
      %905 = vst [vmem:[%s172 + $0x190] sm:$0xff] %v841
      %906 = vst [vmem:[%s172 + $0x198] sm:$0xff] %v842
      %907 = vst [vmem:[%s172 + $0x1a0] sm:$0xff] %v843
      %908 = vst [vmem:[%s172 + $0x1a8] sm:$0xff] %v844
      %909 = vst [vmem:[%s172 + $0x1b0] sm:$0xff] %v845
      %910 = vst [vmem:[%s172 + $0x1b8] sm:$0xff] %v846
      %911 = vst [vmem:[%s172 + $0x1c0] sm:$0xff] %v847
      %912 = vst [vmem:[%s172 + $0x1c8] sm:$0xff] %v848
      %913 = vst [vmem:[%s172 + $0x1d0] sm:$0xff] %v849
      %914 = vst [vmem:[%s172 + $0x1d8] sm:$0xff] %v850
      %915 = vst [vmem:[%s172 + $0x1e0] sm:$0xff] %v851
      %916 = vst [vmem:[%s172 + $0x1e8] sm:$0xff] %v852
      %917 = vst [vmem:[%s172 + $0x1f0] sm:$0xff] %v853
      %918 = vst [vmem:[%s172 + $0x1f8] sm:$0xff] %v854
      %s919 = smul.u32 64, %s14
      %p920 = scmp.lt.s32.totalorder %s919, 255
      %s921 = scalar_select %p920, %s919, 255
      %s922 = smul.addr %s921, 8
      %s923 = scalar_lea.vmem %s3, %s922
      // Predicated region
      $region33: #{cnn_cifar_forward.5} parent=31 // pred_check
        %p924 = pneg %p100
      $region34: #{cnn_cifar_forward.5} parent=31 // pred_check_branch
        %926 = sbr.rel (%p924) target = $region36
      $region35: #{cnn_cifar_forward.5} parent=31 // pred_region
        %s927 = smul.u32 64, %s14
      $region36: #{cnn_cifar_forward.5} parent=31 // pred_fallthru
        _
    $region32: #{cnn_cifar_forward.5} parent=5 // pred_fallthru
      _
    %p928 = scmp.le.s32.totalorder 2, %s9
    // Predicated region
    $region37: #{cnn_cifar_forward.5} parent=5 // pred_check
      %p929 = pneg %p928
    $region38: #{cnn_cifar_forward.5} parent=5 // pred_check_branch
      %931 = sbr.rel (%p929) target = $region40
    $region39: #{cnn_cifar_forward.5} parent=5 // pred_region
      %s932 = ssub.s32 %s9, 2
      // Predicated region
      $region41: #{cnn_cifar_forward.5} parent=39 // pred_check
        %p933 = pneg %p106
      $region42: #{cnn_cifar_forward.5} parent=39 // pred_check_branch
        %935 = sbr.rel (%p933) target = $region44
      $region43: #{cnn_cifar_forward.5} parent=39 // pred_region
        %s936 = smul.u32 64, %s15
        %p937 = scmp.lt.s32.totalorder %s936, 255
        %s938 = scalar_select %p937, %s936, 255
        %s939 = smul.addr %s938, 8
        %s940 = scalar_lea.vmem %s3, %s939
      $region44: #{cnn_cifar_forward.5} parent=39 // pred_fallthru
        _
    $region40: #{cnn_cifar_forward.5} parent=5 // pred_fallthru
      _
  $region6: #{cnn_cifar_forward.5} parent=0 // loop_footer
    %s13 = sadd.s32 1, %s9
  $region7: #{cnn_cifar_forward.5} parent=0 // loop_footer_branch
    %8 = sbr.rel target = $region3
  $region8: #{cnn_cifar_forward.5} parent=0 // loop_exit
    _

// kernel: cnn_cifar_forward.6
$region0: #{cnn_cifar_forward.6}
  #allocation0 [shape = 'u32[]', space=smem, size = 0x4, offset = 0x4, fixed_abs, tag = 'smem constant byte address 0x4 - core index']
  #allocation1 [shape = 'u32[144,128]{1,0:T(1,128)}', space=vmem, size = 0x12000, scoped, tag = 'internal scratch']
  %s0 = inlined_call_operand.vmem [shape: f32[9,344,128], index: 0, kind: input, shape index: {}]
  %s1 = inlined_call_operand.vmem [shape: f32[344,128], index: 1, kind: output, shape index: {}]
  %s2 = sld [smem:[#allocation0]]
  $region14: #{cnn_cifar_forward.6} parent=0
    _
  %s4 = ssub.s32 1, %s2
  %s5 = scalar_select 0, %s4, %s2
  // Predicated region
  $region2: #{cnn_cifar_forward.6} parent=0 // pred_check
    _
  $region3: #{cnn_cifar_forward.6} parent=0 // pred_check_branch
    %7 = sbr.rel (0) target = $region5
  $region4: #{cnn_cifar_forward.6} parent=0 // pred_region
    _
  $region5: #{cnn_cifar_forward.6} parent=0 // pred_fallthru
    _
  %v8 = vld [vmem:[%s0] sm:$0xff]
  %v9 = vld [vmem:[%s0 + $0x8] sm:$0xff]
  %v10 = vld [vmem:[%s0 + $0x10] sm:$0xff]
  %v11 = vld [vmem:[%s0 + $0x18] sm:$0xff]
  %v12 = vld [vmem:[%s0 + $0x20] sm:$0xff]
  %v13 = vld [vmem:[%s0 + $0x28] sm:$0xff]
  %v14 = vld [vmem:[%s0 + $0x30] sm:$0xff]
  %v15 = vld [vmem:[%s0 + $0x38] sm:$0xff]
  %v16 = vld [vmem:[%s0 + $0x40] sm:$0xff]
  %v17 = vld [vmem:[%s0 + $0x48] sm:$0xff]
  %v18 = vld [vmem:[%s0 + $0x50] sm:$0xff]
  %v19 = vld [vmem:[%s0 + $0x58] sm:$0xff]
  %v20 = vld [vmem:[%s0 + $0x60] sm:$0xff]
  %v21 = vld [vmem:[%s0 + $0x68] sm:$0xff]
  %v22 = vld [vmem:[%s0 + $0x70] sm:$0xff]
  %v23 = vld [vmem:[%s0 + $0x78] sm:$0xff]
  %v24 = vld [vmem:[%s0 + $0x80] sm:$0xff]
  %v25 = vld [vmem:[%s0 + $0x88] sm:$0xff]
  %v26 = vld [vmem:[%s0 + $0x90] sm:$0xff]
  %v27 = vld [vmem:[%s0 + $0x98] sm:$0xff]
  %v28 = vld [vmem:[%s0 + $0xa0] sm:$0xff]
  %v29 = vld [vmem:[%s0 + $0xa8] sm:$0xff]
  %v30 = vld [vmem:[%s0 + $0xb0] sm:$0xff]
  %v31 = vld [vmem:[%s0 + $0xb8] sm:$0xff]
  %v32 = vld [vmem:[%s0 + $0xc0] sm:$0xff]
  %v33 = vld [vmem:[%s0 + $0xc8] sm:$0xff]
  %v34 = vld [vmem:[%s0 + $0xd0] sm:$0xff]
  %v35 = vld [vmem:[%s0 + $0xd8] sm:$0xff]
  %v36 = vld [vmem:[%s0 + $0xe0] sm:$0xff]
  %v37 = vld [vmem:[%s0 + $0xe8] sm:$0xff]
  %v38 = vld [vmem:[%s0 + $0xf0] sm:$0xff]
  %v39 = vld [vmem:[%s0 + $0xf8] sm:$0xff]
  %v40 = vld [vmem:[%s0 + $0x100] sm:$0xff]
  %v41 = vld [vmem:[%s0 + $0x108] sm:$0xff]
  %v42 = vld [vmem:[%s0 + $0x110] sm:$0xff]
  %v43 = vld [vmem:[%s0 + $0x118] sm:$0xff]
  %v44 = vld [vmem:[%s0 + $0x120] sm:$0xff]
  %v45 = vld [vmem:[%s0 + $0x128] sm:$0xff]
  %v46 = vld [vmem:[%s0 + $0x130] sm:$0xff]
  %v47 = vld [vmem:[%s0 + $0x138] sm:$0xff]
  %v48 = vld [vmem:[%s0 + $0x140] sm:$0xff]
  %v49 = vld [vmem:[%s0 + $0x148] sm:$0xff]
  %v50 = vld [vmem:[%s0 + $0x150] sm:$0xff]
  %s51 = scalar_lea.vmem %s0, 344
  %v52 = vld [vmem:[%s51] sm:$0xff]
  %v53 = vld [vmem:[%s51 + $0x8] sm:$0xff]
  %v54 = vld [vmem:[%s51 + $0x10] sm:$0xff]
  %v55 = vld [vmem:[%s51 + $0x18] sm:$0xff]
  %v56 = vld [vmem:[%s51 + $0x20] sm:$0xff]
  %v57 = vld [vmem:[%s51 + $0x28] sm:$0xff]
  %v58 = vld [vmem:[%s51 + $0x30] sm:$0xff]
  %v59 = vld [vmem:[%s51 + $0x38] sm:$0xff]
  %v60 = vld [vmem:[%s51 + $0x40] sm:$0xff]
  %v61 = vld [vmem:[%s51 + $0x48] sm:$0xff]
  %v62 = vld [vmem:[%s51 + $0x50] sm:$0xff]
  %v63 = vld [vmem:[%s51 + $0x58] sm:$0xff]
  %v64 = vld [vmem:[%s51 + $0x60] sm:$0xff]
  %v65 = vld [vmem:[%s51 + $0x68] sm:$0xff]
  %v66 = vld [vmem:[%s51 + $0x70] sm:$0xff]
  %v67 = vld [vmem:[%s51 + $0x78] sm:$0xff]
  %v68 = vld [vmem:[%s51 + $0x80] sm:$0xff]
  %v69 = vld [vmem:[%s51 + $0x88] sm:$0xff]
  %v70 = vld [vmem:[%s51 + $0x90] sm:$0xff]
  %v71 = vld [vmem:[%s51 + $0x98] sm:$0xff]
  %v72 = vld [vmem:[%s51 + $0xa0] sm:$0xff]
  %v73 = vld [vmem:[%s51 + $0xa8] sm:$0xff]
  %v74 = vld [vmem:[%s51 + $0xb0] sm:$0xff]
  %v75 = vld [vmem:[%s51 + $0xb8] sm:$0xff]
  %v76 = vld [vmem:[%s51 + $0xc0] sm:$0xff]
  %v77 = vld [vmem:[%s51 + $0xc8] sm:$0xff]
  %v78 = vld [vmem:[%s51 + $0xd0] sm:$0xff]
  %v79 = vld [vmem:[%s51 + $0xd8] sm:$0xff]
  %v80 = vld [vmem:[%s51 + $0xe0] sm:$0xff]
  %v81 = vld [vmem:[%s51 + $0xe8] sm:$0xff]
  %v82 = vld [vmem:[%s51 + $0xf0] sm:$0xff]
  %v83 = vld [vmem:[%s51 + $0xf8] sm:$0xff]
  %v84 = vld [vmem:[%s51 + $0x100] sm:$0xff]
  %v85 = vld [vmem:[%s51 + $0x108] sm:$0xff]
  %v86 = vld [vmem:[%s51 + $0x110] sm:$0xff]
  %v87 = vld [vmem:[%s51 + $0x118] sm:$0xff]
  %v88 = vld [vmem:[%s51 + $0x120] sm:$0xff]
  %v89 = vld [vmem:[%s51 + $0x128] sm:$0xff]
  %v90 = vld [vmem:[%s51 + $0x130] sm:$0xff]
  %v91 = vld [vmem:[%s51 + $0x138] sm:$0xff]
  %v92 = vld [vmem:[%s51 + $0x140] sm:$0xff]
  %v93 = vld [vmem:[%s51 + $0x148] sm:$0xff]
  %v94 = vld [vmem:[%s51 + $0x150] sm:$0xff]
  %v95 = vmax.f32 %v8, %v52
  %v96 = vmax.f32 %v9, %v53
  %v97 = vmax.f32 %v10, %v54
  %v98 = vmax.f32 %v11, %v55
  %v99 = vmax.f32 %v12, %v56
  %v100 = vmax.f32 %v13, %v57
  %v101 = vmax.f32 %v14, %v58
  %v102 = vmax.f32 %v15, %v59
  %v103 = vmax.f32 %v16, %v60
  %v104 = vmax.f32 %v17, %v61
  %v105 = vmax.f32 %v18, %v62
  %v106 = vmax.f32 %v19, %v63
  %v107 = vmax.f32 %v20, %v64
  %v108 = vmax.f32 %v21, %v65
  %v109 = vmax.f32 %v22, %v66
  %v110 = vmax.f32 %v23, %v67
  %v111 = vmax.f32 %v24, %v68
  %v112 = vmax.f32 %v25, %v69
  %v113 = vmax.f32 %v26, %v70
  %v114 = vmax.f32 %v27, %v71
  %v115 = vmax.f32 %v28, %v72
  %v116 = vmax.f32 %v29, %v73
  %v117 = vmax.f32 %v30, %v74
  %v118 = vmax.f32 %v31, %v75
  %v119 = vmax.f32 %v32, %v76
  %v120 = vmax.f32 %v33, %v77
  %v121 = vmax.f32 %v34, %v78
  %v122 = vmax.f32 %v35, %v79
  %v123 = vmax.f32 %v36, %v80
  %v124 = vmax.f32 %v37, %v81
  %v125 = vmax.f32 %v38, %v82
  %v126 = vmax.f32 %v39, %v83
  %v127 = vmax.f32 %v40, %v84
  %v128 = vmax.f32 %v41, %v85
  %v129 = vmax.f32 %v42, %v86
  %v130 = vmax.f32 %v43, %v87
  %v131 = vmax.f32 %v44, %v88
  %v132 = vmax.f32 %v45, %v89
  %v133 = vmax.f32 %v46, %v90
  %v134 = vmax.f32 %v47, %v91
  %v135 = vmax.f32 %v48, %v92
  %v136 = vmax.f32 %v49, %v93
  %v137 = vmax.f32 %v50, %v94
  %s138 = scalar_lea.vmem %s0, 688
  %v139 = vld [vmem:[%s138] sm:$0xff]
  %v140 = vld [vmem:[%s138 + $0x8] sm:$0xff]
  %v141 = vld [vmem:[%s138 + $0x10] sm:$0xff]
  %v142 = vld [vmem:[%s138 + $0x18] sm:$0xff]
  %v143 = vld [vmem:[%s138 + $0x20] sm:$0xff]
  %v144 = vld [vmem:[%s138 + $0x28] sm:$0xff]
  %v145 = vld [vmem:[%s138 + $0x30] sm:$0xff]
  %v146 = vld [vmem:[%s138 + $0x38] sm:$0xff]
  %v147 = vld [vmem:[%s138 + $0x40] sm:$0xff]
  %v148 = vld [vmem:[%s138 + $0x48] sm:$0xff]
  %v149 = vld [vmem:[%s138 + $0x50] sm:$0xff]
  %v150 = vld [vmem:[%s138 + $0x58] sm:$0xff]
  %v151 = vld [vmem:[%s138 + $0x60] sm:$0xff]
  %v152 = vld [vmem:[%s138 + $0x68] sm:$0xff]
  %v153 = vld [vmem:[%s138 + $0x70] sm:$0xff]
  %v154 = vld [vmem:[%s138 + $0x78] sm:$0xff]
  %v155 = vld [vmem:[%s138 + $0x80] sm:$0xff]
  %v156 = vld [vmem:[%s138 + $0x88] sm:$0xff]
  %v157 = vld [vmem:[%s138 + $0x90] sm:$0xff]
  %v158 = vld [vmem:[%s138 + $0x98] sm:$0xff]
  %v159 = vld [vmem:[%s138 + $0xa0] sm:$0xff]
  %v160 = vld [vmem:[%s138 + $0xa8] sm:$0xff]
  %v161 = vld [vmem:[%s138 + $0xb0] sm:$0xff]
  %v162 = vld [vmem:[%s138 + $0xb8] sm:$0xff]
  %v163 = vld [vmem:[%s138 + $0xc0] sm:$0xff]
  %v164 = vld [vmem:[%s138 + $0xc8] sm:$0xff]
  %v165 = vld [vmem:[%s138 + $0xd0] sm:$0xff]
  %v166 = vld [vmem:[%s138 + $0xd8] sm:$0xff]
  %v167 = vld [vmem:[%s138 + $0xe0] sm:$0xff]
  %v168 = vld [vmem:[%s138 + $0xe8] sm:$0xff]
  %v169 = vld [vmem:[%s138 + $0xf0] sm:$0xff]
  %v170 = vld [vmem:[%s138 + $0xf8] sm:$0xff]
  %v171 = vld [vmem:[%s138 + $0x100] sm:$0xff]
  %v172 = vld [vmem:[%s138 + $0x108] sm:$0xff]
  %v173 = vld [vmem:[%s138 + $0x110] sm:$0xff]
  %v174 = vld [vmem:[%s138 + $0x118] sm:$0xff]
  %v175 = vld [vmem:[%s138 + $0x120] sm:$0xff]
  %v176 = vld [vmem:[%s138 + $0x128] sm:$0xff]
  %v177 = vld [vmem:[%s138 + $0x130] sm:$0xff]
  %v178 = vld [vmem:[%s138 + $0x138] sm:$0xff]
  %v179 = vld [vmem:[%s138 + $0x140] sm:$0xff]
  %v180 = vld [vmem:[%s138 + $0x148] sm:$0xff]
  %v181 = vld [vmem:[%s138 + $0x150] sm:$0xff]
  %v182 = vmax.f32 %v95, %v139
  %v183 = vmax.f32 %v96, %v140
  %v184 = vmax.f32 %v97, %v141
  %v185 = vmax.f32 %v98, %v142
  %v186 = vmax.f32 %v99, %v143
  %v187 = vmax.f32 %v100, %v144
  %v188 = vmax.f32 %v101, %v145
  %v189 = vmax.f32 %v102, %v146
  %v190 = vmax.f32 %v103, %v147
  %v191 = vmax.f32 %v104, %v148
  %v192 = vmax.f32 %v105, %v149
  %v193 = vmax.f32 %v106, %v150
  %v194 = vmax.f32 %v107, %v151
  %v195 = vmax.f32 %v108, %v152
  %v196 = vmax.f32 %v109, %v153
  %v197 = vmax.f32 %v110, %v154
  %v198 = vmax.f32 %v111, %v155
  %v199 = vmax.f32 %v112, %v156
  %v200 = vmax.f32 %v113, %v157
  %v201 = vmax.f32 %v114, %v158
  %v202 = vmax.f32 %v115, %v159
  %v203 = vmax.f32 %v116, %v160
  %v204 = vmax.f32 %v117, %v161
  %v205 = vmax.f32 %v118, %v162
  %v206 = vmax.f32 %v119, %v163
  %v207 = vmax.f32 %v120, %v164
  %v208 = vmax.f32 %v121, %v165
  %v209 = vmax.f32 %v122, %v166
  %v210 = vmax.f32 %v123, %v167
  %v211 = vmax.f32 %v124, %v168
  %v212 = vmax.f32 %v125, %v169
  %v213 = vmax.f32 %v126, %v170
  %v214 = vmax.f32 %v127, %v171
  %v215 = vmax.f32 %v128, %v172
  %v216 = vmax.f32 %v129, %v173
  %v217 = vmax.f32 %v130, %v174
  %v218 = vmax.f32 %v131, %v175
  %v219 = vmax.f32 %v132, %v176
  %v220 = vmax.f32 %v133, %v177
  %v221 = vmax.f32 %v134, %v178
  %v222 = vmax.f32 %v135, %v179
  %v223 = vmax.f32 %v136, %v180
  %v224 = vmax.f32 %v137, %v181
  %s225 = scalar_lea.vmem %s0, 1032
  %v226 = vld [vmem:[%s225] sm:$0xff]
  %v227 = vld [vmem:[%s225 + $0x8] sm:$0xff]
  %v228 = vld [vmem:[%s225 + $0x10] sm:$0xff]
  %v229 = vld [vmem:[%s225 + $0x18] sm:$0xff]
  %v230 = vld [vmem:[%s225 + $0x20] sm:$0xff]
  %v231 = vld [vmem:[%s225 + $0x28] sm:$0xff]
  %v232 = vld [vmem:[%s225 + $0x30] sm:$0xff]
  %v233 = vld [vmem:[%s225 + $0x38] sm:$0xff]
  %v234 = vld [vmem:[%s225 + $0x40] sm:$0xff]
  %v235 = vld [vmem:[%s225 + $0x48] sm:$0xff]
  %v236 = vld [vmem:[%s225 + $0x50] sm:$0xff]
  %v237 = vld [vmem:[%s225 + $0x58] sm:$0xff]
  %v238 = vld [vmem:[%s225 + $0x60] sm:$0xff]
  %v239 = vld [vmem:[%s225 + $0x68] sm:$0xff]
  %v240 = vld [vmem:[%s225 + $0x70] sm:$0xff]
  %v241 = vld [vmem:[%s225 + $0x78] sm:$0xff]
  %v242 = vld [vmem:[%s225 + $0x80] sm:$0xff]
  %v243 = vld [vmem:[%s225 + $0x88] sm:$0xff]
  %v244 = vld [vmem:[%s225 + $0x90] sm:$0xff]
  %v245 = vld [vmem:[%s225 + $0x98] sm:$0xff]
  %v246 = vld [vmem:[%s225 + $0xa0] sm:$0xff]
  %v247 = vld [vmem:[%s225 + $0xa8] sm:$0xff]
  %v248 = vld [vmem:[%s225 + $0xb0] sm:$0xff]
  %v249 = vld [vmem:[%s225 + $0xb8] sm:$0xff]
  %v250 = vld [vmem:[%s225 + $0xc0] sm:$0xff]
  %v251 = vld [vmem:[%s225 + $0xc8] sm:$0xff]
  %v252 = vld [vmem:[%s225 + $0xd0] sm:$0xff]
  %v253 = vld [vmem:[%s225 + $0xd8] sm:$0xff]
  %v254 = vld [vmem:[%s225 + $0xe0] sm:$0xff]
  %v255 = vld [vmem:[%s225 + $0xe8] sm:$0xff]
  %v256 = vld [vmem:[%s225 + $0xf0] sm:$0xff]
  %v257 = vld [vmem:[%s225 + $0xf8] sm:$0xff]
  %v258 = vld [vmem:[%s225 + $0x100] sm:$0xff]
  %v259 = vld [vmem:[%s225 + $0x108] sm:$0xff]
  %v260 = vld [vmem:[%s225 + $0x110] sm:$0xff]
  %v261 = vld [vmem:[%s225 + $0x118] sm:$0xff]
  %v262 = vld [vmem:[%s225 + $0x120] sm:$0xff]
  %v263 = vld [vmem:[%s225 + $0x128] sm:$0xff]
  %v264 = vld [vmem:[%s225 + $0x130] sm:$0xff]
  %v265 = vld [vmem:[%s225 + $0x138] sm:$0xff]
  %v266 = vld [vmem:[%s225 + $0x140] sm:$0xff]
  %v267 = vld [vmem:[%s225 + $0x148] sm:$0xff]
  %v268 = vld [vmem:[%s225 + $0x150] sm:$0xff]
  %v269 = vmax.f32 %v182, %v226
  %v270 = vmax.f32 %v183, %v227
  %v271 = vmax.f32 %v184, %v228
  %v272 = vmax.f32 %v185, %v229
  %v273 = vmax.f32 %v186, %v230
  %v274 = vmax.f32 %v187, %v231
  %v275 = vmax.f32 %v188, %v232
  %v276 = vmax.f32 %v189, %v233
  %v277 = vmax.f32 %v190, %v234
  %v278 = vmax.f32 %v191, %v235
  %v279 = vmax.f32 %v192, %v236
  %v280 = vmax.f32 %v193, %v237
  %v281 = vmax.f32 %v194, %v238
  %v282 = vmax.f32 %v195, %v239
  %v283 = vmax.f32 %v196, %v240
  %v284 = vmax.f32 %v197, %v241
  %v285 = vmax.f32 %v198, %v242
  %v286 = vmax.f32 %v199, %v243
  %v287 = vmax.f32 %v200, %v244
  %v288 = vmax.f32 %v201, %v245
  %v289 = vmax.f32 %v202, %v246
  %v290 = vmax.f32 %v203, %v247
  %v291 = vmax.f32 %v204, %v248
  %v292 = vmax.f32 %v205, %v249
  %v293 = vmax.f32 %v206, %v250
  %v294 = vmax.f32 %v207, %v251
  %v295 = vmax.f32 %v208, %v252
  %v296 = vmax.f32 %v209, %v253
  %v297 = vmax.f32 %v210, %v254
  %v298 = vmax.f32 %v211, %v255
  %v299 = vmax.f32 %v212, %v256
  %v300 = vmax.f32 %v213, %v257
  %v301 = vmax.f32 %v214, %v258
  %v302 = vmax.f32 %v215, %v259
  %v303 = vmax.f32 %v216, %v260
  %v304 = vmax.f32 %v217, %v261
  %v305 = vmax.f32 %v218, %v262
  %v306 = vmax.f32 %v219, %v263
  %v307 = vmax.f32 %v220, %v264
  %v308 = vmax.f32 %v221, %v265
  %v309 = vmax.f32 %v222, %v266
  %v310 = vmax.f32 %v223, %v267
  %v311 = vmax.f32 %v224, %v268
  %s312 = scalar_lea.vmem %s0, 1376
  %v313 = vld [vmem:[%s312] sm:$0xff]
  %v314 = vld [vmem:[%s312 + $0x8] sm:$0xff]
  %v315 = vld [vmem:[%s312 + $0x10] sm:$0xff]
  %v316 = vld [vmem:[%s312 + $0x18] sm:$0xff]
  %v317 = vld [vmem:[%s312 + $0x20] sm:$0xff]
  %v318 = vld [vmem:[%s312 + $0x28] sm:$0xff]
  %v319 = vld [vmem:[%s312 + $0x30] sm:$0xff]
  %v320 = vld [vmem:[%s312 + $0x38] sm:$0xff]
  %v321 = vld [vmem:[%s312 + $0x40] sm:$0xff]
  %v322 = vld [vmem:[%s312 + $0x48] sm:$0xff]
  %v323 = vld [vmem:[%s312 + $0x50] sm:$0xff]
  %v324 = vld [vmem:[%s312 + $0x58] sm:$0xff]
  %v325 = vld [vmem:[%s312 + $0x60] sm:$0xff]
  %v326 = vld [vmem:[%s312 + $0x68] sm:$0xff]
  %v327 = vld [vmem:[%s312 + $0x70] sm:$0xff]
  %v328 = vld [vmem:[%s312 + $0x78] sm:$0xff]
  %v329 = vld [vmem:[%s312 + $0x80] sm:$0xff]
  %v330 = vld [vmem:[%s312 + $0x88] sm:$0xff]
  %v331 = vld [vmem:[%s312 + $0x90] sm:$0xff]
  %v332 = vld [vmem:[%s312 + $0x98] sm:$0xff]
  %v333 = vld [vmem:[%s312 + $0xa0] sm:$0xff]
  %v334 = vld [vmem:[%s312 + $0xa8] sm:$0xff]
  %v335 = vld [vmem:[%s312 + $0xb0] sm:$0xff]
  %v336 = vld [vmem:[%s312 + $0xb8] sm:$0xff]
  %v337 = vld [vmem:[%s312 + $0xc0] sm:$0xff]
  %v338 = vld [vmem:[%s312 + $0xc8] sm:$0xff]
  %v339 = vld [vmem:[%s312 + $0xd0] sm:$0xff]
  %v340 = vld [vmem:[%s312 + $0xd8] sm:$0xff]
  %v341 = vld [vmem:[%s312 + $0xe0] sm:$0xff]
  %v342 = vld [vmem:[%s312 + $0xe8] sm:$0xff]
  %v343 = vld [vmem:[%s312 + $0xf0] sm:$0xff]
  %v344 = vld [vmem:[%s312 + $0xf8] sm:$0xff]
  %v345 = vld [vmem:[%s312 + $0x100] sm:$0xff]
  %v346 = vld [vmem:[%s312 + $0x108] sm:$0xff]
  %v347 = vld [vmem:[%s312 + $0x110] sm:$0xff]
  %v348 = vld [vmem:[%s312 + $0x118] sm:$0xff]
  %v349 = vld [vmem:[%s312 + $0x120] sm:$0xff]
  %v350 = vld [vmem:[%s312 + $0x128] sm:$0xff]
  %v351 = vld [vmem:[%s312 + $0x130] sm:$0xff]
  %v352 = vld [vmem:[%s312 + $0x138] sm:$0xff]
  %v353 = vld [vmem:[%s312 + $0x140] sm:$0xff]
  %v354 = vld [vmem:[%s312 + $0x148] sm:$0xff]
  %v355 = vld [vmem:[%s312 + $0x150] sm:$0xff]
  %v356 = vmax.f32 %v269, %v313
  %v357 = vmax.f32 %v270, %v314
  %v358 = vmax.f32 %v271, %v315
  %v359 = vmax.f32 %v272, %v316
  %v360 = vmax.f32 %v273, %v317
  %v361 = vmax.f32 %v274, %v318
  %v362 = vmax.f32 %v275, %v319
  %v363 = vmax.f32 %v276, %v320
  %v364 = vmax.f32 %v277, %v321
  %v365 = vmax.f32 %v278, %v322
  %v366 = vmax.f32 %v279, %v323
  %v367 = vmax.f32 %v280, %v324
  %v368 = vmax.f32 %v281, %v325
  %v369 = vmax.f32 %v282, %v326
  %v370 = vmax.f32 %v283, %v327
  %v371 = vmax.f32 %v284, %v328
  %v372 = vmax.f32 %v285, %v329
  %v373 = vmax.f32 %v286, %v330
  %v374 = vmax.f32 %v287, %v331
  %v375 = vmax.f32 %v288, %v332
  %v376 = vmax.f32 %v289, %v333
  %v377 = vmax.f32 %v290, %v334
  %v378 = vmax.f32 %v291, %v335
  %v379 = vmax.f32 %v292, %v336
  %v380 = vmax.f32 %v293, %v337
  %v381 = vmax.f32 %v294, %v338
  %v382 = vmax.f32 %v295, %v339
  %v383 = vmax.f32 %v296, %v340
  %v384 = vmax.f32 %v297, %v341
  %v385 = vmax.f32 %v298, %v342
  %v386 = vmax.f32 %v299, %v343
  %v387 = vmax.f32 %v300, %v344
  %v388 = vmax.f32 %v301, %v345
  %v389 = vmax.f32 %v302, %v346
  %v390 = vmax.f32 %v303, %v347
  %v391 = vmax.f32 %v304, %v348
  %v392 = vmax.f32 %v305, %v349
  %v393 = vmax.f32 %v306, %v350
  %v394 = vmax.f32 %v307, %v351
  %v395 = vmax.f32 %v308, %v352
  %v396 = vmax.f32 %v309, %v353
  %v397 = vmax.f32 %v310, %v354
  %v398 = vmax.f32 %v311, %v355
  %s399 = scalar_lea.vmem %s0, 1720
  %v400 = vld [vmem:[%s399] sm:$0xff]
  %v401 = vld [vmem:[%s399 + $0x8] sm:$0xff]
  %v402 = vld [vmem:[%s399 + $0x10] sm:$0xff]
  %v403 = vld [vmem:[%s399 + $0x18] sm:$0xff]
  %v404 = vld [vmem:[%s399 + $0x20] sm:$0xff]
  %v405 = vld [vmem:[%s399 + $0x28] sm:$0xff]
  %v406 = vld [vmem:[%s399 + $0x30] sm:$0xff]
  %v407 = vld [vmem:[%s399 + $0x38] sm:$0xff]
  %v408 = vld [vmem:[%s399 + $0x40] sm:$0xff]
  %v409 = vld [vmem:[%s399 + $0x48] sm:$0xff]
  %v410 = vld [vmem:[%s399 + $0x50] sm:$0xff]
  %v411 = vld [vmem:[%s399 + $0x58] sm:$0xff]
  %v412 = vld [vmem:[%s399 + $0x60] sm:$0xff]
  %v413 = vld [vmem:[%s399 + $0x68] sm:$0xff]
  %v414 = vld [vmem:[%s399 + $0x70] sm:$0xff]
  %v415 = vld [vmem:[%s399 + $0x78] sm:$0xff]
  %v416 = vld [vmem:[%s399 + $0x80] sm:$0xff]
  %v417 = vld [vmem:[%s399 + $0x88] sm:$0xff]
  %v418 = vld [vmem:[%s399 + $0x90] sm:$0xff]
  %v419 = vld [vmem:[%s399 + $0x98] sm:$0xff]
  %v420 = vld [vmem:[%s399 + $0xa0] sm:$0xff]
  %v421 = vld [vmem:[%s399 + $0xa8] sm:$0xff]
  %v422 = vld [vmem:[%s399 + $0xb0] sm:$0xff]
  %v423 = vld [vmem:[%s399 + $0xb8] sm:$0xff]
  %v424 = vld [vmem:[%s399 + $0xc0] sm:$0xff]
  %v425 = vld [vmem:[%s399 + $0xc8] sm:$0xff]
  %v426 = vld [vmem:[%s399 + $0xd0] sm:$0xff]
  %v427 = vld [vmem:[%s399 + $0xd8] sm:$0xff]
  %v428 = vld [vmem:[%s399 + $0xe0] sm:$0xff]
  %v429 = vld [vmem:[%s399 + $0xe8] sm:$0xff]
  %v430 = vld [vmem:[%s399 + $0xf0] sm:$0xff]
  %v431 = vld [vmem:[%s399 + $0xf8] sm:$0xff]
  %v432 = vld [vmem:[%s399 + $0x100] sm:$0xff]
  %v433 = vld [vmem:[%s399 + $0x108] sm:$0xff]
  %v434 = vld [vmem:[%s399 + $0x110] sm:$0xff]
  %v435 = vld [vmem:[%s399 + $0x118] sm:$0xff]
  %v436 = vld [vmem:[%s399 + $0x120] sm:$0xff]
  %v437 = vld [vmem:[%s399 + $0x128] sm:$0xff]
  %v438 = vld [vmem:[%s399 + $0x130] sm:$0xff]
  %v439 = vld [vmem:[%s399 + $0x138] sm:$0xff]
  %v440 = vld [vmem:[%s399 + $0x140] sm:$0xff]
  %v441 = vld [vmem:[%s399 + $0x148] sm:$0xff]
  %v442 = vld [vmem:[%s399 + $0x150] sm:$0xff]
  %v443 = vmax.f32 %v356, %v400
  %v444 = vmax.f32 %v357, %v401
  %v445 = vmax.f32 %v358, %v402
  %v446 = vmax.f32 %v359, %v403
  %v447 = vmax.f32 %v360, %v404
  %v448 = vmax.f32 %v361, %v405
  %v449 = vmax.f32 %v362, %v406
  %v450 = vmax.f32 %v363, %v407
  %v451 = vmax.f32 %v364, %v408
  %v452 = vmax.f32 %v365, %v409
  %v453 = vmax.f32 %v366, %v410
  %v454 = vmax.f32 %v367, %v411
  %v455 = vmax.f32 %v368, %v412
  %v456 = vmax.f32 %v369, %v413
  %v457 = vmax.f32 %v370, %v414
  %v458 = vmax.f32 %v371, %v415
  %v459 = vmax.f32 %v372, %v416
  %v460 = vmax.f32 %v373, %v417
  %v461 = vmax.f32 %v374, %v418
  %v462 = vmax.f32 %v375, %v419
  %v463 = vmax.f32 %v376, %v420
  %v464 = vmax.f32 %v377, %v421
  %v465 = vmax.f32 %v378, %v422
  %v466 = vmax.f32 %v379, %v423
  %v467 = vmax.f32 %v380, %v424
  %v468 = vmax.f32 %v381, %v425
  %v469 = vmax.f32 %v382, %v426
  %v470 = vmax.f32 %v383, %v427
  %v471 = vmax.f32 %v384, %v428
  %v472 = vmax.f32 %v385, %v429
  %v473 = vmax.f32 %v386, %v430
  %v474 = vmax.f32 %v387, %v431
  %v475 = vmax.f32 %v388, %v432
  %v476 = vmax.f32 %v389, %v433
  %v477 = vmax.f32 %v390, %v434
  %v478 = vmax.f32 %v391, %v435
  %v479 = vmax.f32 %v392, %v436
  %v480 = vmax.f32 %v393, %v437
  %v481 = vmax.f32 %v394, %v438
  %v482 = vmax.f32 %v395, %v439
  %v483 = vmax.f32 %v396, %v440
  %v484 = vmax.f32 %v397, %v441
  %v485 = vmax.f32 %v398, %v442
  %s486 = scalar_lea.vmem %s0, 2064
  %v487 = vld [vmem:[%s486] sm:$0xff]
  %v488 = vld [vmem:[%s486 + $0x8] sm:$0xff]
  %v489 = vld [vmem:[%s486 + $0x10] sm:$0xff]
  %v490 = vld [vmem:[%s486 + $0x18] sm:$0xff]
  %v491 = vld [vmem:[%s486 + $0x20] sm:$0xff]
  %v492 = vld [vmem:[%s486 + $0x28] sm:$0xff]
  %v493 = vld [vmem:[%s486 + $0x30] sm:$0xff]
  %v494 = vld [vmem:[%s486 + $0x38] sm:$0xff]
  %v495 = vld [vmem:[%s486 + $0x40] sm:$0xff]
  %v496 = vld [vmem:[%s486 + $0x48] sm:$0xff]
  %v497 = vld [vmem:[%s486 + $0x50] sm:$0xff]
  %v498 = vld [vmem:[%s486 + $0x58] sm:$0xff]
  %v499 = vld [vmem:[%s486 + $0x60] sm:$0xff]
  %v500 = vld [vmem:[%s486 + $0x68] sm:$0xff]
  %v501 = vld [vmem:[%s486 + $0x70] sm:$0xff]
  %v502 = vld [vmem:[%s486 + $0x78] sm:$0xff]
  %v503 = vld [vmem:[%s486 + $0x80] sm:$0xff]
  %v504 = vld [vmem:[%s486 + $0x88] sm:$0xff]
  %v505 = vld [vmem:[%s486 + $0x90] sm:$0xff]
  %v506 = vld [vmem:[%s486 + $0x98] sm:$0xff]
  %v507 = vld [vmem:[%s486 + $0xa0] sm:$0xff]
  %v508 = vld [vmem:[%s486 + $0xa8] sm:$0xff]
  %v509 = vld [vmem:[%s486 + $0xb0] sm:$0xff]
  %v510 = vld [vmem:[%s486 + $0xb8] sm:$0xff]
  %v511 = vld [vmem:[%s486 + $0xc0] sm:$0xff]
  %v512 = vld [vmem:[%s486 + $0xc8] sm:$0xff]
  %v513 = vld [vmem:[%s486 + $0xd0] sm:$0xff]
  %v514 = vld [vmem:[%s486 + $0xd8] sm:$0xff]
  %v515 = vld [vmem:[%s486 + $0xe0] sm:$0xff]
  %v516 = vld [vmem:[%s486 + $0xe8] sm:$0xff]
  %v517 = vld [vmem:[%s486 + $0xf0] sm:$0xff]
  %v518 = vld [vmem:[%s486 + $0xf8] sm:$0xff]
  %v519 = vld [vmem:[%s486 + $0x100] sm:$0xff]
  %v520 = vld [vmem:[%s486 + $0x108] sm:$0xff]
  %v521 = vld [vmem:[%s486 + $0x110] sm:$0xff]
  %v522 = vld [vmem:[%s486 + $0x118] sm:$0xff]
  %v523 = vld [vmem:[%s486 + $0x120] sm:$0xff]
  %v524 = vld [vmem:[%s486 + $0x128] sm:$0xff]
  %v525 = vld [vmem:[%s486 + $0x130] sm:$0xff]
  %v526 = vld [vmem:[%s486 + $0x138] sm:$0xff]
  %v527 = vld [vmem:[%s486 + $0x140] sm:$0xff]
  %v528 = vld [vmem:[%s486 + $0x148] sm:$0xff]
  %v529 = vld [vmem:[%s486 + $0x150] sm:$0xff]
  %v530 = vmax.f32 %v443, %v487
  %v531 = vmax.f32 %v444, %v488
  %v532 = vmax.f32 %v445, %v489
  %v533 = vmax.f32 %v446, %v490
  %v534 = vmax.f32 %v447, %v491
  %v535 = vmax.f32 %v448, %v492
  %v536 = vmax.f32 %v449, %v493
  %v537 = vmax.f32 %v450, %v494
  %v538 = vmax.f32 %v451, %v495
  %v539 = vmax.f32 %v452, %v496
  %v540 = vmax.f32 %v453, %v497
  %v541 = vmax.f32 %v454, %v498
  %v542 = vmax.f32 %v455, %v499
  %v543 = vmax.f32 %v456, %v500
  %v544 = vmax.f32 %v457, %v501
  %v545 = vmax.f32 %v458, %v502
  %v546 = vmax.f32 %v459, %v503
  %v547 = vmax.f32 %v460, %v504
  %v548 = vmax.f32 %v461, %v505
  %v549 = vmax.f32 %v462, %v506
  %v550 = vmax.f32 %v463, %v507
  %v551 = vmax.f32 %v464, %v508
  %v552 = vmax.f32 %v465, %v509
  %v553 = vmax.f32 %v466, %v510
  %v554 = vmax.f32 %v467, %v511
  %v555 = vmax.f32 %v468, %v512
  %v556 = vmax.f32 %v469, %v513
  %v557 = vmax.f32 %v470, %v514
  %v558 = vmax.f32 %v471, %v515
  %v559 = vmax.f32 %v472, %v516
  %v560 = vmax.f32 %v473, %v517
  %v561 = vmax.f32 %v474, %v518
  %v562 = vmax.f32 %v475, %v519
  %v563 = vmax.f32 %v476, %v520
  %v564 = vmax.f32 %v477, %v521
  %v565 = vmax.f32 %v478, %v522
  %v566 = vmax.f32 %v479, %v523
  %v567 = vmax.f32 %v480, %v524
  %v568 = vmax.f32 %v481, %v525
  %v569 = vmax.f32 %v482, %v526
  %v570 = vmax.f32 %v483, %v527
  %v571 = vmax.f32 %v484, %v528
  %v572 = vmax.f32 %v485, %v529
  %s573 = scalar_lea.vmem %s0, 2408
  %v574 = vld [vmem:[%s573] sm:$0xff]
  %v575 = vld [vmem:[%s573 + $0x8] sm:$0xff]
  %v576 = vld [vmem:[%s573 + $0x10] sm:$0xff]
  %v577 = vld [vmem:[%s573 + $0x18] sm:$0xff]
  %v578 = vld [vmem:[%s573 + $0x20] sm:$0xff]
  %v579 = vld [vmem:[%s573 + $0x28] sm:$0xff]
  %v580 = vld [vmem:[%s573 + $0x30] sm:$0xff]
  %v581 = vld [vmem:[%s573 + $0x38] sm:$0xff]
  %v582 = vld [vmem:[%s573 + $0x40] sm:$0xff]
  %v583 = vld [vmem:[%s573 + $0x48] sm:$0xff]
  %v584 = vld [vmem:[%s573 + $0x50] sm:$0xff]
  %v585 = vld [vmem:[%s573 + $0x58] sm:$0xff]
  %v586 = vld [vmem:[%s573 + $0x60] sm:$0xff]
  %v587 = vld [vmem:[%s573 + $0x68] sm:$0xff]
  %v588 = vld [vmem:[%s573 + $0x70] sm:$0xff]
  %v589 = vld [vmem:[%s573 + $0x78] sm:$0xff]
  %v590 = vld [vmem:[%s573 + $0x80] sm:$0xff]
  %v591 = vld [vmem:[%s573 + $0x88] sm:$0xff]
  %v592 = vld [vmem:[%s573 + $0x90] sm:$0xff]
  %v593 = vld [vmem:[%s573 + $0x98] sm:$0xff]
  %v594 = vld [vmem:[%s573 + $0xa0] sm:$0xff]
  %v595 = vld [vmem:[%s573 + $0xa8] sm:$0xff]
  %v596 = vld [vmem:[%s573 + $0xb0] sm:$0xff]
  %v597 = vld [vmem:[%s573 + $0xb8] sm:$0xff]
  %v598 = vld [vmem:[%s573 + $0xc0] sm:$0xff]
  %v599 = vld [vmem:[%s573 + $0xc8] sm:$0xff]
  %v600 = vld [vmem:[%s573 + $0xd0] sm:$0xff]
  %v601 = vld [vmem:[%s573 + $0xd8] sm:$0xff]
  %v602 = vld [vmem:[%s573 + $0xe0] sm:$0xff]
  %v603 = vld [vmem:[%s573 + $0xe8] sm:$0xff]
  %v604 = vld [vmem:[%s573 + $0xf0] sm:$0xff]
  %v605 = vld [vmem:[%s573 + $0xf8] sm:$0xff]
  %v606 = vld [vmem:[%s573 + $0x100] sm:$0xff]
  %v607 = vld [vmem:[%s573 + $0x108] sm:$0xff]
  %v608 = vld [vmem:[%s573 + $0x110] sm:$0xff]
  %v609 = vld [vmem:[%s573 + $0x118] sm:$0xff]
  %v610 = vld [vmem:[%s573 + $0x120] sm:$0xff]
  %v611 = vld [vmem:[%s573 + $0x128] sm:$0xff]
  %v612 = vld [vmem:[%s573 + $0x130] sm:$0xff]
  %v613 = vld [vmem:[%s573 + $0x138] sm:$0xff]
  %v614 = vld [vmem:[%s573 + $0x140] sm:$0xff]
  %v615 = vld [vmem:[%s573 + $0x148] sm:$0xff]
  %v616 = vld [vmem:[%s573 + $0x150] sm:$0xff]
  %v617 = vmax.f32 %v530, %v574
  %v618 = vmax.f32 %v531, %v575
  %v619 = vmax.f32 %v532, %v576
  %v620 = vmax.f32 %v533, %v577
  %v621 = vmax.f32 %v534, %v578
  %v622 = vmax.f32 %v535, %v579
  %v623 = vmax.f32 %v536, %v580
  %v624 = vmax.f32 %v537, %v581
  %v625 = vmax.f32 %v538, %v582
  %v626 = vmax.f32 %v539, %v583
  %v627 = vmax.f32 %v540, %v584
  %v628 = vmax.f32 %v541, %v585
  %v629 = vmax.f32 %v542, %v586
  %v630 = vmax.f32 %v543, %v587
  %v631 = vmax.f32 %v544, %v588
  %v632 = vmax.f32 %v545, %v589
  %v633 = vmax.f32 %v546, %v590
  %v634 = vmax.f32 %v547, %v591
  %v635 = vmax.f32 %v548, %v592
  %v636 = vmax.f32 %v549, %v593
  %v637 = vmax.f32 %v550, %v594
  %v638 = vmax.f32 %v551, %v595
  %v639 = vmax.f32 %v552, %v596
  %v640 = vmax.f32 %v553, %v597
  %v641 = vmax.f32 %v554, %v598
  %v642 = vmax.f32 %v555, %v599
  %v643 = vmax.f32 %v556, %v600
  %v644 = vmax.f32 %v557, %v601
  %v645 = vmax.f32 %v558, %v602
  %v646 = vmax.f32 %v559, %v603
  %v647 = vmax.f32 %v560, %v604
  %v648 = vmax.f32 %v561, %v605
  %v649 = vmax.f32 %v562, %v606
  %v650 = vmax.f32 %v563, %v607
  %v651 = vmax.f32 %v564, %v608
  %v652 = vmax.f32 %v565, %v609
  %v653 = vmax.f32 %v566, %v610
  %v654 = vmax.f32 %v567, %v611
  %v655 = vmax.f32 %v568, %v612
  %v656 = vmax.f32 %v569, %v613
  %v657 = vmax.f32 %v570, %v614
  %v658 = vmax.f32 %v571, %v615
  %v659 = vmax.f32 %v572, %v616
  %s660 = scalar_lea.vmem %s0, 2752
  %v661 = vld [vmem:[%s660] sm:$0xff]
  %v662 = vld [vmem:[%s660 + $0x8] sm:$0xff]
  %v663 = vld [vmem:[%s660 + $0x10] sm:$0xff]
  %v664 = vld [vmem:[%s660 + $0x18] sm:$0xff]
  %v665 = vld [vmem:[%s660 + $0x20] sm:$0xff]
  %v666 = vld [vmem:[%s660 + $0x28] sm:$0xff]
  %v667 = vld [vmem:[%s660 + $0x30] sm:$0xff]
  %v668 = vld [vmem:[%s660 + $0x38] sm:$0xff]
  %v669 = vld [vmem:[%s660 + $0x40] sm:$0xff]
  %v670 = vld [vmem:[%s660 + $0x48] sm:$0xff]
  %v671 = vld [vmem:[%s660 + $0x50] sm:$0xff]
  %v672 = vld [vmem:[%s660 + $0x58] sm:$0xff]
  %v673 = vld [vmem:[%s660 + $0x60] sm:$0xff]
  %v674 = vld [vmem:[%s660 + $0x68] sm:$0xff]
  %v675 = vld [vmem:[%s660 + $0x70] sm:$0xff]
  %v676 = vld [vmem:[%s660 + $0x78] sm:$0xff]
  %v677 = vld [vmem:[%s660 + $0x80] sm:$0xff]
  %v678 = vld [vmem:[%s660 + $0x88] sm:$0xff]
  %v679 = vld [vmem:[%s660 + $0x90] sm:$0xff]
  %v680 = vld [vmem:[%s660 + $0x98] sm:$0xff]
  %v681 = vld [vmem:[%s660 + $0xa0] sm:$0xff]
  %v682 = vld [vmem:[%s660 + $0xa8] sm:$0xff]
  %v683 = vld [vmem:[%s660 + $0xb0] sm:$0xff]
  %v684 = vld [vmem:[%s660 + $0xb8] sm:$0xff]
  %v685 = vld [vmem:[%s660 + $0xc0] sm:$0xff]
  %v686 = vld [vmem:[%s660 + $0xc8] sm:$0xff]
  %v687 = vld [vmem:[%s660 + $0xd0] sm:$0xff]
  %v688 = vld [vmem:[%s660 + $0xd8] sm:$0xff]
  %v689 = vld [vmem:[%s660 + $0xe0] sm:$0xff]
  %v690 = vld [vmem:[%s660 + $0xe8] sm:$0xff]
  %v691 = vld [vmem:[%s660 + $0xf0] sm:$0xff]
  %v692 = vld [vmem:[%s660 + $0xf8] sm:$0xff]
  %v693 = vld [vmem:[%s660 + $0x100] sm:$0xff]
  %v694 = vld [vmem:[%s660 + $0x108] sm:$0xff]
  %v695 = vld [vmem:[%s660 + $0x110] sm:$0xff]
  %v696 = vld [vmem:[%s660 + $0x118] sm:$0xff]
  %v697 = vld [vmem:[%s660 + $0x120] sm:$0xff]
  %v698 = vld [vmem:[%s660 + $0x128] sm:$0xff]
  %v699 = vld [vmem:[%s660 + $0x130] sm:$0xff]
  %v700 = vld [vmem:[%s660 + $0x138] sm:$0xff]
  %v701 = vld [vmem:[%s660 + $0x140] sm:$0xff]
  %v702 = vld [vmem:[%s660 + $0x148] sm:$0xff]
  %v703 = vld [vmem:[%s660 + $0x150] sm:$0xff]
  %v704 = vmax.f32 %v617, %v661
  %v705 = vmax.f32 %v618, %v662
  %v706 = vmax.f32 %v619, %v663
  %v707 = vmax.f32 %v620, %v664
  %v708 = vmax.f32 %v621, %v665
  %v709 = vmax.f32 %v622, %v666
  %v710 = vmax.f32 %v623, %v667
  %v711 = vmax.f32 %v624, %v668
  %v712 = vmax.f32 %v625, %v669
  %v713 = vmax.f32 %v626, %v670
  %v714 = vmax.f32 %v627, %v671
  %v715 = vmax.f32 %v628, %v672
  %v716 = vmax.f32 %v629, %v673
  %v717 = vmax.f32 %v630, %v674
  %v718 = vmax.f32 %v631, %v675
  %v719 = vmax.f32 %v632, %v676
  %v720 = vmax.f32 %v633, %v677
  %v721 = vmax.f32 %v634, %v678
  %v722 = vmax.f32 %v635, %v679
  %v723 = vmax.f32 %v636, %v680
  %v724 = vmax.f32 %v637, %v681
  %v725 = vmax.f32 %v638, %v682
  %v726 = vmax.f32 %v639, %v683
  %v727 = vmax.f32 %v640, %v684
  %v728 = vmax.f32 %v641, %v685
  %v729 = vmax.f32 %v642, %v686
  %v730 = vmax.f32 %v643, %v687
  %v731 = vmax.f32 %v644, %v688
  %v732 = vmax.f32 %v645, %v689
  %v733 = vmax.f32 %v646, %v690
  %v734 = vmax.f32 %v647, %v691
  %v735 = vmax.f32 %v648, %v692
  %v736 = vmax.f32 %v649, %v693
  %v737 = vmax.f32 %v650, %v694
  %v738 = vmax.f32 %v651, %v695
  %v739 = vmax.f32 %v652, %v696
  %v740 = vmax.f32 %v653, %v697
  %v741 = vmax.f32 %v654, %v698
  %v742 = vmax.f32 %v655, %v699
  %v743 = vmax.f32 %v656, %v700
  %v744 = vmax.f32 %v657, %v701
  %v745 = vmax.f32 %v658, %v702
  %v746 = vmax.f32 %v659, %v703
  %747 = vst [vmem:[%s1] sm:$0xff] %v704
  %748 = vst [vmem:[%s1 + $0x8] sm:$0xff] %v705
  %749 = vst [vmem:[%s1 + $0x10] sm:$0xff] %v706
  %750 = vst [vmem:[%s1 + $0x18] sm:$0xff] %v707
  %751 = vst [vmem:[%s1 + $0x20] sm:$0xff] %v708
  %752 = vst [vmem:[%s1 + $0x28] sm:$0xff] %v709
  %753 = vst [vmem:[%s1 + $0x30] sm:$0xff] %v710
  %754 = vst [vmem:[%s1 + $0x38] sm:$0xff] %v711
  %755 = vst [vmem:[%s1 + $0x40] sm:$0xff] %v712
  %756 = vst [vmem:[%s1 + $0x48] sm:$0xff] %v713
  %757 = vst [vmem:[%s1 + $0x50] sm:$0xff] %v714
  %758 = vst [vmem:[%s1 + $0x58] sm:$0xff] %v715
  %759 = vst [vmem:[%s1 + $0x60] sm:$0xff] %v716
  %760 = vst [vmem:[%s1 + $0x68] sm:$0xff] %v717
  %761 = vst [vmem:[%s1 + $0x70] sm:$0xff] %v718
  %762 = vst [vmem:[%s1 + $0x78] sm:$0xff] %v719
  %763 = vst [vmem:[%s1 + $0x80] sm:$0xff] %v720
  %764 = vst [vmem:[%s1 + $0x88] sm:$0xff] %v721
  %765 = vst [vmem:[%s1 + $0x90] sm:$0xff] %v722
  %766 = vst [vmem:[%s1 + $0x98] sm:$0xff] %v723
  %767 = vst [vmem:[%s1 + $0xa0] sm:$0xff] %v724
  %768 = vst [vmem:[%s1 + $0xa8] sm:$0xff] %v725
  %769 = vst [vmem:[%s1 + $0xb0] sm:$0xff] %v726
  %770 = vst [vmem:[%s1 + $0xb8] sm:$0xff] %v727
  %771 = vst [vmem:[%s1 + $0xc0] sm:$0xff] %v728
  %772 = vst [vmem:[%s1 + $0xc8] sm:$0xff] %v729
  %773 = vst [vmem:[%s1 + $0xd0] sm:$0xff] %v730
  %774 = vst [vmem:[%s1 + $0xd8] sm:$0xff] %v731
  %775 = vst [vmem:[%s1 + $0xe0] sm:$0xff] %v732
  %776 = vst [vmem:[%s1 + $0xe8] sm:$0xff] %v733
  %777 = vst [vmem:[%s1 + $0xf0] sm:$0xff] %v734
  %778 = vst [vmem:[%s1 + $0xf8] sm:$0xff] %v735
  %779 = vst [vmem:[%s1 + $0x100] sm:$0xff] %v736
  %780 = vst [vmem:[%s1 + $0x108] sm:$0xff] %v737
  %781 = vst [vmem:[%s1 + $0x110] sm:$0xff] %v738
  %782 = vst [vmem:[%s1 + $0x118] sm:$0xff] %v739
  %783 = vst [vmem:[%s1 + $0x120] sm:$0xff] %v740
  %784 = vst [vmem:[%s1 + $0x128] sm:$0xff] %v741
  %785 = vst [vmem:[%s1 + $0x130] sm:$0xff] %v742
  %786 = vst [vmem:[%s1 + $0x138] sm:$0xff] %v743
  %787 = vst [vmem:[%s1 + $0x140] sm:$0xff] %v744
  %788 = vst [vmem:[%s1 + $0x148] sm:$0xff] %v745
  %789 = vst [vmem:[%s1 + $0x150] sm:$0xff] %v746
  // Predicated region
  $region6: #{cnn_cifar_forward.6} parent=0 // pred_check
    _
  $region7: #{cnn_cifar_forward.6} parent=0 // pred_check_branch
    %791 = sbr.rel (0) target = $region9
  $region8: #{cnn_cifar_forward.6} parent=0 // pred_region
    _
  $region9: #{cnn_cifar_forward.6} parent=0 // pred_fallthru
    _
  // Predicated region
  $region10: #{cnn_cifar_forward.6} parent=0 // pred_check
    _
  $region11: #{cnn_cifar_forward.6} parent=0 // pred_check_branch
    %793 = sbr.rel (0) target = $region13
  $region12: #{cnn_cifar_forward.6} parent=0 // pred_region
    _
  $region13: #{cnn_cifar_forward.6} parent=0 // pred_fallthru
    _

// kernel: cnn_cifar_forward.7
$region0: #{cnn_cifar_forward.7}
  #allocation0 [shape = 'u32[]', space=smem, size = 0x4, offset = 0x4, fixed_abs, tag = 'smem constant byte address 0x4 - core index']
  #allocation1 [shape = 'u32[144,128]{1,0:T(1,128)}', space=vmem, size = 0x12000, scoped, tag = 'internal scratch']
  %s0 = inlined_call_operand.vmem [shape: bf16[168,1664], index: 0, kind: input, shape index: {}]
  %s1 = inlined_call_operand.vmem [shape: bf16[1664,128], index: 1, kind: input, shape index: {}]
  %s2 = inlined_call_operand.vmem [shape: f32[1,128], index: 2, kind: input, shape index: {}]
  %s3 = inlined_call_operand.vmem [shape: f32[168,128], index: 3, kind: output, shape index: {}]
  %s4 = sld [smem:[#allocation0]]
  $region22: #{cnn_cifar_forward.7} parent=0
    _
  %s6 = ssub.s32 1, %s4
  %s7 = scalar_select 0, %s6, %s4
  // Predicated region
  $region2: #{cnn_cifar_forward.7} parent=0 // pred_check
    _
  $region3: #{cnn_cifar_forward.7} parent=0 // pred_check_branch
    %9 = sbr.rel (0) target = $region5
  $region4: #{cnn_cifar_forward.7} parent=0 // pred_region
    _
  $region5: #{cnn_cifar_forward.7} parent=0 // pred_fallthru
    _
  // Predicated region
  $region6: #{cnn_cifar_forward.7} parent=0 // pred_check
    _
  $region7: #{cnn_cifar_forward.7} parent=0 // pred_check_branch
    %11 = sbr.rel (0) target = $region9
  $region8: #{cnn_cifar_forward.7} parent=0 // pred_region
    _
  $region9: #{cnn_cifar_forward.7} parent=0 // pred_fallthru
    _
  // Predicated region
  $region10: #{cnn_cifar_forward.7} parent=0 // pred_check
    _
  $region11: #{cnn_cifar_forward.7} parent=0 // pred_check_branch
    %13 = sbr.rel (0) target = $region13
  $region12: #{cnn_cifar_forward.7} parent=0 // pred_region
    _
  $region13: #{cnn_cifar_forward.7} parent=0 // pred_fallthru
    _
  %v15 = vld [vmem:[%s0] sm:$0xff]
  %v16 = vld [vmem:[%s0 + $0x8] sm:$0xff]
  %v17 = vld [vmem:[%s0 + $0x10] sm:$0xff]
  %v18 = vld [vmem:[%s0 + $0x18] sm:$0xff]
  %v19 = vld [vmem:[%s0 + $0x20] sm:$0xff]
  %v20 = vld [vmem:[%s0 + $0x28] sm:$0xff]
  %v21 = vld [vmem:[%s0 + $0x30] sm:$0xf]
  %v22 = vld [vmem:[%s0 + $0x34] sm:$0xff]
  %v23 = vld [vmem:[%s0 + $0x3c] sm:$0xff]
  %v24 = vld [vmem:[%s0 + $0x44] sm:$0xff]
  %v25 = vld [vmem:[%s0 + $0x4c] sm:$0xff]
  %v26 = vld [vmem:[%s0 + $0x54] sm:$0xff]
  %v27 = vld [vmem:[%s0 + $0x5c] sm:$0xff]
  %v28 = vld [vmem:[%s0 + $0x64] sm:$0xf]
  %v29 = vld [vmem:[%s0 + $0x68] sm:$0xff]
  %v30 = vld [vmem:[%s0 + $0x70] sm:$0xff]
  %v31 = vld [vmem:[%s0 + $0x78] sm:$0xff]
  %v32 = vld [vmem:[%s0 + $0x80] sm:$0xff]
  %v33 = vld [vmem:[%s0 + $0x88] sm:$0xff]
  %v34 = vld [vmem:[%s0 + $0x90] sm:$0xff]
  %v35 = vld [vmem:[%s0 + $0x98] sm:$0xf]
  %v36 = vld [vmem:[%s0 + $0x9c] sm:$0xff]
  %v37 = vld [vmem:[%s0 + $0xa4] sm:$0xff]
  %v38 = vld [vmem:[%s0 + $0xac] sm:$0xff]
  %v39 = vld [vmem:[%s0 + $0xb4] sm:$0xff]
  %v40 = vld [vmem:[%s0 + $0xbc] sm:$0xff]
  %v41 = vld [vmem:[%s0 + $0xc4] sm:$0xff]
  %v42 = vld [vmem:[%s0 + $0xcc] sm:$0xf]
  %v43 = vld [vmem:[%s0 + $0xd0] sm:$0xff]
  %v44 = vld [vmem:[%s0 + $0xd8] sm:$0xff]
  %v45 = vld [vmem:[%s0 + $0xe0] sm:$0xff]
  %v46 = vld [vmem:[%s0 + $0xe8] sm:$0xff]
  %v47 = vld [vmem:[%s0 + $0xf0] sm:$0xff]
  %v48 = vld [vmem:[%s0 + $0xf8] sm:$0xff]
  %v49 = vld [vmem:[%s0 + $0x100] sm:$0xf]
  %v50 = vld [vmem:[%s0 + $0x104] sm:$0xff]
  %v51 = vld [vmem:[%s0 + $0x10c] sm:$0xff]
  %v52 = vld [vmem:[%s0 + $0x114] sm:$0xff]
  %v53 = vld [vmem:[%s0 + $0x11c] sm:$0xff]
  %v54 = vld [vmem:[%s0 + $0x124] sm:$0xff]
  %v55 = vld [vmem:[%s0 + $0x12c] sm:$0xff]
  %v56 = vld [vmem:[%s0 + $0x134] sm:$0xf]
  %v57 = vld [vmem:[%s0 + $0x138] sm:$0xff]
  %v58 = vld [vmem:[%s0 + $0x140] sm:$0xff]
  %v59 = vld [vmem:[%s0 + $0x148] sm:$0xff]
  %v60 = vld [vmem:[%s0 + $0x150] sm:$0xff]
  %v61 = vld [vmem:[%s0 + $0x158] sm:$0xff]
  %v62 = vld [vmem:[%s0 + $0x160] sm:$0xff]
  %v63 = vld [vmem:[%s0 + $0x168] sm:$0xf]
  %v64 = vld [vmem:[%s0 + $0x16c] sm:$0xff]
  %v65 = vld [vmem:[%s0 + $0x174] sm:$0xff]
  %v66 = vld [vmem:[%s0 + $0x17c] sm:$0xff]
  %v67 = vld [vmem:[%s0 + $0x184] sm:$0xff]
  %v68 = vld [vmem:[%s0 + $0x18c] sm:$0xff]
  %v69 = vld [vmem:[%s0 + $0x194] sm:$0xff]
  %v70 = vld [vmem:[%s0 + $0x19c] sm:$0xf]
  %v71 = vld [vmem:[%s0 + $0x1a0] sm:$0xff]
  %v72 = vld [vmem:[%s0 + $0x1a8] sm:$0xff]
  %v73 = vld [vmem:[%s0 + $0x1b0] sm:$0xff]
  %v74 = vld [vmem:[%s0 + $0x1b8] sm:$0xff]
  %v75 = vld [vmem:[%s0 + $0x1c0] sm:$0xff]
  %v76 = vld [vmem:[%s0 + $0x1c8] sm:$0xff]
  %v77 = vld [vmem:[%s0 + $0x1d0] sm:$0xf]
  %v78 = vld [vmem:[%s0 + $0x1d4] sm:$0xff]
  %v79 = vld [vmem:[%s0 + $0x1dc] sm:$0xff]
  %v80 = vld [vmem:[%s0 + $0x1e4] sm:$0xff]
  %v81 = vld [vmem:[%s0 + $0x1ec] sm:$0xff]
  %v82 = vld [vmem:[%s0 + $0x1f4] sm:$0xff]
  %v83 = vld [vmem:[%s0 + $0x1fc] sm:$0xff]
  %v84 = vld [vmem:[%s0 + $0x204] sm:$0xf]
  %v85 = vld [vmem:[%s0 + $0x208] sm:$0xff]
  %v86 = vld [vmem:[%s0 + $0x210] sm:$0xff]
  %v87 = vld [vmem:[%s0 + $0x218] sm:$0xff]
  %v88 = vld [vmem:[%s0 + $0x220] sm:$0xff]
  %v89 = vld [vmem:[%s0 + $0x228] sm:$0xff]
  %v90 = vld [vmem:[%s0 + $0x230] sm:$0xff]
  %v91 = vld [vmem:[%s0 + $0x238] sm:$0xf]
  %v92 = vld [vmem:[%s0 + $0x23c] sm:$0xff]
  %v93 = vld [vmem:[%s0 + $0x244] sm:$0xff]
  %v94 = vld [vmem:[%s0 + $0x24c] sm:$0xff]
  %v95 = vld [vmem:[%s0 + $0x254] sm:$0xff]
  %v96 = vld [vmem:[%s0 + $0x25c] sm:$0xff]
  %v97 = vld [vmem:[%s0 + $0x264] sm:$0xff]
  %v98 = vld [vmem:[%s0 + $0x26c] sm:$0xf]
  %v99 = vld [vmem:[%s0 + $0x270] sm:$0xff]
  %v100 = vld [vmem:[%s0 + $0x278] sm:$0xff]
  %v101 = vld [vmem:[%s0 + $0x280] sm:$0xff]
  %v102 = vld [vmem:[%s0 + $0x288] sm:$0xff]
  %v103 = vld [vmem:[%s0 + $0x290] sm:$0xff]
  %v104 = vld [vmem:[%s0 + $0x298] sm:$0xff]
  %v105 = vld [vmem:[%s0 + $0x2a0] sm:$0xf]
  %v106 = vld [vmem:[%s0 + $0x2a4] sm:$0xff]
  %v107 = vld [vmem:[%s0 + $0x2ac] sm:$0xff]
  %v108 = vld [vmem:[%s0 + $0x2b4] sm:$0xff]
  %v109 = vld [vmem:[%s0 + $0x2bc] sm:$0xff]
  %v110 = vld [vmem:[%s0 + $0x2c4] sm:$0xff]
  %v111 = vld [vmem:[%s0 + $0x2cc] sm:$0xff]
  %v112 = vld [vmem:[%s0 + $0x2d4] sm:$0xf]
  %v113 = vld [vmem:[%s0 + $0x2d8] sm:$0xff]
  %v114 = vld [vmem:[%s0 + $0x2e0] sm:$0xff]
  %v115 = vld [vmem:[%s0 + $0x2e8] sm:$0xff]
  %v116 = vld [vmem:[%s0 + $0x2f0] sm:$0xff]
  %v117 = vld [vmem:[%s0 + $0x2f8] sm:$0xff]
  %v118 = vld [vmem:[%s0 + $0x300] sm:$0xff]
  %v119 = vld [vmem:[%s0 + $0x308] sm:$0xf]
  %v120 = vld [vmem:[%s0 + $0x30c] sm:$0xff]
  %v121 = vld [vmem:[%s0 + $0x314] sm:$0xff]
  %v122 = vld [vmem:[%s0 + $0x31c] sm:$0xff]
  %v123 = vld [vmem:[%s0 + $0x324] sm:$0xff]
  %v124 = vld [vmem:[%s0 + $0x32c] sm:$0xff]
  %v125 = vld [vmem:[%s0 + $0x334] sm:$0xff]
  %v126 = vld [vmem:[%s0 + $0x33c] sm:$0xf]
  %v127 = vld [vmem:[%s0 + $0x340] sm:$0xff]
  %v128 = vld [vmem:[%s0 + $0x348] sm:$0xff]
  %v129 = vld [vmem:[%s0 + $0x350] sm:$0xff]
  %v130 = vld [vmem:[%s0 + $0x358] sm:$0xff]
  %v131 = vld [vmem:[%s0 + $0x360] sm:$0xff]
  %v132 = vld [vmem:[%s0 + $0x368] sm:$0xff]
  %v133 = vld [vmem:[%s0 + $0x370] sm:$0xf]
  %v134 = vld [vmem:[%s0 + $0x374] sm:$0xff]
  %v135 = vld [vmem:[%s0 + $0x37c] sm:$0xff]
  %v136 = vld [vmem:[%s0 + $0x384] sm:$0xff]
  %v137 = vld [vmem:[%s0 + $0x38c] sm:$0xff]
  %v138 = vld [vmem:[%s0 + $0x394] sm:$0xff]
  %v139 = vld [vmem:[%s0 + $0x39c] sm:$0xff]
  %v140 = vld [vmem:[%s0 + $0x3a4] sm:$0xf]
  %v141 = vld [vmem:[%s0 + $0x3a8] sm:$0xff]
  %v142 = vld [vmem:[%s0 + $0x3b0] sm:$0xff]
  %v143 = vld [vmem:[%s0 + $0x3b8] sm:$0xff]
  %v144 = vld [vmem:[%s0 + $0x3c0] sm:$0xff]
  %v145 = vld [vmem:[%s0 + $0x3c8] sm:$0xff]
  %v146 = vld [vmem:[%s0 + $0x3d0] sm:$0xff]
  %v147 = vld [vmem:[%s0 + $0x3d8] sm:$0xf]
  %v148 = vld [vmem:[%s0 + $0x3dc] sm:$0xff]
  %v149 = vld [vmem:[%s0 + $0x3e4] sm:$0xff]
  %v150 = vld [vmem:[%s0 + $0x3ec] sm:$0xff]
  %v151 = vld [vmem:[%s0 + $0x3f4] sm:$0xff]
  %v152 = vld [vmem:[%s0 + $0x3fc] sm:$0xff]
  %v153 = vld [vmem:[%s0 + $0x404] sm:$0xff]
  %v154 = vld [vmem:[%s0 + $0x40c] sm:$0xf]
  %v155 = vld [vmem:[%s0 + $0x410] sm:$0xff]
  %v156 = vld [vmem:[%s0 + $0x418] sm:$0xff]
  %v157 = vld [vmem:[%s0 + $0x420] sm:$0xff]
  %v158 = vld [vmem:[%s0 + $0x428] sm:$0xff]
  %v159 = vld [vmem:[%s0 + $0x430] sm:$0xff]
  %v160 = vld [vmem:[%s0 + $0x438] sm:$0xff]
  %v161 = vld [vmem:[%s0 + $0x440] sm:$0xf]
  %v162 = vld [vmem:[%s1] sm:$0xf]
  %v163 = vld [vmem:[%s1 + $0x4] sm:$0xf]
  %v164 = vld [vmem:[%s1 + $0x8] sm:$0xf]
  %v165 = vld [vmem:[%s1 + $0xc] sm:$0xf]
  %v166 = vld [vmem:[%s1 + $0x10] sm:$0xf]
  %v167 = vld [vmem:[%s1 + $0x14] sm:$0xf]
  %v168 = vld [vmem:[%s1 + $0x18] sm:$0xf]
  %v169 = vld [vmem:[%s1 + $0x1c] sm:$0xf]
  %v170 = vld [vmem:[%s1 + $0x20] sm:$0xf]
  %v171 = vld [vmem:[%s1 + $0x24] sm:$0xf]
  %v172 = vld [vmem:[%s1 + $0x28] sm:$0xf]
  %v173 = vld [vmem:[%s1 + $0x2c] sm:$0xf]
  %v174 = vld [vmem:[%s1 + $0x30] sm:$0xf]
  %v175 = vld [vmem:[%s1 + $0x34] sm:$0xf]
  %v176 = vld [vmem:[%s1 + $0x38] sm:$0xf]
  %v177 = vld [vmem:[%s1 + $0x3c] sm:$0xf]
  %v178 = vld [vmem:[%s1 + $0x40] sm:$0xf]
  %v179 = vld [vmem:[%s1 + $0x44] sm:$0xf]
  %v180 = vld [vmem:[%s1 + $0x48] sm:$0xf]
  %v181 = vld [vmem:[%s1 + $0x4c] sm:$0xf]
  %v182 = vld [vmem:[%s1 + $0x50] sm:$0xf]
  %v183 = vld [vmem:[%s1 + $0x54] sm:$0xf]
  %v184 = vld [vmem:[%s1 + $0x58] sm:$0xf]
  %v185 = vld [vmem:[%s1 + $0x5c] sm:$0xf]
  %v186 = vld [vmem:[%s1 + $0x60] sm:$0xf]
  %v187 = vld [vmem:[%s1 + $0x64] sm:$0xf]
  %v188 = vld [vmem:[%s1 + $0x68] sm:$0xf]
  %v189 = vld [vmem:[%s1 + $0x6c] sm:$0xf]
  %v190 = vld [vmem:[%s1 + $0x70] sm:$0xf]
  %v191 = vld [vmem:[%s1 + $0x74] sm:$0xf]
  %v192 = vld [vmem:[%s1 + $0x78] sm:$0xf]
  %v193 = vld [vmem:[%s1 + $0x7c] sm:$0xf]
  %v194 = vld [vmem:[%s1 + $0x80] sm:$0xf]
  %v195 = vld [vmem:[%s1 + $0x84] sm:$0xf]
  %v196 = vld [vmem:[%s1 + $0x88] sm:$0xf]
  %v197 = vld [vmem:[%s1 + $0x8c] sm:$0xf]
  %v198 = vld [vmem:[%s1 + $0x90] sm:$0xf]
  %v199 = vld [vmem:[%s1 + $0x94] sm:$0xf]
  %v200 = vld [vmem:[%s1 + $0x98] sm:$0xf]
  %v201 = vld [vmem:[%s1 + $0x9c] sm:$0xf]
  %v202 = vld [vmem:[%s1 + $0xa0] sm:$0xf]
  %v203 = vld [vmem:[%s1 + $0xa4] sm:$0xf]
  %v204 = vld [vmem:[%s1 + $0xa8] sm:$0xf]
  %v205 = vld [vmem:[%s1 + $0xac] sm:$0xf]
  %v206 = vld [vmem:[%s1 + $0xb0] sm:$0xf]
  %v207 = vld [vmem:[%s1 + $0xb4] sm:$0xf]
  %v208 = vld [vmem:[%s1 + $0xb8] sm:$0xf]
  %v209 = vld [vmem:[%s1 + $0xbc] sm:$0xf]
  %v210 = vld [vmem:[%s1 + $0xc0] sm:$0xf]
  %v211 = vld [vmem:[%s1 + $0xc4] sm:$0xf]
  %v212 = vld [vmem:[%s1 + $0xc8] sm:$0xf]
  %v213 = vld [vmem:[%s1 + $0xcc] sm:$0xf]
  %v214 = vld [vmem:[%s1 + $0xd0] sm:$0xf]
  %v215 = vld [vmem:[%s1 + $0xd4] sm:$0xf]
  %v216 = vld [vmem:[%s1 + $0xd8] sm:$0xf]
  %v217 = vld [vmem:[%s1 + $0xdc] sm:$0xf]
  %v218 = vld [vmem:[%s1 + $0xe0] sm:$0xf]
  %v219 = vld [vmem:[%s1 + $0xe4] sm:$0xf]
  %v220 = vld [vmem:[%s1 + $0xe8] sm:$0xf]
  %v221 = vld [vmem:[%s1 + $0xec] sm:$0xf]
  %v222 = vld [vmem:[%s1 + $0xf0] sm:$0xf]
  %v223 = vld [vmem:[%s1 + $0xf4] sm:$0xf]
  %v224 = vld [vmem:[%s1 + $0xf8] sm:$0xf]
  %v225 = vld [vmem:[%s1 + $0xfc] sm:$0xf]
  %v226 = vld [vmem:[%s1 + $0x100] sm:$0xf]
  %v227 = vld [vmem:[%s1 + $0x104] sm:$0xf]
  %v228 = vld [vmem:[%s1 + $0x108] sm:$0xf]
  %v229 = vld [vmem:[%s1 + $0x10c] sm:$0xf]
  %v230 = vld [vmem:[%s1 + $0x110] sm:$0xf]
  %v231 = vld [vmem:[%s1 + $0x114] sm:$0xf]
  %v232 = vld [vmem:[%s1 + $0x118] sm:$0xf]
  %v233 = vld [vmem:[%s1 + $0x11c] sm:$0xf]
  %v234 = vld [vmem:[%s1 + $0x120] sm:$0xf]
  %v235 = vld [vmem:[%s1 + $0x124] sm:$0xf]
  %v236 = vld [vmem:[%s1 + $0x128] sm:$0xf]
  %v237 = vld [vmem:[%s1 + $0x12c] sm:$0xf]
  %v238 = vld [vmem:[%s1 + $0x130] sm:$0xf]
  %v239 = vld [vmem:[%s1 + $0x134] sm:$0xf]
  %v240 = vld [vmem:[%s1 + $0x138] sm:$0xf]
  %v241 = vld [vmem:[%s1 + $0x13c] sm:$0xf]
  %v242 = vld [vmem:[%s1 + $0x140] sm:$0xf]
  %v243 = vld [vmem:[%s1 + $0x144] sm:$0xf]
  %v244 = vld [vmem:[%s1 + $0x148] sm:$0xf]
  %v245 = vld [vmem:[%s1 + $0x14c] sm:$0xf]
  %v246 = vld [vmem:[%s1 + $0x150] sm:$0xf]
  %v247 = vld [vmem:[%s1 + $0x154] sm:$0xf]
  %v248 = vld [vmem:[%s1 + $0x158] sm:$0xf]
  %v249 = vld [vmem:[%s1 + $0x15c] sm:$0xf]
  %v250 = vld [vmem:[%s1 + $0x160] sm:$0xf]
  %v251 = vld [vmem:[%s1 + $0x164] sm:$0xf]
  %v252 = vld [vmem:[%s1 + $0x168] sm:$0xf]
  %v253 = vld [vmem:[%s1 + $0x16c] sm:$0xf]
  %v254 = vld [vmem:[%s1 + $0x170] sm:$0xf]
  %v255 = vld [vmem:[%s1 + $0x174] sm:$0xf]
  %v256 = vld [vmem:[%s1 + $0x178] sm:$0xf]
  %v257 = vld [vmem:[%s1 + $0x17c] sm:$0xf]
  %v258 = vld [vmem:[%s1 + $0x180] sm:$0xf]
  %v259 = vld [vmem:[%s1 + $0x184] sm:$0xf]
  %v260 = vld [vmem:[%s1 + $0x188] sm:$0xf]
  %v261 = vld [vmem:[%s1 + $0x18c] sm:$0xf]
  %v262 = vld [vmem:[%s1 + $0x190] sm:$0xf]
  %v263 = vld [vmem:[%s1 + $0x194] sm:$0xf]
  %v264 = vld [vmem:[%s1 + $0x198] sm:$0xf]
  %v265 = vld [vmem:[%s1 + $0x19c] sm:$0xf]
  %v266 = vld [vmem:[%s1 + $0x1a0] sm:$0xf]
  %v267 = vld [vmem:[%s1 + $0x1a4] sm:$0xf]
  %v268 = vld [vmem:[%s1 + $0x1a8] sm:$0xf]
  %v269 = vld [vmem:[%s1 + $0x1ac] sm:$0xf]
  %v270 = vld [vmem:[%s1 + $0x1b0] sm:$0xf]
  %v271 = vld [vmem:[%s1 + $0x1b4] sm:$0xf]
  %v272 = vld [vmem:[%s1 + $0x1b8] sm:$0xf]
  %v273 = vld [vmem:[%s1 + $0x1bc] sm:$0xf]
  %v274 = vld [vmem:[%s1 + $0x1c0] sm:$0xf]
  %v275 = vld [vmem:[%s1 + $0x1c4] sm:$0xf]
  %v276 = vld [vmem:[%s1 + $0x1c8] sm:$0xf]
  %v277 = vld [vmem:[%s1 + $0x1cc] sm:$0xf]
  %v278 = vld [vmem:[%s1 + $0x1d0] sm:$0xf]
  %v279 = vld [vmem:[%s1 + $0x1d4] sm:$0xf]
  %v280 = vld [vmem:[%s1 + $0x1d8] sm:$0xf]
  %v281 = vld [vmem:[%s1 + $0x1dc] sm:$0xf]
  %v282 = vld [vmem:[%s1 + $0x1e0] sm:$0xf]
  %v283 = vld [vmem:[%s1 + $0x1e4] sm:$0xf]
  %v284 = vld [vmem:[%s1 + $0x1e8] sm:$0xf]
  %v285 = vld [vmem:[%s1 + $0x1ec] sm:$0xf]
  %v286 = vld [vmem:[%s1 + $0x1f0] sm:$0xf]
  %v287 = vld [vmem:[%s1 + $0x1f4] sm:$0xf]
  %v288 = vld [vmem:[%s1 + $0x1f8] sm:$0xf]
  %v289 = vld [vmem:[%s1 + $0x1fc] sm:$0xf]
  %v290 = vld [vmem:[%s1 + $0x200] sm:$0xf]
  %v291 = vld [vmem:[%s1 + $0x204] sm:$0xf]
  %v292 = vld [vmem:[%s1 + $0x208] sm:$0xf]
  %v293 = vld [vmem:[%s1 + $0x20c] sm:$0xf]
  %v294 = vld [vmem:[%s1 + $0x210] sm:$0xf]
  %v295 = vld [vmem:[%s1 + $0x214] sm:$0xf]
  %v296 = vld [vmem:[%s1 + $0x218] sm:$0xf]
  %v297 = vld [vmem:[%s1 + $0x21c] sm:$0xf]
  %v298 = vld [vmem:[%s1 + $0x220] sm:$0xf]
  %v299 = vld [vmem:[%s1 + $0x224] sm:$0xf]
  %v300 = vld [vmem:[%s1 + $0x228] sm:$0xf]
  %v301 = vld [vmem:[%s1 + $0x22c] sm:$0xf]
  %v302 = vld [vmem:[%s1 + $0x230] sm:$0xf]
  %v303 = vld [vmem:[%s1 + $0x234] sm:$0xf]
  %v304 = vld [vmem:[%s1 + $0x238] sm:$0xf]
  %v305 = vld [vmem:[%s1 + $0x23c] sm:$0xf]
  %v306 = vld [vmem:[%s1 + $0x240] sm:$0xf]
  %v307 = vld [vmem:[%s1 + $0x244] sm:$0xf]
  %v308 = vld [vmem:[%s1 + $0x248] sm:$0xf]
  %v309 = vld [vmem:[%s1 + $0x24c] sm:$0xf]
  %v310 = vld [vmem:[%s1 + $0x250] sm:$0xf]
  %v311 = vld [vmem:[%s1 + $0x254] sm:$0xf]
  %v312 = vld [vmem:[%s1 + $0x258] sm:$0xf]
  %v313 = vld [vmem:[%s1 + $0x25c] sm:$0xf]
  %v314 = vld [vmem:[%s1 + $0x260] sm:$0xf]
  %v315 = vld [vmem:[%s1 + $0x264] sm:$0xf]
  %v316 = vld [vmem:[%s1 + $0x268] sm:$0xf]
  %v317 = vld [vmem:[%s1 + $0x26c] sm:$0xf]
  %v318 = vld [vmem:[%s1 + $0x270] sm:$0xf]
  %v319 = vld [vmem:[%s1 + $0x274] sm:$0xf]
  %v320 = vld [vmem:[%s1 + $0x278] sm:$0xf]
  %v321 = vld [vmem:[%s1 + $0x27c] sm:$0xf]
  %v322 = vld [vmem:[%s1 + $0x280] sm:$0xf]
  %v323 = vld [vmem:[%s1 + $0x284] sm:$0xf]
  %v324 = vld [vmem:[%s1 + $0x288] sm:$0xf]
  %v325 = vld [vmem:[%s1 + $0x28c] sm:$0xf]
  %v326 = vld [vmem:[%s1 + $0x290] sm:$0xf]
  %v327 = vld [vmem:[%s1 + $0x294] sm:$0xf]
  %v328 = vld [vmem:[%s1 + $0x298] sm:$0xf]
  %v329 = vld [vmem:[%s1 + $0x29c] sm:$0xf]
  %v330 = vld [vmem:[%s1 + $0x2a0] sm:$0xf]
  %v331 = vld [vmem:[%s1 + $0x2a4] sm:$0xf]
  %v332 = vld [vmem:[%s1 + $0x2a8] sm:$0xf]
  %v333 = vld [vmem:[%s1 + $0x2ac] sm:$0xf]
  %v334 = vld [vmem:[%s1 + $0x2b0] sm:$0xf]
  %v335 = vld [vmem:[%s1 + $0x2b4] sm:$0xf]
  %v336 = vld [vmem:[%s1 + $0x2b8] sm:$0xf]
  %v337 = vld [vmem:[%s1 + $0x2bc] sm:$0xf]
  %v338 = vld [vmem:[%s1 + $0x2c0] sm:$0xf]
  %v339 = vld [vmem:[%s1 + $0x2c4] sm:$0xf]
  %v340 = vld [vmem:[%s1 + $0x2c8] sm:$0xf]
  %v341 = vld [vmem:[%s1 + $0x2cc] sm:$0xf]
  %v342 = vld [vmem:[%s1 + $0x2d0] sm:$0xf]
  %v343 = vld [vmem:[%s1 + $0x2d4] sm:$0xf]
  %v344 = vld [vmem:[%s1 + $0x2d8] sm:$0xf]
  %v345 = vld [vmem:[%s1 + $0x2dc] sm:$0xf]
  %v346 = vld [vmem:[%s1 + $0x2e0] sm:$0xf]
  %v347 = vld [vmem:[%s1 + $0x2e4] sm:$0xf]
  %v348 = vld [vmem:[%s1 + $0x2e8] sm:$0xf]
  %v349 = vld [vmem:[%s1 + $0x2ec] sm:$0xf]
  %v350 = vld [vmem:[%s1 + $0x2f0] sm:$0xf]
  %v351 = vld [vmem:[%s1 + $0x2f4] sm:$0xf]
  %v352 = vld [vmem:[%s1 + $0x2f8] sm:$0xf]
  %v353 = vld [vmem:[%s1 + $0x2fc] sm:$0xf]
  %v354 = vld [vmem:[%s1 + $0x300] sm:$0xf]
  %v355 = vld [vmem:[%s1 + $0x304] sm:$0xf]
  %v356 = vld [vmem:[%s1 + $0x308] sm:$0xf]
  %v357 = vld [vmem:[%s1 + $0x30c] sm:$0xf]
  %v358 = vld [vmem:[%s1 + $0x310] sm:$0xf]
  %v359 = vld [vmem:[%s1 + $0x314] sm:$0xf]
  %v360 = vld [vmem:[%s1 + $0x318] sm:$0xf]
  %v361 = vld [vmem:[%s1 + $0x31c] sm:$0xf]
  %v362 = vld [vmem:[%s1 + $0x320] sm:$0xf]
  %v363 = vld [vmem:[%s1 + $0x324] sm:$0xf]
  %v364 = vld [vmem:[%s1 + $0x328] sm:$0xf]
  %v365 = vld [vmem:[%s1 + $0x32c] sm:$0xf]
  %v366 = vld [vmem:[%s1 + $0x330] sm:$0xf]
  %v367 = vld [vmem:[%s1 + $0x334] sm:$0xf]
  %v368 = vld [vmem:[%s1 + $0x338] sm:$0xf]
  %v369 = vld [vmem:[%s1 + $0x33c] sm:$0xf]
  %v370 = vld [vmem:[%s2] sm:$0x1]
  %v372 = vlaneseq
  %v373 = vshrl.u32 %v372, 7
  %v374 = vsub.s32 0, %v373
  %v375 = vrot.slane %v370, %v374
  %v524 = vunpack.c.l.b16 %v15
  %v525 = vunpack.c.h.b16 %v15
  %v526 = vunpack.c.l.b16 %v16
  %v527 = vunpack.c.h.b16 %v16
  %v528 = vunpack.c.l.b16 %v17
  %v529 = vunpack.c.h.b16 %v17
  %v530 = vunpack.c.l.b16 %v18
  %v531 = vunpack.c.h.b16 %v18
  %v532 = vunpack.c.l.b16 %v19
  %v533 = vunpack.c.h.b16 %v19
  %v534 = vunpack.c.l.b16 %v20
  %v535 = vunpack.c.h.b16 %v20
  %v536 = vunpack.c.l.b16 %v21
  %v537 = vunpack.c.l.b16 %v22
  %v538 = vunpack.c.h.b16 %v22
  %v539 = vunpack.c.l.b16 %v23
  %v540 = vunpack.c.h.b16 %v23
  %v541 = vunpack.c.l.b16 %v24
  %v542 = vunpack.c.h.b16 %v24
  %v543 = vunpack.c.l.b16 %v25
  %v544 = vunpack.c.h.b16 %v25
  %v545 = vunpack.c.l.b16 %v26
  %v546 = vunpack.c.h.b16 %v26
  %v547 = vunpack.c.l.b16 %v27
  %v548 = vunpack.c.h.b16 %v27
  %v549 = vunpack.c.l.b16 %v28
  %v550 = vunpack.c.l.b16 %v29
  %v551 = vunpack.c.h.b16 %v29
  %v552 = vunpack.c.l.b16 %v30
  %v553 = vunpack.c.h.b16 %v30
  %v554 = vunpack.c.l.b16 %v31
  %v555 = vunpack.c.h.b16 %v31
  %v556 = vunpack.c.l.b16 %v32
  %v557 = vunpack.c.h.b16 %v32
  %v558 = vunpack.c.l.b16 %v33
  %v559 = vunpack.c.h.b16 %v33
  %v560 = vunpack.c.l.b16 %v34
  %v561 = vunpack.c.h.b16 %v34
  %v562 = vunpack.c.l.b16 %v35
  %v563 = vunpack.c.l.b16 %v36
  %v564 = vunpack.c.h.b16 %v36
  %v565 = vunpack.c.l.b16 %v37
  %v566 = vunpack.c.h.b16 %v37
  %v567 = vunpack.c.l.b16 %v38
  %v568 = vunpack.c.h.b16 %v38
  %v569 = vunpack.c.l.b16 %v39
  %v570 = vunpack.c.h.b16 %v39
  %v571 = vunpack.c.l.b16 %v40
  %v572 = vunpack.c.h.b16 %v40
  %v573 = vunpack.c.l.b16 %v41
  %v574 = vunpack.c.h.b16 %v41
  %v575 = vunpack.c.l.b16 %v42
  %v576 = vunpack.c.l.b16 %v43
  %v577 = vunpack.c.h.b16 %v43
  %v578 = vunpack.c.l.b16 %v44
  %v579 = vunpack.c.h.b16 %v44
  %v580 = vunpack.c.l.b16 %v45
  %v581 = vunpack.c.h.b16 %v45
  %v582 = vunpack.c.l.b16 %v46
  %v583 = vunpack.c.h.b16 %v46
  %v584 = vunpack.c.l.b16 %v47
  %v585 = vunpack.c.h.b16 %v47
  %v586 = vunpack.c.l.b16 %v48
  %v587 = vunpack.c.h.b16 %v48
  %v588 = vunpack.c.l.b16 %v49
  %v589 = vunpack.c.l.b16 %v50
  %v590 = vunpack.c.h.b16 %v50
  %v591 = vunpack.c.l.b16 %v51
  %v592 = vunpack.c.h.b16 %v51
  %v593 = vunpack.c.l.b16 %v52
  %v594 = vunpack.c.h.b16 %v52
  %v595 = vunpack.c.l.b16 %v53
  %v596 = vunpack.c.h.b16 %v53
  %v597 = vunpack.c.l.b16 %v54
  %v598 = vunpack.c.h.b16 %v54
  %v599 = vunpack.c.l.b16 %v55
  %v600 = vunpack.c.h.b16 %v55
  %v601 = vunpack.c.l.b16 %v56
  %v602 = vunpack.c.l.b16 %v57
  %v603 = vunpack.c.h.b16 %v57
  %v604 = vunpack.c.l.b16 %v58
  %v605 = vunpack.c.h.b16 %v58
  %v606 = vunpack.c.l.b16 %v59
  %v607 = vunpack.c.h.b16 %v59
  %v608 = vunpack.c.l.b16 %v60
  %v609 = vunpack.c.h.b16 %v60
  %v610 = vunpack.c.l.b16 %v61
  %v611 = vunpack.c.h.b16 %v61
  %v612 = vunpack.c.l.b16 %v62
  %v613 = vunpack.c.h.b16 %v62
  %v614 = vunpack.c.l.b16 %v63
  %v615 = vunpack.c.l.b16 %v64
  %v616 = vunpack.c.h.b16 %v64
  %v617 = vunpack.c.l.b16 %v65
  %v618 = vunpack.c.h.b16 %v65
  %v619 = vunpack.c.l.b16 %v66
  %v620 = vunpack.c.h.b16 %v66
  %v621 = vunpack.c.l.b16 %v67
  %v622 = vunpack.c.h.b16 %v67
  %v623 = vunpack.c.l.b16 %v68
  %v624 = vunpack.c.h.b16 %v68
  %v625 = vunpack.c.l.b16 %v69
  %v626 = vunpack.c.h.b16 %v69
  %v627 = vunpack.c.l.b16 %v70
  %v628 = vunpack.c.l.b16 %v71
  %v629 = vunpack.c.h.b16 %v71
  %v630 = vunpack.c.l.b16 %v72
  %v631 = vunpack.c.h.b16 %v72
  %v632 = vunpack.c.l.b16 %v73
  %v633 = vunpack.c.h.b16 %v73
  %v634 = vunpack.c.l.b16 %v74
  %v635 = vunpack.c.h.b16 %v74
  %v636 = vunpack.c.l.b16 %v75
  %v637 = vunpack.c.h.b16 %v75
  %v638 = vunpack.c.l.b16 %v76
  %v639 = vunpack.c.h.b16 %v76
  %v640 = vunpack.c.l.b16 %v77
  %v641 = vunpack.c.l.b16 %v78
  %v642 = vunpack.c.h.b16 %v78
  %v643 = vunpack.c.l.b16 %v79
  %v644 = vunpack.c.h.b16 %v79
  %v645 = vunpack.c.l.b16 %v80
  %v646 = vunpack.c.h.b16 %v80
  %v647 = vunpack.c.l.b16 %v81
  %v648 = vunpack.c.h.b16 %v81
  %v649 = vunpack.c.l.b16 %v82
  %v650 = vunpack.c.h.b16 %v82
  %v651 = vunpack.c.l.b16 %v83
  %v652 = vunpack.c.h.b16 %v83
  %v653 = vunpack.c.l.b16 %v84
  %v654 = vunpack.c.l.b16 %v85
  %v655 = vunpack.c.h.b16 %v85
  %v656 = vunpack.c.l.b16 %v86
  %v657 = vunpack.c.h.b16 %v86
  %v658 = vunpack.c.l.b16 %v87
  %v659 = vunpack.c.h.b16 %v87
  %v660 = vunpack.c.l.b16 %v88
  %v661 = vunpack.c.h.b16 %v88
  %v662 = vunpack.c.l.b16 %v89
  %v663 = vunpack.c.h.b16 %v89
  %v664 = vunpack.c.l.b16 %v90
  %v665 = vunpack.c.h.b16 %v90
  %v666 = vunpack.c.l.b16 %v91
  %v667 = vunpack.c.l.b16 %v92
  %v668 = vunpack.c.h.b16 %v92
  %v669 = vunpack.c.l.b16 %v93
  %v670 = vunpack.c.h.b16 %v93
  %v671 = vunpack.c.l.b16 %v94
  %v672 = vunpack.c.h.b16 %v94
  %v673 = vunpack.c.l.b16 %v95
  %v674 = vunpack.c.h.b16 %v95
  %v675 = vunpack.c.l.b16 %v96
  %v676 = vunpack.c.h.b16 %v96
  %v677 = vunpack.c.l.b16 %v97
  %v678 = vunpack.c.h.b16 %v97
  %v679 = vunpack.c.l.b16 %v98
  %v680 = vunpack.c.l.b16 %v99
  %v681 = vunpack.c.h.b16 %v99
  %v682 = vunpack.c.l.b16 %v100
  %v683 = vunpack.c.h.b16 %v100
  %v684 = vunpack.c.l.b16 %v101
  %v685 = vunpack.c.h.b16 %v101
  %v686 = vunpack.c.l.b16 %v102
  %v687 = vunpack.c.h.b16 %v102
  %v688 = vunpack.c.l.b16 %v103
  %v689 = vunpack.c.h.b16 %v103
  %v690 = vunpack.c.l.b16 %v104
  %v691 = vunpack.c.h.b16 %v104
  %v692 = vunpack.c.l.b16 %v105
  %v693 = vunpack.c.l.b16 %v106
  %v694 = vunpack.c.h.b16 %v106
  %v695 = vunpack.c.l.b16 %v107
  %v696 = vunpack.c.h.b16 %v107
  %v697 = vunpack.c.l.b16 %v108
  %v698 = vunpack.c.h.b16 %v108
  %v699 = vunpack.c.l.b16 %v109
  %v700 = vunpack.c.h.b16 %v109
  %v701 = vunpack.c.l.b16 %v110
  %v702 = vunpack.c.h.b16 %v110
  %v703 = vunpack.c.l.b16 %v111
  %v704 = vunpack.c.h.b16 %v111
  %v705 = vunpack.c.l.b16 %v112
  %v706 = vunpack.c.l.b16 %v113
  %v707 = vunpack.c.h.b16 %v113
  %v708 = vunpack.c.l.b16 %v114
  %v709 = vunpack.c.h.b16 %v114
  %v710 = vunpack.c.l.b16 %v115
  %v711 = vunpack.c.h.b16 %v115
  %v712 = vunpack.c.l.b16 %v116
  %v713 = vunpack.c.h.b16 %v116
  %v714 = vunpack.c.l.b16 %v117
  %v715 = vunpack.c.h.b16 %v117
  %v716 = vunpack.c.l.b16 %v118
  %v717 = vunpack.c.h.b16 %v118
  %v718 = vunpack.c.l.b16 %v119
  %v719 = vunpack.c.l.b16 %v120
  %v720 = vunpack.c.h.b16 %v120
  %v721 = vunpack.c.l.b16 %v121
  %v722 = vunpack.c.h.b16 %v121
  %v723 = vunpack.c.l.b16 %v122
  %v724 = vunpack.c.h.b16 %v122
  %v725 = vunpack.c.l.b16 %v123
  %v726 = vunpack.c.h.b16 %v123
  %v727 = vunpack.c.l.b16 %v124
  %v728 = vunpack.c.h.b16 %v124
  %v729 = vunpack.c.l.b16 %v125
  %v730 = vunpack.c.h.b16 %v125
  %v731 = vunpack.c.l.b16 %v126
  %v732 = vunpack.c.l.b16 %v127
  %v733 = vunpack.c.h.b16 %v127
  %v734 = vunpack.c.l.b16 %v128
  %v735 = vunpack.c.h.b16 %v128
  %v736 = vunpack.c.l.b16 %v129
  %v737 = vunpack.c.h.b16 %v129
  %v738 = vunpack.c.l.b16 %v130
  %v739 = vunpack.c.h.b16 %v130
  %v740 = vunpack.c.l.b16 %v131
  %v741 = vunpack.c.h.b16 %v131
  %v742 = vunpack.c.l.b16 %v132
  %v743 = vunpack.c.h.b16 %v132
  %v744 = vunpack.c.l.b16 %v133
  %v745 = vunpack.c.l.b16 %v134
  %v746 = vunpack.c.h.b16 %v134
  %v747 = vunpack.c.l.b16 %v135
  %v748 = vunpack.c.h.b16 %v135
  %v749 = vunpack.c.l.b16 %v136
  %v750 = vunpack.c.h.b16 %v136
  %v751 = vunpack.c.l.b16 %v137
  %v752 = vunpack.c.h.b16 %v137
  %v753 = vunpack.c.l.b16 %v138
  %v754 = vunpack.c.h.b16 %v138
  %v755 = vunpack.c.l.b16 %v139
  %v756 = vunpack.c.h.b16 %v139
  %v757 = vunpack.c.l.b16 %v140
  %v758 = vunpack.c.l.b16 %v141
  %v759 = vunpack.c.h.b16 %v141
  %v760 = vunpack.c.l.b16 %v142
  %v761 = vunpack.c.h.b16 %v142
  %v762 = vunpack.c.l.b16 %v143
  %v763 = vunpack.c.h.b16 %v143
  %v764 = vunpack.c.l.b16 %v144
  %v765 = vunpack.c.h.b16 %v144
  %v766 = vunpack.c.l.b16 %v145
  %v767 = vunpack.c.h.b16 %v145
  %v768 = vunpack.c.l.b16 %v146
  %v769 = vunpack.c.h.b16 %v146
  %v770 = vunpack.c.l.b16 %v147
  %v771 = vunpack.c.l.b16 %v148
  %v772 = vunpack.c.h.b16 %v148
  %v773 = vunpack.c.l.b16 %v149
  %v774 = vunpack.c.h.b16 %v149
  %v775 = vunpack.c.l.b16 %v150
  %v776 = vunpack.c.h.b16 %v150
  %v777 = vunpack.c.l.b16 %v151
  %v778 = vunpack.c.h.b16 %v151
  %v779 = vunpack.c.l.b16 %v152
  %v780 = vunpack.c.h.b16 %v152
  %v781 = vunpack.c.l.b16 %v153
  %v782 = vunpack.c.h.b16 %v153
  %v783 = vunpack.c.l.b16 %v154
  %v784 = vunpack.c.l.b16 %v155
  %v785 = vunpack.c.h.b16 %v155
  %v786 = vunpack.c.l.b16 %v156
  %v787 = vunpack.c.h.b16 %v156
  %v788 = vunpack.c.l.b16 %v157
  %v789 = vunpack.c.h.b16 %v157
  %v790 = vunpack.c.l.b16 %v158
  %v791 = vunpack.c.h.b16 %v158
  %v792 = vunpack.c.l.b16 %v159
  %v793 = vunpack.c.h.b16 %v159
  %v794 = vunpack.c.l.b16 %v160
  %v795 = vunpack.c.h.b16 %v160
  %v796 = vunpack.c.l.b16 %v161
  %v797 = vpack.c.b16 %v537, %v524
  %v798 = vpack.c.b16 %v538, %v525
  %v799 = vpack.c.b16 %v539, %v526
  %v800 = vpack.c.b16 %v540, %v527
  %v801 = vpack.c.b16 %v541, %v528
  %v802 = vpack.c.b16 %v542, %v529
  %v803 = vpack.c.b16 %v543, %v530
  %v804 = vpack.c.b16 %v544, %v531
  %v805 = vpack.c.b16 %v545, %v532
  %v806 = vpack.c.b16 %v546, %v533
  %v807 = vpack.c.b16 %v547, %v534
  %v808 = vpack.c.b16 %v548, %v535
  %v809 = vpack.c.b16 %v549, %v536
  %v810 = vpack.c.b16 %v563, %v550
  %v811 = vpack.c.b16 %v564, %v551
  %v812 = vpack.c.b16 %v565, %v552
  %v813 = vpack.c.b16 %v566, %v553
  %v814 = vpack.c.b16 %v567, %v554
  %v815 = vpack.c.b16 %v568, %v555
  %v816 = vpack.c.b16 %v569, %v556
  %v817 = vpack.c.b16 %v570, %v557
  %v818 = vpack.c.b16 %v571, %v558
  %v819 = vpack.c.b16 %v572, %v559
  %v820 = vpack.c.b16 %v573, %v560
  %v821 = vpack.c.b16 %v574, %v561
  %v822 = vpack.c.b16 %v575, %v562
  %v823 = vpack.c.b16 %v589, %v576
  %v824 = vpack.c.b16 %v590, %v577
  %v825 = vpack.c.b16 %v591, %v578
  %v826 = vpack.c.b16 %v592, %v579
  %v827 = vpack.c.b16 %v593, %v580
  %v828 = vpack.c.b16 %v594, %v581
  %v829 = vpack.c.b16 %v595, %v582
  %v830 = vpack.c.b16 %v596, %v583
  %v831 = vpack.c.b16 %v597, %v584
  %v832 = vpack.c.b16 %v598, %v585
  %v833 = vpack.c.b16 %v599, %v586
  %v834 = vpack.c.b16 %v600, %v587
  %v835 = vpack.c.b16 %v601, %v588
  %v836 = vpack.c.b16 %v615, %v602
  %v837 = vpack.c.b16 %v616, %v603
  %v838 = vpack.c.b16 %v617, %v604
  %v839 = vpack.c.b16 %v618, %v605
  %v840 = vpack.c.b16 %v619, %v606
  %v841 = vpack.c.b16 %v620, %v607
  %v842 = vpack.c.b16 %v621, %v608
  %v843 = vpack.c.b16 %v622, %v609
  %v844 = vpack.c.b16 %v623, %v610
  %v845 = vpack.c.b16 %v624, %v611
  %v846 = vpack.c.b16 %v625, %v612
  %v847 = vpack.c.b16 %v626, %v613
  %v848 = vpack.c.b16 %v627, %v614
  %v849 = vpack.c.b16 %v641, %v628
  %v850 = vpack.c.b16 %v642, %v629
  %v851 = vpack.c.b16 %v643, %v630
  %v852 = vpack.c.b16 %v644, %v631
  %v853 = vpack.c.b16 %v645, %v632
  %v854 = vpack.c.b16 %v646, %v633
  %v855 = vpack.c.b16 %v647, %v634
  %v856 = vpack.c.b16 %v648, %v635
  %v857 = vpack.c.b16 %v649, %v636
  %v858 = vpack.c.b16 %v650, %v637
  %v859 = vpack.c.b16 %v651, %v638
  %v860 = vpack.c.b16 %v652, %v639
  %v861 = vpack.c.b16 %v653, %v640
  %v862 = vpack.c.b16 %v667, %v654
  %v863 = vpack.c.b16 %v668, %v655
  %v864 = vpack.c.b16 %v669, %v656
  %v865 = vpack.c.b16 %v670, %v657
  %v866 = vpack.c.b16 %v671, %v658
  %v867 = vpack.c.b16 %v672, %v659
  %v868 = vpack.c.b16 %v673, %v660
  %v869 = vpack.c.b16 %v674, %v661
  %v870 = vpack.c.b16 %v675, %v662
  %v871 = vpack.c.b16 %v676, %v663
  %v872 = vpack.c.b16 %v677, %v664
  %v873 = vpack.c.b16 %v678, %v665
  %v874 = vpack.c.b16 %v679, %v666
  %v875 = vpack.c.b16 %v693, %v680
  %v876 = vpack.c.b16 %v694, %v681
  %v877 = vpack.c.b16 %v695, %v682
  %v878 = vpack.c.b16 %v696, %v683
  %v879 = vpack.c.b16 %v697, %v684
  %v880 = vpack.c.b16 %v698, %v685
  %v881 = vpack.c.b16 %v699, %v686
  %v882 = vpack.c.b16 %v700, %v687
  %v883 = vpack.c.b16 %v701, %v688
  %v884 = vpack.c.b16 %v702, %v689
  %v885 = vpack.c.b16 %v703, %v690
  %v886 = vpack.c.b16 %v704, %v691
  %v887 = vpack.c.b16 %v705, %v692
  %v888 = vpack.c.b16 %v719, %v706
  %v889 = vpack.c.b16 %v720, %v707
  %v890 = vpack.c.b16 %v721, %v708
  %v891 = vpack.c.b16 %v722, %v709
  %v892 = vpack.c.b16 %v723, %v710
  %v893 = vpack.c.b16 %v724, %v711
  %v894 = vpack.c.b16 %v725, %v712
  %v895 = vpack.c.b16 %v726, %v713
  %v896 = vpack.c.b16 %v727, %v714
  %v897 = vpack.c.b16 %v728, %v715
  %v898 = vpack.c.b16 %v729, %v716
  %v899 = vpack.c.b16 %v730, %v717
  %v900 = vpack.c.b16 %v731, %v718
  %v901 = vpack.c.b16 %v745, %v732
  %v902 = vpack.c.b16 %v746, %v733
  %v903 = vpack.c.b16 %v747, %v734
  %v904 = vpack.c.b16 %v748, %v735
  %v905 = vpack.c.b16 %v749, %v736
  %v906 = vpack.c.b16 %v750, %v737
  %v907 = vpack.c.b16 %v751, %v738
  %v908 = vpack.c.b16 %v752, %v739
  %v909 = vpack.c.b16 %v753, %v740
  %v910 = vpack.c.b16 %v754, %v741
  %v911 = vpack.c.b16 %v755, %v742
  %v912 = vpack.c.b16 %v756, %v743
  %v913 = vpack.c.b16 %v757, %v744
  %v914 = vpack.c.b16 %v771, %v758
  %v915 = vpack.c.b16 %v772, %v759
  %v916 = vpack.c.b16 %v773, %v760
  %v917 = vpack.c.b16 %v774, %v761
  %v918 = vpack.c.b16 %v775, %v762
  %v919 = vpack.c.b16 %v776, %v763
  %v920 = vpack.c.b16 %v777, %v764
  %v921 = vpack.c.b16 %v778, %v765
  %v922 = vpack.c.b16 %v779, %v766
  %v923 = vpack.c.b16 %v780, %v767
  %v924 = vpack.c.b16 %v781, %v768
  %v925 = vpack.c.b16 %v782, %v769
  %v926 = vpack.c.b16 %v783, %v770
  %v927 = vpack.c.b16 %v784, %v784
  %v928 = vpack.c.b16 %v785, %v785
  %v929 = vpack.c.b16 %v786, %v786
  %v930 = vpack.c.b16 %v787, %v787
  %v931 = vpack.c.b16 %v788, %v788
  %v932 = vpack.c.b16 %v789, %v789
  %v933 = vpack.c.b16 %v790, %v790
  %v934 = vpack.c.b16 %v791, %v791
  %v935 = vpack.c.b16 %v792, %v792
  %v936 = vpack.c.b16 %v793, %v793
  %v937 = vpack.c.b16 %v794, %v794
  %v938 = vpack.c.b16 %v795, %v795
  %v939 = vpack.c.b16 %v796, %v796
  %v1291 = vunpack.c.l.b16 %v162
  %v1292 = vunpack.c.l.b16 %v163
  %v1293 = vunpack.c.l.b16 %v164
  %v1294 = vunpack.c.l.b16 %v165
  %v1295 = vunpack.c.l.b16 %v166
  %v1296 = vunpack.c.l.b16 %v167
  %v1297 = vunpack.c.l.b16 %v168
  %v1298 = vunpack.c.l.b16 %v169
  %v1299 = vunpack.c.l.b16 %v170
  %v1300 = vunpack.c.l.b16 %v171
  %v1301 = vunpack.c.l.b16 %v172
  %v1302 = vunpack.c.l.b16 %v173
  %v1303 = vunpack.c.l.b16 %v174
  %v1304 = vunpack.c.l.b16 %v175
  %v1305 = vunpack.c.l.b16 %v176
  %v1306 = vunpack.c.l.b16 %v177
  %v1307 = vunpack.c.l.b16 %v178
  %v1308 = vunpack.c.l.b16 %v179
  %v1309 = vunpack.c.l.b16 %v180
  %v1310 = vunpack.c.l.b16 %v181
  %v1311 = vunpack.c.l.b16 %v182
  %v1312 = vunpack.c.l.b16 %v183
  %v1313 = vunpack.c.l.b16 %v184
  %v1314 = vunpack.c.l.b16 %v185
  %v1315 = vunpack.c.l.b16 %v186
  %v1316 = vunpack.c.l.b16 %v187
  %v1317 = vunpack.c.l.b16 %v188
  %v1318 = vunpack.c.l.b16 %v189
  %v1319 = vunpack.c.l.b16 %v190
  %v1320 = vunpack.c.l.b16 %v191
  %v1321 = vunpack.c.l.b16 %v192
  %v1322 = vunpack.c.l.b16 %v193
  %v1323 = vunpack.c.l.b16 %v194
  %v1324 = vunpack.c.l.b16 %v195
  %v1325 = vunpack.c.l.b16 %v196
  %v1326 = vunpack.c.l.b16 %v197
  %v1327 = vunpack.c.l.b16 %v198
  %v1328 = vunpack.c.l.b16 %v199
  %v1329 = vunpack.c.l.b16 %v200
  %v1330 = vunpack.c.l.b16 %v201
  %v1331 = vunpack.c.l.b16 %v202
  %v1332 = vunpack.c.l.b16 %v203
  %v1333 = vunpack.c.l.b16 %v204
  %v1334 = vunpack.c.l.b16 %v205
  %v1335 = vunpack.c.l.b16 %v206
  %v1336 = vunpack.c.l.b16 %v207
  %v1337 = vunpack.c.l.b16 %v208
  %v1338 = vunpack.c.l.b16 %v209
  %v1339 = vunpack.c.l.b16 %v210
  %v1340 = vunpack.c.l.b16 %v211
  %v1341 = vunpack.c.l.b16 %v212
  %v1342 = vunpack.c.l.b16 %v213
  %v1343 = vunpack.c.l.b16 %v214
  %v1344 = vunpack.c.l.b16 %v215
  %v1345 = vunpack.c.l.b16 %v216
  %v1346 = vunpack.c.l.b16 %v217
  %v1347 = vunpack.c.l.b16 %v218
  %v1348 = vunpack.c.l.b16 %v219
  %v1349 = vunpack.c.l.b16 %v220
  %v1350 = vunpack.c.l.b16 %v221
  %v1351 = vunpack.c.l.b16 %v222
  %v1352 = vunpack.c.l.b16 %v223
  %v1353 = vunpack.c.l.b16 %v224
  %v1354 = vunpack.c.l.b16 %v225
  %v1355 = vunpack.c.l.b16 %v226
  %v1356 = vunpack.c.l.b16 %v227
  %v1357 = vunpack.c.l.b16 %v228
  %v1358 = vunpack.c.l.b16 %v229
  %v1359 = vunpack.c.l.b16 %v230
  %v1360 = vunpack.c.l.b16 %v231
  %v1361 = vunpack.c.l.b16 %v232
  %v1362 = vunpack.c.l.b16 %v233
  %v1363 = vunpack.c.l.b16 %v234
  %v1364 = vunpack.c.l.b16 %v235
  %v1365 = vunpack.c.l.b16 %v236
  %v1366 = vunpack.c.l.b16 %v237
  %v1367 = vunpack.c.l.b16 %v238
  %v1368 = vunpack.c.l.b16 %v239
  %v1369 = vunpack.c.l.b16 %v240
  %v1370 = vunpack.c.l.b16 %v241
  %v1371 = vunpack.c.l.b16 %v242
  %v1372 = vunpack.c.l.b16 %v243
  %v1373 = vunpack.c.l.b16 %v244
  %v1374 = vunpack.c.l.b16 %v245
  %v1375 = vunpack.c.l.b16 %v246
  %v1376 = vunpack.c.l.b16 %v247
  %v1377 = vunpack.c.l.b16 %v248
  %v1378 = vunpack.c.l.b16 %v249
  %v1379 = vunpack.c.l.b16 %v250
  %v1380 = vunpack.c.l.b16 %v251
  %v1381 = vunpack.c.l.b16 %v252
  %v1382 = vunpack.c.l.b16 %v253
  %v1383 = vunpack.c.l.b16 %v254
  %v1384 = vunpack.c.l.b16 %v255
  %v1385 = vunpack.c.l.b16 %v256
  %v1386 = vunpack.c.l.b16 %v257
  %v1387 = vunpack.c.l.b16 %v258
  %v1388 = vunpack.c.l.b16 %v259
  %v1389 = vunpack.c.l.b16 %v260
  %v1390 = vunpack.c.l.b16 %v261
  %v1391 = vunpack.c.l.b16 %v262
  %v1392 = vunpack.c.l.b16 %v263
  %v1393 = vunpack.c.l.b16 %v264
  %v1394 = vunpack.c.l.b16 %v265
  %v1395 = vunpack.c.l.b16 %v266
  %v1396 = vunpack.c.l.b16 %v267
  %v1397 = vunpack.c.l.b16 %v268
  %v1398 = vunpack.c.l.b16 %v269
  %v1399 = vunpack.c.l.b16 %v270
  %v1400 = vunpack.c.l.b16 %v271
  %v1401 = vunpack.c.l.b16 %v272
  %v1402 = vunpack.c.l.b16 %v273
  %v1403 = vunpack.c.l.b16 %v274
  %v1404 = vunpack.c.l.b16 %v275
  %v1405 = vunpack.c.l.b16 %v276
  %v1406 = vunpack.c.l.b16 %v277
  %v1407 = vunpack.c.l.b16 %v278
  %v1408 = vunpack.c.l.b16 %v279
  %v1409 = vunpack.c.l.b16 %v280
  %v1410 = vunpack.c.l.b16 %v281
  %v1411 = vunpack.c.l.b16 %v282
  %v1412 = vunpack.c.l.b16 %v283
  %v1413 = vunpack.c.l.b16 %v284
  %v1414 = vunpack.c.l.b16 %v285
  %v1415 = vunpack.c.l.b16 %v286
  %v1416 = vunpack.c.l.b16 %v287
  %v1417 = vunpack.c.l.b16 %v288
  %v1418 = vunpack.c.l.b16 %v289
  %v1419 = vunpack.c.l.b16 %v290
  %v1420 = vunpack.c.l.b16 %v291
  %v1421 = vunpack.c.l.b16 %v292
  %v1422 = vunpack.c.l.b16 %v293
  %v1423 = vunpack.c.l.b16 %v294
  %v1424 = vunpack.c.l.b16 %v295
  %v1425 = vunpack.c.l.b16 %v296
  %v1426 = vunpack.c.l.b16 %v297
  %v1427 = vunpack.c.l.b16 %v298
  %v1428 = vunpack.c.l.b16 %v299
  %v1429 = vunpack.c.l.b16 %v300
  %v1430 = vunpack.c.l.b16 %v301
  %v1431 = vunpack.c.l.b16 %v302
  %v1432 = vunpack.c.l.b16 %v303
  %v1433 = vunpack.c.l.b16 %v304
  %v1434 = vunpack.c.l.b16 %v305
  %v1435 = vunpack.c.l.b16 %v306
  %v1436 = vunpack.c.l.b16 %v307
  %v1437 = vunpack.c.l.b16 %v308
  %v1438 = vunpack.c.l.b16 %v309
  %v1439 = vunpack.c.l.b16 %v310
  %v1440 = vunpack.c.l.b16 %v311
  %v1441 = vunpack.c.l.b16 %v312
  %v1442 = vunpack.c.l.b16 %v313
  %v1443 = vunpack.c.l.b16 %v314
  %v1444 = vunpack.c.l.b16 %v315
  %v1445 = vunpack.c.l.b16 %v316
  %v1446 = vunpack.c.l.b16 %v317
  %v1447 = vunpack.c.l.b16 %v318
  %v1448 = vunpack.c.l.b16 %v319
  %v1449 = vunpack.c.l.b16 %v320
  %v1450 = vunpack.c.l.b16 %v321
  %v1451 = vunpack.c.l.b16 %v322
  %v1452 = vunpack.c.l.b16 %v323
  %v1453 = vunpack.c.l.b16 %v324
  %v1454 = vunpack.c.l.b16 %v325
  %v1455 = vunpack.c.l.b16 %v326
  %v1456 = vunpack.c.l.b16 %v327
  %v1457 = vunpack.c.l.b16 %v328
  %v1458 = vunpack.c.l.b16 %v329
  %v1459 = vunpack.c.l.b16 %v330
  %v1460 = vunpack.c.l.b16 %v331
  %v1461 = vunpack.c.l.b16 %v332
  %v1462 = vunpack.c.l.b16 %v333
  %v1463 = vunpack.c.l.b16 %v334
  %v1464 = vunpack.c.l.b16 %v335
  %v1465 = vunpack.c.l.b16 %v336
  %v1466 = vunpack.c.l.b16 %v337
  %v1467 = vunpack.c.l.b16 %v338
  %v1468 = vunpack.c.l.b16 %v339
  %v1469 = vunpack.c.l.b16 %v340
  %v1470 = vunpack.c.l.b16 %v341
  %v1471 = vunpack.c.l.b16 %v342
  %v1472 = vunpack.c.l.b16 %v343
  %v1473 = vunpack.c.l.b16 %v344
  %v1474 = vunpack.c.l.b16 %v345
  %v1475 = vunpack.c.l.b16 %v346
  %v1476 = vunpack.c.l.b16 %v347
  %v1477 = vunpack.c.l.b16 %v348
  %v1478 = vunpack.c.l.b16 %v349
  %v1479 = vunpack.c.l.b16 %v350
  %v1480 = vunpack.c.l.b16 %v351
  %v1481 = vunpack.c.l.b16 %v352
  %v1482 = vunpack.c.l.b16 %v353
  %v1483 = vunpack.c.l.b16 %v354
  %v1484 = vunpack.c.l.b16 %v355
  %v1485 = vunpack.c.l.b16 %v356
  %v1486 = vunpack.c.l.b16 %v357
  %v1487 = vunpack.c.l.b16 %v358
  %v1488 = vunpack.c.l.b16 %v359
  %v1489 = vunpack.c.l.b16 %v360
  %v1490 = vunpack.c.l.b16 %v361
  %v1491 = vunpack.c.l.b16 %v362
  %v1492 = vunpack.c.l.b16 %v363
  %v1493 = vunpack.c.l.b16 %v364
  %v1494 = vunpack.c.l.b16 %v365
  %v1495 = vunpack.c.l.b16 %v366
  %v1496 = vunpack.c.l.b16 %v367
  %v1497 = vunpack.c.l.b16 %v368
  %v1498 = vunpack.c.l.b16 %v369
  %v1499 = vpack.c.b16 %v1292, %v1291
  %v1500 = vpack.c.b16 %v1294, %v1293
  %v1501 = vpack.c.b16 %v1296, %v1295
  %v1502 = vpack.c.b16 %v1298, %v1297
  %v1503 = vpack.c.b16 %v1300, %v1299
  %v1504 = vpack.c.b16 %v1302, %v1301
  %v1505 = vpack.c.b16 %v1304, %v1303
  %v1506 = vpack.c.b16 %v1306, %v1305
  %v1507 = vpack.c.b16 %v1308, %v1307
  %v1508 = vpack.c.b16 %v1310, %v1309
  %v1509 = vpack.c.b16 %v1312, %v1311
  %v1510 = vpack.c.b16 %v1314, %v1313
  %v1511 = vpack.c.b16 %v1316, %v1315
  %v1512 = vpack.c.b16 %v1318, %v1317
  %v1513 = vpack.c.b16 %v1320, %v1319
  %v1514 = vpack.c.b16 %v1322, %v1321
  %v1515 = vpack.c.b16 %v1324, %v1323
  %v1516 = vpack.c.b16 %v1326, %v1325
  %v1517 = vpack.c.b16 %v1328, %v1327
  %v1518 = vpack.c.b16 %v1330, %v1329
  %v1519 = vpack.c.b16 %v1332, %v1331
  %v1520 = vpack.c.b16 %v1334, %v1333
  %v1521 = vpack.c.b16 %v1336, %v1335
  %v1522 = vpack.c.b16 %v1338, %v1337
  %v1523 = vpack.c.b16 %v1340, %v1339
  %v1524 = vpack.c.b16 %v1342, %v1341
  %v1525 = vpack.c.b16 %v1344, %v1343
  %v1526 = vpack.c.b16 %v1346, %v1345
  %v1527 = vpack.c.b16 %v1348, %v1347
  %v1528 = vpack.c.b16 %v1350, %v1349
  %v1529 = vpack.c.b16 %v1352, %v1351
  %v1530 = vpack.c.b16 %v1354, %v1353
  %v1531 = vpack.c.b16 %v1356, %v1355
  %v1532 = vpack.c.b16 %v1358, %v1357
  %v1533 = vpack.c.b16 %v1360, %v1359
  %v1534 = vpack.c.b16 %v1362, %v1361
  %v1535 = vpack.c.b16 %v1364, %v1363
  %v1536 = vpack.c.b16 %v1366, %v1365
  %v1537 = vpack.c.b16 %v1368, %v1367
  %v1538 = vpack.c.b16 %v1370, %v1369
  %v1539 = vpack.c.b16 %v1372, %v1371
  %v1540 = vpack.c.b16 %v1374, %v1373
  %v1541 = vpack.c.b16 %v1376, %v1375
  %v1542 = vpack.c.b16 %v1378, %v1377
  %v1543 = vpack.c.b16 %v1380, %v1379
  %v1544 = vpack.c.b16 %v1382, %v1381
  %v1545 = vpack.c.b16 %v1384, %v1383
  %v1546 = vpack.c.b16 %v1386, %v1385
  %v1547 = vpack.c.b16 %v1388, %v1387
  %v1548 = vpack.c.b16 %v1390, %v1389
  %v1549 = vpack.c.b16 %v1392, %v1391
  %v1550 = vpack.c.b16 %v1394, %v1393
  %v1551 = vpack.c.b16 %v1396, %v1395
  %v1552 = vpack.c.b16 %v1398, %v1397
  %v1553 = vpack.c.b16 %v1400, %v1399
  %v1554 = vpack.c.b16 %v1402, %v1401
  %v1555 = vpack.c.b16 %v1404, %v1403
  %v1556 = vpack.c.b16 %v1406, %v1405
  %v1557 = vpack.c.b16 %v1408, %v1407
  %v1558 = vpack.c.b16 %v1410, %v1409
  %v1559 = vpack.c.b16 %v1412, %v1411
  %v1560 = vpack.c.b16 %v1414, %v1413
  %v1561 = vpack.c.b16 %v1416, %v1415
  %v1562 = vpack.c.b16 %v1418, %v1417
  %v1563 = vpack.c.b16 %v1420, %v1419
  %v1564 = vpack.c.b16 %v1422, %v1421
  %v1565 = vpack.c.b16 %v1424, %v1423
  %v1566 = vpack.c.b16 %v1426, %v1425
  %v1567 = vpack.c.b16 %v1428, %v1427
  %v1568 = vpack.c.b16 %v1430, %v1429
  %v1569 = vpack.c.b16 %v1432, %v1431
  %v1570 = vpack.c.b16 %v1434, %v1433
  %v1571 = vpack.c.b16 %v1436, %v1435
  %v1572 = vpack.c.b16 %v1438, %v1437
  %v1573 = vpack.c.b16 %v1440, %v1439
  %v1574 = vpack.c.b16 %v1442, %v1441
  %v1575 = vpack.c.b16 %v1444, %v1443
  %v1576 = vpack.c.b16 %v1446, %v1445
  %v1577 = vpack.c.b16 %v1448, %v1447
  %v1578 = vpack.c.b16 %v1450, %v1449
  %v1579 = vpack.c.b16 %v1452, %v1451
  %v1580 = vpack.c.b16 %v1454, %v1453
  %v1581 = vpack.c.b16 %v1456, %v1455
  %v1582 = vpack.c.b16 %v1458, %v1457
  %v1583 = vpack.c.b16 %v1460, %v1459
  %v1584 = vpack.c.b16 %v1462, %v1461
  %v1585 = vpack.c.b16 %v1464, %v1463
  %v1586 = vpack.c.b16 %v1466, %v1465
  %v1587 = vpack.c.b16 %v1468, %v1467
  %v1588 = vpack.c.b16 %v1470, %v1469
  %v1589 = vpack.c.b16 %v1472, %v1471
  %v1590 = vpack.c.b16 %v1474, %v1473
  %v1591 = vpack.c.b16 %v1476, %v1475
  %v1592 = vpack.c.b16 %v1478, %v1477
  %v1593 = vpack.c.b16 %v1480, %v1479
  %v1594 = vpack.c.b16 %v1482, %v1481
  %v1595 = vpack.c.b16 %v1484, %v1483
  %v1596 = vpack.c.b16 %v1486, %v1485
  %v1597 = vpack.c.b16 %v1488, %v1487
  %v1598 = vpack.c.b16 %v1490, %v1489
  %v1599 = vpack.c.b16 %v1492, %v1491
  %v1600 = vpack.c.b16 %v1494, %v1493
  %v1601 = vpack.c.b16 %v1496, %v1495
  %v1602 = vpack.c.b16 %v1498, %v1497
  %1707 = vmatprep.subr.bf16.mxu0 0
  %1708 = vmatpush1.bf16.msra.mxu0 %v1499
  %1709 = vmatprep.subr.bf16.mxu0 0
  %1710 = vmatpush1.bf16.msra.mxu0 %v1500
  %1711 = vmatprep.subr.bf16.mxu0 0
  %1712 = vmatpush1.bf16.msra.mxu0 %v1501
  %1713 = vmatprep.subr.bf16.mxu0 0
  %1714 = vmatpush1.bf16.msra.mxu0 %v1502
  %1715 = vmatprep.subr.bf16.mxu0 0
  %1716 = vmatpush1.bf16.msra.mxu0 %v1503
  %1717 = vmatprep.subr.bf16.mxu0 0
  %1718 = vmatpush1.bf16.msra.mxu0 %v1504
  %1719 = vmatprep.subr.bf16.mxu0 0
  %1720 = vmatpush1.bf16.msra.mxu0 %v1505
  %1721 = vmatprep.subr.bf16.mxu0 0
  %1722 = vmatpush1.bf16.msra.mxu0 %v1506
  %1723 = vmatprep.subr.bf16.mxu0 0
  %1724 = vmatpush1.bf16.msra.mxu0 %v1507
  %1725 = vmatprep.subr.bf16.mxu0 0
  %1726 = vmatpush1.bf16.msra.mxu0 %v1508
  %1727 = vmatprep.subr.bf16.mxu0 0
  %1728 = vmatpush1.bf16.msra.mxu0 %v1509
  %1729 = vmatprep.subr.bf16.mxu0 0
  %1730 = vmatpush1.bf16.msra.mxu0 %v1510
  %1731 = vmatprep.subr.bf16.mxu0 0
  %1732 = vmatpush1.bf16.msra.mxu0 %v1511
  %1733 = vmatprep.subr.bf16.mxu0 0
  %1734 = vmatpush1.bf16.msra.mxu0 %v1512
  %1735 = vmatprep.subr.bf16.mxu0 0
  %1736 = vmatpush1.bf16.msra.mxu0 %v1513
  %1737 = vmatprep.subr.bf16.mxu0 0
  %1738 = vmatpush1.bf16.msra.mxu0 %v1514
  %1739 = vmatprep.mubr.bf16.mxu0 %v798
  %1740 = vmatmul.mubr.bf16.gmra.mrb[0].mxu0 %v797
  %v1741 = vpop.f32.mrb[0].mxu0
  %v1742 = vadd.f32 %v375, %v1741
  %v1743 = vpop.f32.mrb[0].mxu0
  %v1744 = vpop.f32.mrb[0].mxu0
  %v1745 = vadd.f32 %v375, %v1744
  %v1746 = vpop.f32.mrb[0].mxu0
  %1747 = vmatprep.mubr.bf16.mxu0 %v811
  %1748 = vmatmul.mubr.bf16.gmra.mrb[0].mxu0 %v810
  %v1749 = vpop.f32.mrb[0].mxu0
  %v1750 = vadd.f32 %v375, %v1749
  %v1751 = vpop.f32.mrb[0].mxu0
  %v1752 = vpop.f32.mrb[0].mxu0
  %v1753 = vadd.f32 %v375, %v1752
  %v1754 = vpop.f32.mrb[0].mxu0
  %1755 = vmatprep.mubr.bf16.mxu0 %v824
  %1756 = vmatmul.mubr.bf16.gmra.mrb[0].mxu0 %v823
  %v1757 = vpop.f32.mrb[0].mxu0
  %v1758 = vadd.f32 %v375, %v1757
  %v1759 = vpop.f32.mrb[0].mxu0
  %v1760 = vpop.f32.mrb[0].mxu0
  %v1761 = vadd.f32 %v375, %v1760
  %v1762 = vpop.f32.mrb[0].mxu0
  %1763 = vmatprep.mubr.bf16.mxu0 %v837
  %1764 = vmatmul.mubr.bf16.gmra.mrb[0].mxu0 %v836
  %v1765 = vpop.f32.mrb[0].mxu0
  %v1766 = vadd.f32 %v375, %v1765
  %v1767 = vpop.f32.mrb[0].mxu0
  %v1768 = vpop.f32.mrb[0].mxu0
  %v1769 = vadd.f32 %v375, %v1768
  %v1770 = vpop.f32.mrb[0].mxu0
  %1771 = vmatprep.mubr.bf16.mxu0 %v850
  %1772 = vmatmul.mubr.bf16.gmra.mrb[0].mxu0 %v849
  %v1773 = vpop.f32.mrb[0].mxu0
  %v1774 = vadd.f32 %v375, %v1773
  %v1775 = vpop.f32.mrb[0].mxu0
  %v1776 = vpop.f32.mrb[0].mxu0
  %v1777 = vadd.f32 %v375, %v1776
  %v1778 = vpop.f32.mrb[0].mxu0
  %1779 = vmatprep.mubr.bf16.mxu0 %v863
  %1780 = vmatmul.mubr.bf16.gmra.mrb[0].mxu0 %v862
  %v1781 = vpop.f32.mrb[0].mxu0
  %v1782 = vadd.f32 %v375, %v1781
  %v1783 = vpop.f32.mrb[0].mxu0
  %v1784 = vpop.f32.mrb[0].mxu0
  %v1785 = vadd.f32 %v375, %v1784
  %v1786 = vpop.f32.mrb[0].mxu0
  %1787 = vmatprep.mubr.bf16.mxu0 %v876
  %1788 = vmatmul.mubr.bf16.gmra.mrb[0].mxu0 %v875
  %v1789 = vpop.f32.mrb[0].mxu0
  %v1790 = vadd.f32 %v375, %v1789
  %v1791 = vpop.f32.mrb[0].mxu0
  %v1792 = vpop.f32.mrb[0].mxu0
  %v1793 = vadd.f32 %v375, %v1792
  %v1794 = vpop.f32.mrb[0].mxu0
  %1795 = vmatprep.mubr.bf16.mxu0 %v889
  %1796 = vmatmul.mubr.bf16.gmra.mrb[0].mxu0 %v888
  %v1797 = vpop.f32.mrb[0].mxu0
  %v1798 = vadd.f32 %v375, %v1797
  %v1799 = vpop.f32.mrb[0].mxu0
  %v1800 = vpop.f32.mrb[0].mxu0
  %v1801 = vadd.f32 %v375, %v1800
  %v1802 = vpop.f32.mrb[0].mxu0
  %1803 = vmatprep.mubr.bf16.mxu0 %v902
  %1804 = vmatmul.mubr.bf16.gmra.mrb[0].mxu0 %v901
  %v1805 = vpop.f32.mrb[0].mxu0
  %v1806 = vadd.f32 %v375, %v1805
  %v1807 = vpop.f32.mrb[0].mxu0
  %v1808 = vpop.f32.mrb[0].mxu0
  %v1809 = vadd.f32 %v375, %v1808
  %v1810 = vpop.f32.mrb[0].mxu0
  %1811 = vmatprep.mubr.bf16.mxu0 %v915
  %1812 = vmatmul.mubr.bf16.gmra.mrb[0].mxu0 %v914
  %v1813 = vpop.f32.mrb[0].mxu0
  %v1814 = vadd.f32 %v375, %v1813
  %v1815 = vpop.f32.mrb[0].mxu0
  %v1816 = vpop.f32.mrb[0].mxu0
  %v1817 = vadd.f32 %v375, %v1816
  %v1818 = vpop.f32.mrb[0].mxu0
  %1819 = vmatprep.mubr.bf16.mxu0 %v928
  %1820 = vmatmul.mubr.bf16.gmra.mrb[0].mxu0 %v927
  %v1821 = vpop.f32.mrb[0].mxu0
  %v1822 = vadd.f32 %v375, %v1821
  %v1823 = vpop.f32.mrb[0].mxu0
  %v1824 = vpop.f32.mrb[0].mxu0
  %v1825 = vpop.f32.mrb[0].mxu0
  %1826 = vdwg.mxu0
  %1827 = vmatprep.subr.bf16.mxu0 0
  %1828 = vmatpush1.bf16.msra.mxu0 %v1515
  %1829 = vmatprep.subr.bf16.mxu0 0
  %1830 = vmatpush1.bf16.msra.mxu0 %v1516
  %1831 = vmatprep.subr.bf16.mxu0 0
  %1832 = vmatpush1.bf16.msra.mxu0 %v1517
  %1833 = vmatprep.subr.bf16.mxu0 0
  %1834 = vmatpush1.bf16.msra.mxu0 %v1518
  %1835 = vmatprep.subr.bf16.mxu0 0
  %1836 = vmatpush1.bf16.msra.mxu0 %v1519
  %1837 = vmatprep.subr.bf16.mxu0 0
  %1838 = vmatpush1.bf16.msra.mxu0 %v1520
  %1839 = vmatprep.subr.bf16.mxu0 0
  %1840 = vmatpush1.bf16.msra.mxu0 %v1521
  %1841 = vmatprep.subr.bf16.mxu0 0
  %1842 = vmatpush1.bf16.msra.mxu0 %v1522
  %1843 = vmatprep.subr.bf16.mxu0 0
  %1844 = vmatpush1.bf16.msra.mxu0 %v1523
  %1845 = vmatprep.subr.bf16.mxu0 0
  %1846 = vmatpush1.bf16.msra.mxu0 %v1524
  %1847 = vmatprep.subr.bf16.mxu0 0
  %1848 = vmatpush1.bf16.msra.mxu0 %v1525
  %1849 = vmatprep.subr.bf16.mxu0 0
  %1850 = vmatpush1.bf16.msra.mxu0 %v1526
  %1851 = vmatprep.subr.bf16.mxu0 0
  %1852 = vmatpush1.bf16.msra.mxu0 %v1527
  %1853 = vmatprep.subr.bf16.mxu0 0
  %1854 = vmatpush1.bf16.msra.mxu0 %v1528
  %1855 = vmatprep.subr.bf16.mxu0 0
  %1856 = vmatpush1.bf16.msra.mxu0 %v1529
  %1857 = vmatprep.subr.bf16.mxu0 0
  %1858 = vmatpush1.bf16.msra.mxu0 %v1530
  %1859 = vmatprep.mubr.bf16.mxu0 %v800
  %1860 = vmatmul.mubr.bf16.gmra.mrb[0].mxu0 %v799
  %v1861 = vpop.f32.mrb[0].mxu0
  %v1862 = vadd.f32 %v1742, %v1861
  %v1863 = vpop.f32.mrb[0].mxu0
  %v1864 = vpop.f32.mrb[0].mxu0
  %v1865 = vadd.f32 %v1745, %v1864
  %v1866 = vpop.f32.mrb[0].mxu0
  %1867 = vmatprep.mubr.bf16.mxu0 %v813
  %1868 = vmatmul.mubr.bf16.gmra.mrb[0].mxu0 %v812
  %v1869 = vpop.f32.mrb[0].mxu0
  %v1870 = vadd.f32 %v1750, %v1869
  %v1871 = vpop.f32.mrb[0].mxu0
  %v1872 = vpop.f32.mrb[0].mxu0
  %v1873 = vadd.f32 %v1753, %v1872
  %v1874 = vpop.f32.mrb[0].mxu0
  %1875 = vmatprep.mubr.bf16.mxu0 %v826
  %1876 = vmatmul.mubr.bf16.gmra.mrb[0].mxu0 %v825
  %v1877 = vpop.f32.mrb[0].mxu0
  %v1878 = vadd.f32 %v1758, %v1877
  %v1879 = vpop.f32.mrb[0].mxu0
  %v1880 = vpop.f32.mrb[0].mxu0
  %v1881 = vadd.f32 %v1761, %v1880
  %v1882 = vpop.f32.mrb[0].mxu0
  %1883 = vmatprep.mubr.bf16.mxu0 %v839
  %1884 = vmatmul.mubr.bf16.gmra.mrb[0].mxu0 %v838
  %v1885 = vpop.f32.mrb[0].mxu0
  %v1886 = vadd.f32 %v1766, %v1885
  %v1887 = vpop.f32.mrb[0].mxu0
  %v1888 = vpop.f32.mrb[0].mxu0
  %v1889 = vadd.f32 %v1769, %v1888
  %v1890 = vpop.f32.mrb[0].mxu0
  %1891 = vmatprep.mubr.bf16.mxu0 %v852
  %1892 = vmatmul.mubr.bf16.gmra.mrb[0].mxu0 %v851
  %v1893 = vpop.f32.mrb[0].mxu0
  %v1894 = vadd.f32 %v1774, %v1893
  %v1895 = vpop.f32.mrb[0].mxu0
  %v1896 = vpop.f32.mrb[0].mxu0
  %v1897 = vadd.f32 %v1777, %v1896
  %v1898 = vpop.f32.mrb[0].mxu0
  %1899 = vmatprep.mubr.bf16.mxu0 %v865
  %1900 = vmatmul.mubr.bf16.gmra.mrb[0].mxu0 %v864
  %v1901 = vpop.f32.mrb[0].mxu0
  %v1902 = vadd.f32 %v1782, %v1901
  %v1903 = vpop.f32.mrb[0].mxu0
  %v1904 = vpop.f32.mrb[0].mxu0
  %v1905 = vadd.f32 %v1785, %v1904
  %v1906 = vpop.f32.mrb[0].mxu0
  %1907 = vmatprep.mubr.bf16.mxu0 %v878
  %1908 = vmatmul.mubr.bf16.gmra.mrb[0].mxu0 %v877
  %v1909 = vpop.f32.mrb[0].mxu0
  %v1910 = vadd.f32 %v1790, %v1909
  %v1911 = vpop.f32.mrb[0].mxu0
  %v1912 = vpop.f32.mrb[0].mxu0
  %v1913 = vadd.f32 %v1793, %v1912
  %v1914 = vpop.f32.mrb[0].mxu0
  %1915 = vmatprep.mubr.bf16.mxu0 %v891
  %1916 = vmatmul.mubr.bf16.gmra.mrb[0].mxu0 %v890
  %v1917 = vpop.f32.mrb[0].mxu0
  %v1918 = vadd.f32 %v1798, %v1917
  %v1919 = vpop.f32.mrb[0].mxu0
  %v1920 = vpop.f32.mrb[0].mxu0
  %v1921 = vadd.f32 %v1801, %v1920
  %v1922 = vpop.f32.mrb[0].mxu0
  %1923 = vmatprep.mubr.bf16.mxu0 %v904
  %1924 = vmatmul.mubr.bf16.gmra.mrb[0].mxu0 %v903
  %v1925 = vpop.f32.mrb[0].mxu0
  %v1926 = vadd.f32 %v1806, %v1925
  %v1927 = vpop.f32.mrb[0].mxu0
  %v1928 = vpop.f32.mrb[0].mxu0
  %v1929 = vadd.f32 %v1809, %v1928
  %v1930 = vpop.f32.mrb[0].mxu0
  %1931 = vmatprep.mubr.bf16.mxu0 %v917
  %1932 = vmatmul.mubr.bf16.gmra.mrb[0].mxu0 %v916
  %v1933 = vpop.f32.mrb[0].mxu0
  %v1934 = vadd.f32 %v1814, %v1933
  %v1935 = vpop.f32.mrb[0].mxu0
  %v1936 = vpop.f32.mrb[0].mxu0
  %v1937 = vadd.f32 %v1817, %v1936
  %v1938 = vpop.f32.mrb[0].mxu0
  %1939 = vmatprep.mubr.bf16.mxu0 %v930
  %1940 = vmatmul.mubr.bf16.gmra.mrb[0].mxu0 %v929
  %v1941 = vpop.f32.mrb[0].mxu0
  %v1942 = vadd.f32 %v1822, %v1941
  %v1943 = vpop.f32.mrb[0].mxu0
  %v1944 = vpop.f32.mrb[0].mxu0
  %v1945 = vpop.f32.mrb[0].mxu0
  %1946 = vdwg.mxu0
  %1947 = vmatprep.subr.bf16.mxu0 0
  %1948 = vmatpush1.bf16.msra.mxu0 %v1531
  %1949 = vmatprep.subr.bf16.mxu0 0
  %1950 = vmatpush1.bf16.msra.mxu0 %v1532
  %1951 = vmatprep.subr.bf16.mxu0 0
  %1952 = vmatpush1.bf16.msra.mxu0 %v1533
  %1953 = vmatprep.subr.bf16.mxu0 0
  %1954 = vmatpush1.bf16.msra.mxu0 %v1534
  %1955 = vmatprep.subr.bf16.mxu0 0
  %1956 = vmatpush1.bf16.msra.mxu0 %v1535
  %1957 = vmatprep.subr.bf16.mxu0 0
  %1958 = vmatpush1.bf16.msra.mxu0 %v1536
  %1959 = vmatprep.subr.bf16.mxu0 0
  %1960 = vmatpush1.bf16.msra.mxu0 %v1537
  %1961 = vmatprep.subr.bf16.mxu0 0
  %1962 = vmatpush1.bf16.msra.mxu0 %v1538
  %1963 = vmatprep.subr.bf16.mxu0 0
  %1964 = vmatpush1.bf16.msra.mxu0 %v1539
  %1965 = vmatprep.subr.bf16.mxu0 0
  %1966 = vmatpush1.bf16.msra.mxu0 %v1540
  %1967 = vmatprep.subr.bf16.mxu0 0
  %1968 = vmatpush1.bf16.msra.mxu0 %v1541
  %1969 = vmatprep.subr.bf16.mxu0 0
  %1970 = vmatpush1.bf16.msra.mxu0 %v1542
  %1971 = vmatprep.subr.bf16.mxu0 0
  %1972 = vmatpush1.bf16.msra.mxu0 %v1543
  %1973 = vmatprep.subr.bf16.mxu0 0
  %1974 = vmatpush1.bf16.msra.mxu0 %v1544
  %1975 = vmatprep.subr.bf16.mxu0 0
  %1976 = vmatpush1.bf16.msra.mxu0 %v1545
  %1977 = vmatprep.subr.bf16.mxu0 0
  %1978 = vmatpush1.bf16.msra.mxu0 %v1546
  %1979 = vmatprep.mubr.bf16.mxu0 %v802
  %1980 = vmatmul.mubr.bf16.gmra.mrb[0].mxu0 %v801
  %v1981 = vpop.f32.mrb[0].mxu0
  %v1982 = vadd.f32 %v1862, %v1981
  %v1983 = vpop.f32.mrb[0].mxu0
  %v1984 = vpop.f32.mrb[0].mxu0
  %v1985 = vadd.f32 %v1865, %v1984
  %v1986 = vpop.f32.mrb[0].mxu0
  %1987 = vmatprep.mubr.bf16.mxu0 %v815
  %1988 = vmatmul.mubr.bf16.gmra.mrb[0].mxu0 %v814
  %v1989 = vpop.f32.mrb[0].mxu0
  %v1990 = vadd.f32 %v1870, %v1989
  %v1991 = vpop.f32.mrb[0].mxu0
  %v1992 = vpop.f32.mrb[0].mxu0
  %v1993 = vadd.f32 %v1873, %v1992
  %v1994 = vpop.f32.mrb[0].mxu0
  %1995 = vmatprep.mubr.bf16.mxu0 %v828
  %1996 = vmatmul.mubr.bf16.gmra.mrb[0].mxu0 %v827
  %v1997 = vpop.f32.mrb[0].mxu0
  %v1998 = vadd.f32 %v1878, %v1997
  %v1999 = vpop.f32.mrb[0].mxu0
  %v2000 = vpop.f32.mrb[0].mxu0
  %v2001 = vadd.f32 %v1881, %v2000
  %v2002 = vpop.f32.mrb[0].mxu0
  %2003 = vmatprep.mubr.bf16.mxu0 %v841
  %2004 = vmatmul.mubr.bf16.gmra.mrb[0].mxu0 %v840
  %v2005 = vpop.f32.mrb[0].mxu0
  %v2006 = vadd.f32 %v1886, %v2005
  %v2007 = vpop.f32.mrb[0].mxu0
  %v2008 = vpop.f32.mrb[0].mxu0
  %v2009 = vadd.f32 %v1889, %v2008
  %v2010 = vpop.f32.mrb[0].mxu0
  %2011 = vmatprep.mubr.bf16.mxu0 %v854
  %2012 = vmatmul.mubr.bf16.gmra.mrb[0].mxu0 %v853
  %v2013 = vpop.f32.mrb[0].mxu0
  %v2014 = vadd.f32 %v1894, %v2013
  %v2015 = vpop.f32.mrb[0].mxu0
  %v2016 = vpop.f32.mrb[0].mxu0
  %v2017 = vadd.f32 %v1897, %v2016
  %v2018 = vpop.f32.mrb[0].mxu0
  %2019 = vmatprep.mubr.bf16.mxu0 %v867
  %2020 = vmatmul.mubr.bf16.gmra.mrb[0].mxu0 %v866
  %v2021 = vpop.f32.mrb[0].mxu0
  %v2022 = vadd.f32 %v1902, %v2021
  %v2023 = vpop.f32.mrb[0].mxu0
  %v2024 = vpop.f32.mrb[0].mxu0
  %v2025 = vadd.f32 %v1905, %v2024
  %v2026 = vpop.f32.mrb[0].mxu0
  %2027 = vmatprep.mubr.bf16.mxu0 %v880
  %2028 = vmatmul.mubr.bf16.gmra.mrb[0].mxu0 %v879
  %v2029 = vpop.f32.mrb[0].mxu0
  %v2030 = vadd.f32 %v1910, %v2029
  %v2031 = vpop.f32.mrb[0].mxu0
  %v2032 = vpop.f32.mrb[0].mxu0
  %v2033 = vadd.f32 %v1913, %v2032
  %v2034 = vpop.f32.mrb[0].mxu0
  %2035 = vmatprep.mubr.bf16.mxu0 %v893
  %2036 = vmatmul.mubr.bf16.gmra.mrb[0].mxu0 %v892
  %v2037 = vpop.f32.mrb[0].mxu0
  %v2038 = vadd.f32 %v1918, %v2037
  %v2039 = vpop.f32.mrb[0].mxu0
  %v2040 = vpop.f32.mrb[0].mxu0
  %v2041 = vadd.f32 %v1921, %v2040
  %v2042 = vpop.f32.mrb[0].mxu0
  %2043 = vmatprep.mubr.bf16.mxu0 %v906
  %2044 = vmatmul.mubr.bf16.gmra.mrb[0].mxu0 %v905
  %v2045 = vpop.f32.mrb[0].mxu0
  %v2046 = vadd.f32 %v1926, %v2045
  %v2047 = vpop.f32.mrb[0].mxu0
  %v2048 = vpop.f32.mrb[0].mxu0
  %v2049 = vadd.f32 %v1929, %v2048
  %v2050 = vpop.f32.mrb[0].mxu0
  %2051 = vmatprep.mubr.bf16.mxu0 %v919
  %2052 = vmatmul.mubr.bf16.gmra.mrb[0].mxu0 %v918
  %v2053 = vpop.f32.mrb[0].mxu0
  %v2054 = vadd.f32 %v1934, %v2053
  %v2055 = vpop.f32.mrb[0].mxu0
  %v2056 = vpop.f32.mrb[0].mxu0
  %v2057 = vadd.f32 %v1937, %v2056
  %v2058 = vpop.f32.mrb[0].mxu0
  %2059 = vmatprep.mubr.bf16.mxu0 %v932
  %2060 = vmatmul.mubr.bf16.gmra.mrb[0].mxu0 %v931
  %v2061 = vpop.f32.mrb[0].mxu0
  %v2062 = vadd.f32 %v1942, %v2061
  %v2063 = vpop.f32.mrb[0].mxu0
  %v2064 = vpop.f32.mrb[0].mxu0
  %v2065 = vpop.f32.mrb[0].mxu0
  %2066 = vdwg.mxu0
  %2067 = vmatprep.subr.bf16.mxu0 0
  %2068 = vmatpush1.bf16.msra.mxu0 %v1547
  %2069 = vmatprep.subr.bf16.mxu0 0
  %2070 = vmatpush1.bf16.msra.mxu0 %v1548
  %2071 = vmatprep.subr.bf16.mxu0 0
  %2072 = vmatpush1.bf16.msra.mxu0 %v1549
  %2073 = vmatprep.subr.bf16.mxu0 0
  %2074 = vmatpush1.bf16.msra.mxu0 %v1550
  %2075 = vmatprep.subr.bf16.mxu0 0
  %2076 = vmatpush1.bf16.msra.mxu0 %v1551
  %2077 = vmatprep.subr.bf16.mxu0 0
  %2078 = vmatpush1.bf16.msra.mxu0 %v1552
  %2079 = vmatprep.subr.bf16.mxu0 0
  %2080 = vmatpush1.bf16.msra.mxu0 %v1553
  %2081 = vmatprep.subr.bf16.mxu0 0
  %2082 = vmatpush1.bf16.msra.mxu0 %v1554
  %2083 = vmatprep.subr.bf16.mxu0 0
  %2084 = vmatpush1.bf16.msra.mxu0 %v1555
  %2085 = vmatprep.subr.bf16.mxu0 0
  %2086 = vmatpush1.bf16.msra.mxu0 %v1556
  %2087 = vmatprep.subr.bf16.mxu0 0
  %2088 = vmatpush1.bf16.msra.mxu0 %v1557
  %2089 = vmatprep.subr.bf16.mxu0 0
  %2090 = vmatpush1.bf16.msra.mxu0 %v1558
  %2091 = vmatprep.subr.bf16.mxu0 0
  %2092 = vmatpush1.bf16.msra.mxu0 %v1559
  %2093 = vmatprep.subr.bf16.mxu0 0
  %2094 = vmatpush1.bf16.msra.mxu0 %v1560
  %2095 = vmatprep.subr.bf16.mxu0 0
  %2096 = vmatpush1.bf16.msra.mxu0 %v1561
  %2097 = vmatprep.subr.bf16.mxu0 0
  %2098 = vmatpush1.bf16.msra.mxu0 %v1562
  %2099 = vmatprep.mubr.bf16.mxu0 %v804
  %2100 = vmatmul.mubr.bf16.gmra.mrb[0].mxu0 %v803
  %v2101 = vpop.f32.mrb[0].mxu0
  %v2102 = vadd.f32 %v1982, %v2101
  %v2103 = vpop.f32.mrb[0].mxu0
  %v2104 = vpop.f32.mrb[0].mxu0
  %v2105 = vadd.f32 %v1985, %v2104
  %v2106 = vpop.f32.mrb[0].mxu0
  %2107 = vmatprep.mubr.bf16.mxu0 %v817
  %2108 = vmatmul.mubr.bf16.gmra.mrb[0].mxu0 %v816
  %v2109 = vpop.f32.mrb[0].mxu0
  %v2110 = vadd.f32 %v1990, %v2109
  %v2111 = vpop.f32.mrb[0].mxu0
  %v2112 = vpop.f32.mrb[0].mxu0
  %v2113 = vadd.f32 %v1993, %v2112
  %v2114 = vpop.f32.mrb[0].mxu0
  %2115 = vmatprep.mubr.bf16.mxu0 %v830
  %2116 = vmatmul.mubr.bf16.gmra.mrb[0].mxu0 %v829
  %v2117 = vpop.f32.mrb[0].mxu0
  %v2118 = vadd.f32 %v1998, %v2117
  %v2119 = vpop.f32.mrb[0].mxu0
  %v2120 = vpop.f32.mrb[0].mxu0
  %v2121 = vadd.f32 %v2001, %v2120
  %v2122 = vpop.f32.mrb[0].mxu0
  %2123 = vmatprep.mubr.bf16.mxu0 %v843
  %2124 = vmatmul.mubr.bf16.gmra.mrb[0].mxu0 %v842
  %v2125 = vpop.f32.mrb[0].mxu0
  %v2126 = vadd.f32 %v2006, %v2125
  %v2127 = vpop.f32.mrb[0].mxu0
  %v2128 = vpop.f32.mrb[0].mxu0
  %v2129 = vadd.f32 %v2009, %v2128
  %v2130 = vpop.f32.mrb[0].mxu0
  %2131 = vmatprep.mubr.bf16.mxu0 %v856
  %2132 = vmatmul.mubr.bf16.gmra.mrb[0].mxu0 %v855
  %v2133 = vpop.f32.mrb[0].mxu0
  %v2134 = vadd.f32 %v2014, %v2133
  %v2135 = vpop.f32.mrb[0].mxu0
  %v2136 = vpop.f32.mrb[0].mxu0
  %v2137 = vadd.f32 %v2017, %v2136
  %v2138 = vpop.f32.mrb[0].mxu0
  %2139 = vmatprep.mubr.bf16.mxu0 %v869
  %2140 = vmatmul.mubr.bf16.gmra.mrb[0].mxu0 %v868
  %v2141 = vpop.f32.mrb[0].mxu0
  %v2142 = vadd.f32 %v2022, %v2141
  %v2143 = vpop.f32.mrb[0].mxu0
  %v2144 = vpop.f32.mrb[0].mxu0
  %v2145 = vadd.f32 %v2025, %v2144
  %v2146 = vpop.f32.mrb[0].mxu0
  %2147 = vmatprep.mubr.bf16.mxu0 %v882
  %2148 = vmatmul.mubr.bf16.gmra.mrb[0].mxu0 %v881
  %v2149 = vpop.f32.mrb[0].mxu0
  %v2150 = vadd.f32 %v2030, %v2149
  %v2151 = vpop.f32.mrb[0].mxu0
  %v2152 = vpop.f32.mrb[0].mxu0
  %v2153 = vadd.f32 %v2033, %v2152
  %v2154 = vpop.f32.mrb[0].mxu0
  %2155 = vmatprep.mubr.bf16.mxu0 %v895
  %2156 = vmatmul.mubr.bf16.gmra.mrb[0].mxu0 %v894
  %v2157 = vpop.f32.mrb[0].mxu0
  %v2158 = vadd.f32 %v2038, %v2157
  %v2159 = vpop.f32.mrb[0].mxu0
  %v2160 = vpop.f32.mrb[0].mxu0
  %v2161 = vadd.f32 %v2041, %v2160
  %v2162 = vpop.f32.mrb[0].mxu0
  %2163 = vmatprep.mubr.bf16.mxu0 %v908
  %2164 = vmatmul.mubr.bf16.gmra.mrb[0].mxu0 %v907
  %v2165 = vpop.f32.mrb[0].mxu0
  %v2166 = vadd.f32 %v2046, %v2165
  %v2167 = vpop.f32.mrb[0].mxu0
  %v2168 = vpop.f32.mrb[0].mxu0
  %v2169 = vadd.f32 %v2049, %v2168
  %v2170 = vpop.f32.mrb[0].mxu0
  %2171 = vmatprep.mubr.bf16.mxu0 %v921
  %2172 = vmatmul.mubr.bf16.gmra.mrb[0].mxu0 %v920
  %v2173 = vpop.f32.mrb[0].mxu0
  %v2174 = vadd.f32 %v2054, %v2173
  %v2175 = vpop.f32.mrb[0].mxu0
  %v2176 = vpop.f32.mrb[0].mxu0
  %v2177 = vadd.f32 %v2057, %v2176
  %v2178 = vpop.f32.mrb[0].mxu0
  %2179 = vmatprep.mubr.bf16.mxu0 %v934
  %2180 = vmatmul.mubr.bf16.gmra.mrb[0].mxu0 %v933
  %v2181 = vpop.f32.mrb[0].mxu0
  %v2182 = vadd.f32 %v2062, %v2181
  %v2183 = vpop.f32.mrb[0].mxu0
  %v2184 = vpop.f32.mrb[0].mxu0
  %v2185 = vpop.f32.mrb[0].mxu0
  %2186 = vdwg.mxu0
  %2187 = vmatprep.subr.bf16.mxu0 0
  %2188 = vmatpush1.bf16.msra.mxu0 %v1563
  %2189 = vmatprep.subr.bf16.mxu0 0
  %2190 = vmatpush1.bf16.msra.mxu0 %v1564
  %2191 = vmatprep.subr.bf16.mxu0 0
  %2192 = vmatpush1.bf16.msra.mxu0 %v1565
  %2193 = vmatprep.subr.bf16.mxu0 0
  %2194 = vmatpush1.bf16.msra.mxu0 %v1566
  %2195 = vmatprep.subr.bf16.mxu0 0
  %2196 = vmatpush1.bf16.msra.mxu0 %v1567
  %2197 = vmatprep.subr.bf16.mxu0 0
  %2198 = vmatpush1.bf16.msra.mxu0 %v1568
  %2199 = vmatprep.subr.bf16.mxu0 0
  %2200 = vmatpush1.bf16.msra.mxu0 %v1569
  %2201 = vmatprep.subr.bf16.mxu0 0
  %2202 = vmatpush1.bf16.msra.mxu0 %v1570
  %2203 = vmatprep.subr.bf16.mxu0 0
  %2204 = vmatpush1.bf16.msra.mxu0 %v1571
  %2205 = vmatprep.subr.bf16.mxu0 0
  %2206 = vmatpush1.bf16.msra.mxu0 %v1572
  %2207 = vmatprep.subr.bf16.mxu0 0
  %2208 = vmatpush1.bf16.msra.mxu0 %v1573
  %2209 = vmatprep.subr.bf16.mxu0 0
  %2210 = vmatpush1.bf16.msra.mxu0 %v1574
  %2211 = vmatprep.subr.bf16.mxu0 0
  %2212 = vmatpush1.bf16.msra.mxu0 %v1575
  %2213 = vmatprep.subr.bf16.mxu0 0
  %2214 = vmatpush1.bf16.msra.mxu0 %v1576
  %2215 = vmatprep.subr.bf16.mxu0 0
  %2216 = vmatpush1.bf16.msra.mxu0 %v1577
  %2217 = vmatprep.subr.bf16.mxu0 0
  %2218 = vmatpush1.bf16.msra.mxu0 %v1578
  %2219 = vmatprep.mubr.bf16.mxu0 %v806
  %2220 = vmatmul.mubr.bf16.gmra.mrb[0].mxu0 %v805
  %v2221 = vpop.f32.mrb[0].mxu0
  %v2222 = vadd.f32 %v2102, %v2221
  %v2223 = vpop.f32.mrb[0].mxu0
  %v2224 = vpop.f32.mrb[0].mxu0
  %v2225 = vadd.f32 %v2105, %v2224
  %v2226 = vpop.f32.mrb[0].mxu0
  %2227 = vmatprep.mubr.bf16.mxu0 %v819
  %2228 = vmatmul.mubr.bf16.gmra.mrb[0].mxu0 %v818
  %v2229 = vpop.f32.mrb[0].mxu0
  %v2230 = vadd.f32 %v2110, %v2229
  %v2231 = vpop.f32.mrb[0].mxu0
  %v2232 = vpop.f32.mrb[0].mxu0
  %v2233 = vadd.f32 %v2113, %v2232
  %v2234 = vpop.f32.mrb[0].mxu0
  %2235 = vmatprep.mubr.bf16.mxu0 %v832
  %2236 = vmatmul.mubr.bf16.gmra.mrb[0].mxu0 %v831
  %v2237 = vpop.f32.mrb[0].mxu0
  %v2238 = vadd.f32 %v2118, %v2237
  %v2239 = vpop.f32.mrb[0].mxu0
  %v2240 = vpop.f32.mrb[0].mxu0
  %v2241 = vadd.f32 %v2121, %v2240
  %v2242 = vpop.f32.mrb[0].mxu0
  %2243 = vmatprep.mubr.bf16.mxu0 %v845
  %2244 = vmatmul.mubr.bf16.gmra.mrb[0].mxu0 %v844
  %v2245 = vpop.f32.mrb[0].mxu0
  %v2246 = vadd.f32 %v2126, %v2245
  %v2247 = vpop.f32.mrb[0].mxu0
  %v2248 = vpop.f32.mrb[0].mxu0
  %v2249 = vadd.f32 %v2129, %v2248
  %v2250 = vpop.f32.mrb[0].mxu0
  %2251 = vmatprep.mubr.bf16.mxu0 %v858
  %2252 = vmatmul.mubr.bf16.gmra.mrb[0].mxu0 %v857
  %v2253 = vpop.f32.mrb[0].mxu0
  %v2254 = vadd.f32 %v2134, %v2253
  %v2255 = vpop.f32.mrb[0].mxu0
  %v2256 = vpop.f32.mrb[0].mxu0
  %v2257 = vadd.f32 %v2137, %v2256
  %v2258 = vpop.f32.mrb[0].mxu0
  %2259 = vmatprep.mubr.bf16.mxu0 %v871
  %2260 = vmatmul.mubr.bf16.gmra.mrb[0].mxu0 %v870
  %v2261 = vpop.f32.mrb[0].mxu0
  %v2262 = vadd.f32 %v2142, %v2261
  %v2263 = vpop.f32.mrb[0].mxu0
  %v2264 = vpop.f32.mrb[0].mxu0
  %v2265 = vadd.f32 %v2145, %v2264
  %v2266 = vpop.f32.mrb[0].mxu0
  %2267 = vmatprep.mubr.bf16.mxu0 %v884
  %2268 = vmatmul.mubr.bf16.gmra.mrb[0].mxu0 %v883
  %v2269 = vpop.f32.mrb[0].mxu0
  %v2270 = vadd.f32 %v2150, %v2269
  %v2271 = vpop.f32.mrb[0].mxu0
  %v2272 = vpop.f32.mrb[0].mxu0
  %v2273 = vadd.f32 %v2153, %v2272
  %v2274 = vpop.f32.mrb[0].mxu0
  %2275 = vmatprep.mubr.bf16.mxu0 %v897
  %2276 = vmatmul.mubr.bf16.gmra.mrb[0].mxu0 %v896
  %v2277 = vpop.f32.mrb[0].mxu0
  %v2278 = vadd.f32 %v2158, %v2277
  %v2279 = vpop.f32.mrb[0].mxu0
  %v2280 = vpop.f32.mrb[0].mxu0
  %v2281 = vadd.f32 %v2161, %v2280
  %v2282 = vpop.f32.mrb[0].mxu0
  %2283 = vmatprep.mubr.bf16.mxu0 %v910
  %2284 = vmatmul.mubr.bf16.gmra.mrb[0].mxu0 %v909
  %v2285 = vpop.f32.mrb[0].mxu0
  %v2286 = vadd.f32 %v2166, %v2285
  %v2287 = vpop.f32.mrb[0].mxu0
  %v2288 = vpop.f32.mrb[0].mxu0
  %v2289 = vadd.f32 %v2169, %v2288
  %v2290 = vpop.f32.mrb[0].mxu0
  %2291 = vmatprep.mubr.bf16.mxu0 %v923
  %2292 = vmatmul.mubr.bf16.gmra.mrb[0].mxu0 %v922
  %v2293 = vpop.f32.mrb[0].mxu0
  %v2294 = vadd.f32 %v2174, %v2293
  %v2295 = vpop.f32.mrb[0].mxu0
  %v2296 = vpop.f32.mrb[0].mxu0
  %v2297 = vadd.f32 %v2177, %v2296
  %v2298 = vpop.f32.mrb[0].mxu0
  %2299 = vmatprep.mubr.bf16.mxu0 %v936
  %2300 = vmatmul.mubr.bf16.gmra.mrb[0].mxu0 %v935
  %v2301 = vpop.f32.mrb[0].mxu0
  %v2302 = vadd.f32 %v2182, %v2301
  %v2303 = vpop.f32.mrb[0].mxu0
  %v2304 = vpop.f32.mrb[0].mxu0
  %v2305 = vpop.f32.mrb[0].mxu0
  %2306 = vdwg.mxu0
  %2307 = vmatprep.subr.bf16.mxu0 0
  %2308 = vmatpush1.bf16.msra.mxu0 %v1579
  %2309 = vmatprep.subr.bf16.mxu0 0
  %2310 = vmatpush1.bf16.msra.mxu0 %v1580
  %2311 = vmatprep.subr.bf16.mxu0 0
  %2312 = vmatpush1.bf16.msra.mxu0 %v1581
  %2313 = vmatprep.subr.bf16.mxu0 0
  %2314 = vmatpush1.bf16.msra.mxu0 %v1582
  %2315 = vmatprep.subr.bf16.mxu0 0
  %2316 = vmatpush1.bf16.msra.mxu0 %v1583
  %2317 = vmatprep.subr.bf16.mxu0 0
  %2318 = vmatpush1.bf16.msra.mxu0 %v1584
  %2319 = vmatprep.subr.bf16.mxu0 0
  %2320 = vmatpush1.bf16.msra.mxu0 %v1585
  %2321 = vmatprep.subr.bf16.mxu0 0
  %2322 = vmatpush1.bf16.msra.mxu0 %v1586
  %2323 = vmatprep.subr.bf16.mxu0 0
  %2324 = vmatpush1.bf16.msra.mxu0 %v1587
  %2325 = vmatprep.subr.bf16.mxu0 0
  %2326 = vmatpush1.bf16.msra.mxu0 %v1588
  %2327 = vmatprep.subr.bf16.mxu0 0
  %2328 = vmatpush1.bf16.msra.mxu0 %v1589
  %2329 = vmatprep.subr.bf16.mxu0 0
  %2330 = vmatpush1.bf16.msra.mxu0 %v1590
  %2331 = vmatprep.subr.bf16.mxu0 0
  %2332 = vmatpush1.bf16.msra.mxu0 %v1591
  %2333 = vmatprep.subr.bf16.mxu0 0
  %2334 = vmatpush1.bf16.msra.mxu0 %v1592
  %2335 = vmatprep.subr.bf16.mxu0 0
  %2336 = vmatpush1.bf16.msra.mxu0 %v1593
  %2337 = vmatprep.subr.bf16.mxu0 0
  %2338 = vmatpush1.bf16.msra.mxu0 %v1594
  %2339 = vmatprep.mubr.bf16.mxu0 %v808
  %2340 = vmatmul.mubr.bf16.gmra.mrb[0].mxu0 %v807
  %v2341 = vpop.f32.mrb[0].mxu0
  %v2342 = vadd.f32 %v2222, %v2341
  %v2343 = vpop.f32.mrb[0].mxu0
  %v2344 = vpop.f32.mrb[0].mxu0
  %v2345 = vadd.f32 %v2225, %v2344
  %v2346 = vpop.f32.mrb[0].mxu0
  %2347 = vmatprep.mubr.bf16.mxu0 %v821
  %2348 = vmatmul.mubr.bf16.gmra.mrb[0].mxu0 %v820
  %v2349 = vpop.f32.mrb[0].mxu0
  %v2350 = vadd.f32 %v2230, %v2349
  %v2351 = vpop.f32.mrb[0].mxu0
  %v2352 = vpop.f32.mrb[0].mxu0
  %v2353 = vadd.f32 %v2233, %v2352
  %v2354 = vpop.f32.mrb[0].mxu0
  %2355 = vmatprep.mubr.bf16.mxu0 %v834
  %2356 = vmatmul.mubr.bf16.gmra.mrb[0].mxu0 %v833
  %v2357 = vpop.f32.mrb[0].mxu0
  %v2358 = vadd.f32 %v2238, %v2357
  %v2359 = vpop.f32.mrb[0].mxu0
  %v2360 = vpop.f32.mrb[0].mxu0
  %v2361 = vadd.f32 %v2241, %v2360
  %v2362 = vpop.f32.mrb[0].mxu0
  %2363 = vmatprep.mubr.bf16.mxu0 %v847
  %2364 = vmatmul.mubr.bf16.gmra.mrb[0].mxu0 %v846
  %v2365 = vpop.f32.mrb[0].mxu0
  %v2366 = vadd.f32 %v2246, %v2365
  %v2367 = vpop.f32.mrb[0].mxu0
  %v2368 = vpop.f32.mrb[0].mxu0
  %v2369 = vadd.f32 %v2249, %v2368
  %v2370 = vpop.f32.mrb[0].mxu0
  %2371 = vmatprep.mubr.bf16.mxu0 %v860
  %2372 = vmatmul.mubr.bf16.gmra.mrb[0].mxu0 %v859
  %v2373 = vpop.f32.mrb[0].mxu0
  %v2374 = vadd.f32 %v2254, %v2373
  %v2375 = vpop.f32.mrb[0].mxu0
  %v2376 = vpop.f32.mrb[0].mxu0
  %v2377 = vadd.f32 %v2257, %v2376
  %v2378 = vpop.f32.mrb[0].mxu0
  %2379 = vmatprep.mubr.bf16.mxu0 %v873
  %2380 = vmatmul.mubr.bf16.gmra.mrb[0].mxu0 %v872
  %v2381 = vpop.f32.mrb[0].mxu0
  %v2382 = vadd.f32 %v2262, %v2381
  %v2383 = vpop.f32.mrb[0].mxu0
  %v2384 = vpop.f32.mrb[0].mxu0
  %v2385 = vadd.f32 %v2265, %v2384
  %v2386 = vpop.f32.mrb[0].mxu0
  %2387 = vmatprep.mubr.bf16.mxu0 %v886
  %2388 = vmatmul.mubr.bf16.gmra.mrb[0].mxu0 %v885
  %v2389 = vpop.f32.mrb[0].mxu0
  %v2390 = vadd.f32 %v2270, %v2389
  %v2391 = vpop.f32.mrb[0].mxu0
  %v2392 = vpop.f32.mrb[0].mxu0
  %v2393 = vadd.f32 %v2273, %v2392
  %v2394 = vpop.f32.mrb[0].mxu0
  %2395 = vmatprep.mubr.bf16.mxu0 %v899
  %2396 = vmatmul.mubr.bf16.gmra.mrb[0].mxu0 %v898
  %v2397 = vpop.f32.mrb[0].mxu0
  %v2398 = vadd.f32 %v2278, %v2397
  %v2399 = vpop.f32.mrb[0].mxu0
  %v2400 = vpop.f32.mrb[0].mxu0
  %v2401 = vadd.f32 %v2281, %v2400
  %v2402 = vpop.f32.mrb[0].mxu0
  %2403 = vmatprep.mubr.bf16.mxu0 %v912
  %2404 = vmatmul.mubr.bf16.gmra.mrb[0].mxu0 %v911
  %v2405 = vpop.f32.mrb[0].mxu0
  %v2406 = vadd.f32 %v2286, %v2405
  %v2407 = vpop.f32.mrb[0].mxu0
  %v2408 = vpop.f32.mrb[0].mxu0
  %v2409 = vadd.f32 %v2289, %v2408
  %v2410 = vpop.f32.mrb[0].mxu0
  %2411 = vmatprep.mubr.bf16.mxu0 %v925
  %2412 = vmatmul.mubr.bf16.gmra.mrb[0].mxu0 %v924
  %v2413 = vpop.f32.mrb[0].mxu0
  %v2414 = vadd.f32 %v2294, %v2413
  %v2415 = vpop.f32.mrb[0].mxu0
  %v2416 = vpop.f32.mrb[0].mxu0
  %v2417 = vadd.f32 %v2297, %v2416
  %v2418 = vpop.f32.mrb[0].mxu0
  %2419 = vmatprep.mubr.bf16.mxu0 %v938
  %2420 = vmatmul.mubr.bf16.gmra.mrb[0].mxu0 %v937
  %v2421 = vpop.f32.mrb[0].mxu0
  %v2422 = vadd.f32 %v2302, %v2421
  %v2423 = vpop.f32.mrb[0].mxu0
  %v2424 = vpop.f32.mrb[0].mxu0
  %v2425 = vpop.f32.mrb[0].mxu0
  %2426 = vdwg.mxu0
  %2427 = vmatprep.subr.bf16.mxu0 0
  %2428 = vmatpush1.bf16.msra.mxu0 %v1595
  %2429 = vmatprep.subr.bf16.mxu0 0
  %2430 = vmatpush1.bf16.msra.mxu0 %v1596
  %2431 = vmatprep.subr.bf16.mxu0 0
  %2432 = vmatpush1.bf16.msra.mxu0 %v1597
  %2433 = vmatprep.subr.bf16.mxu0 0
  %2434 = vmatpush1.bf16.msra.mxu0 %v1598
  %2435 = vmatprep.subr.bf16.mxu0 0
  %2436 = vmatpush1.bf16.msra.mxu0 %v1599
  %2437 = vmatprep.subr.bf16.mxu0 0
  %2438 = vmatpush1.bf16.msra.mxu0 %v1600
  %2439 = vmatprep.subr.bf16.mxu0 0
  %2440 = vmatpush1.bf16.msra.mxu0 %v1601
  %2441 = vmatprep.subr.bf16.mxu0 0
  %2442 = vmatpush1.bf16.msra.mxu0 %v1602
  %2443 = vmatprep.subr.bf16.mxu0 0
  %2444 = vmatpush1.bf16.msra.mxu0 0
  %2445 = vmatprep.subr.bf16.mxu0 0
  %2446 = vmatpush1.bf16.msra.mxu0 0
  %2447 = vmatprep.subr.bf16.mxu0 0
  %2448 = vmatpush1.bf16.msra.mxu0 0
  %2449 = vmatprep.subr.bf16.mxu0 0
  %2450 = vmatpush1.bf16.msra.mxu0 0
  %2451 = vmatprep.subr.bf16.mxu0 0
  %2452 = vmatpush1.bf16.msra.mxu0 0
  %2453 = vmatprep.subr.bf16.mxu0 0
  %2454 = vmatpush1.bf16.msra.mxu0 0
  %2455 = vmatprep.subr.bf16.mxu0 0
  %2456 = vmatpush1.bf16.msra.mxu0 0
  %2457 = vmatprep.subr.bf16.mxu0 0
  %2458 = vmatpush1.bf16.msra.mxu0 0
  %2459 = vmatprep.mubr.bf16.mxu0 0
  %2460 = vmatmul.mubr.bf16.gmra.mrb[0].mxu0 %v809
  %v2461 = vpop.f32.mrb[0].mxu0
  %v2462 = vadd.f32 %v2342, %v2461
  %v2463 = vpop.f32.mrb[0].mxu0
  %v2464 = vpop.f32.mrb[0].mxu0
  %v2465 = vadd.f32 %v2345, %v2464
  %v2466 = vpop.f32.mrb[0].mxu0
  %2467 = vmatprep.mubr.bf16.mxu0 0
  %2468 = vmatmul.mubr.bf16.gmra.mrb[0].mxu0 %v822
  %v2469 = vpop.f32.mrb[0].mxu0
  %v2470 = vadd.f32 %v2350, %v2469
  %v2471 = vpop.f32.mrb[0].mxu0
  %v2472 = vpop.f32.mrb[0].mxu0
  %v2473 = vadd.f32 %v2353, %v2472
  %v2474 = vpop.f32.mrb[0].mxu0
  %2475 = vmatprep.mubr.bf16.mxu0 0
  %2476 = vmatmul.mubr.bf16.gmra.mrb[0].mxu0 %v835
  %v2477 = vpop.f32.mrb[0].mxu0
  %v2478 = vadd.f32 %v2358, %v2477
  %v2479 = vpop.f32.mrb[0].mxu0
  %v2480 = vpop.f32.mrb[0].mxu0
  %v2481 = vadd.f32 %v2361, %v2480
  %v2482 = vpop.f32.mrb[0].mxu0
  %2483 = vmatprep.mubr.bf16.mxu0 0
  %2484 = vmatmul.mubr.bf16.gmra.mrb[0].mxu0 %v848
  %v2485 = vpop.f32.mrb[0].mxu0
  %v2486 = vadd.f32 %v2366, %v2485
  %v2487 = vpop.f32.mrb[0].mxu0
  %v2488 = vpop.f32.mrb[0].mxu0
  %v2489 = vadd.f32 %v2369, %v2488
  %v2490 = vpop.f32.mrb[0].mxu0
  %2491 = vmatprep.mubr.bf16.mxu0 0
  %2492 = vmatmul.mubr.bf16.gmra.mrb[0].mxu0 %v861
  %v2493 = vpop.f32.mrb[0].mxu0
  %v2494 = vadd.f32 %v2374, %v2493
  %v2495 = vpop.f32.mrb[0].mxu0
  %v2496 = vpop.f32.mrb[0].mxu0
  %v2497 = vadd.f32 %v2377, %v2496
  %v2498 = vpop.f32.mrb[0].mxu0
  %2499 = vmatprep.mubr.bf16.mxu0 0
  %2500 = vmatmul.mubr.bf16.gmra.mrb[0].mxu0 %v874
  %v2501 = vpop.f32.mrb[0].mxu0
  %v2502 = vadd.f32 %v2382, %v2501
  %v2503 = vpop.f32.mrb[0].mxu0
  %v2504 = vpop.f32.mrb[0].mxu0
  %v2505 = vadd.f32 %v2385, %v2504
  %v2506 = vpop.f32.mrb[0].mxu0
  %2507 = vmatprep.mubr.bf16.mxu0 0
  %2508 = vmatmul.mubr.bf16.gmra.mrb[0].mxu0 %v887
  %v2509 = vpop.f32.mrb[0].mxu0
  %v2510 = vadd.f32 %v2390, %v2509
  %v2511 = vpop.f32.mrb[0].mxu0
  %v2512 = vpop.f32.mrb[0].mxu0
  %v2513 = vadd.f32 %v2393, %v2512
  %v2514 = vpop.f32.mrb[0].mxu0
  %2515 = vmatprep.mubr.bf16.mxu0 0
  %2516 = vmatmul.mubr.bf16.gmra.mrb[0].mxu0 %v900
  %v2517 = vpop.f32.mrb[0].mxu0
  %v2518 = vadd.f32 %v2398, %v2517
  %v2519 = vpop.f32.mrb[0].mxu0
  %v2520 = vpop.f32.mrb[0].mxu0
  %v2521 = vadd.f32 %v2401, %v2520
  %v2522 = vpop.f32.mrb[0].mxu0
  %2523 = vmatprep.mubr.bf16.mxu0 0
  %2524 = vmatmul.mubr.bf16.gmra.mrb[0].mxu0 %v913
  %v2525 = vpop.f32.mrb[0].mxu0
  %v2526 = vadd.f32 %v2406, %v2525
  %v2527 = vpop.f32.mrb[0].mxu0
  %v2528 = vpop.f32.mrb[0].mxu0
  %v2529 = vadd.f32 %v2409, %v2528
  %v2530 = vpop.f32.mrb[0].mxu0
  %2531 = vmatprep.mubr.bf16.mxu0 0
  %2532 = vmatmul.mubr.bf16.gmra.mrb[0].mxu0 %v926
  %v2533 = vpop.f32.mrb[0].mxu0
  %v2534 = vadd.f32 %v2414, %v2533
  %v2535 = vpop.f32.mrb[0].mxu0
  %v2536 = vpop.f32.mrb[0].mxu0
  %v2537 = vadd.f32 %v2417, %v2536
  %v2538 = vpop.f32.mrb[0].mxu0
  %2539 = vmatprep.mubr.bf16.mxu0 0
  %2540 = vmatmul.mubr.bf16.gmra.mrb[0].mxu0 %v939
  %v2541 = vpop.f32.mrb[0].mxu0
  %v2542 = vadd.f32 %v2422, %v2541
  %v2543 = vpop.f32.mrb[0].mxu0
  %v2544 = vpop.f32.mrb[0].mxu0
  %v2545 = vpop.f32.mrb[0].mxu0
  %2546 = vdwg.mxu0
  %v2547 = vmax.f32 %v2462, 0.0
  %v2548 = vmax.f32 %v2465, 0.0
  %v2549 = vmax.f32 %v2470, 0.0
  %v2550 = vmax.f32 %v2473, 0.0
  %v2551 = vmax.f32 %v2478, 0.0
  %v2552 = vmax.f32 %v2481, 0.0
  %v2553 = vmax.f32 %v2486, 0.0
  %v2554 = vmax.f32 %v2489, 0.0
  %v2555 = vmax.f32 %v2494, 0.0
  %v2556 = vmax.f32 %v2497, 0.0
  %v2557 = vmax.f32 %v2502, 0.0
  %v2558 = vmax.f32 %v2505, 0.0
  %v2559 = vmax.f32 %v2510, 0.0
  %v2560 = vmax.f32 %v2513, 0.0
  %v2561 = vmax.f32 %v2518, 0.0
  %v2562 = vmax.f32 %v2521, 0.0
  %v2563 = vmax.f32 %v2526, 0.0
  %v2564 = vmax.f32 %v2529, 0.0
  %v2565 = vmax.f32 %v2534, 0.0
  %v2566 = vmax.f32 %v2537, 0.0
  %v2567 = vmax.f32 %v2542, 0.0
  %2568 = vst [vmem:[%s3] sm:$0xff] %v2547
  %2569 = vst [vmem:[%s3 + $0x8] sm:$0xff] %v2548
  %2570 = vst [vmem:[%s3 + $0x10] sm:$0xff] %v2549
  %2571 = vst [vmem:[%s3 + $0x18] sm:$0xff] %v2550
  %2572 = vst [vmem:[%s3 + $0x20] sm:$0xff] %v2551
  %2573 = vst [vmem:[%s3 + $0x28] sm:$0xff] %v2552
  %2574 = vst [vmem:[%s3 + $0x30] sm:$0xff] %v2553
  %2575 = vst [vmem:[%s3 + $0x38] sm:$0xff] %v2554
  %2576 = vst [vmem:[%s3 + $0x40] sm:$0xff] %v2555
  %2577 = vst [vmem:[%s3 + $0x48] sm:$0xff] %v2556
  %2578 = vst [vmem:[%s3 + $0x50] sm:$0xff] %v2557
  %2579 = vst [vmem:[%s3 + $0x58] sm:$0xff] %v2558
  %2580 = vst [vmem:[%s3 + $0x60] sm:$0xff] %v2559
  %2581 = vst [vmem:[%s3 + $0x68] sm:$0xff] %v2560
  %2582 = vst [vmem:[%s3 + $0x70] sm:$0xff] %v2561
  %2583 = vst [vmem:[%s3 + $0x78] sm:$0xff] %v2562
  %2584 = vst [vmem:[%s3 + $0x80] sm:$0xff] %v2563
  %2585 = vst [vmem:[%s3 + $0x88] sm:$0xff] %v2564
  %2586 = vst [vmem:[%s3 + $0x90] sm:$0xff] %v2565
  %2587 = vst [vmem:[%s3 + $0x98] sm:$0xff] %v2566
  %2588 = vst [vmem:[%s3 + $0xa0] sm:$0xff] %v2567
  // Predicated region
  $region14: #{cnn_cifar_forward.7} parent=0 // pred_check
    _
  $region15: #{cnn_cifar_forward.7} parent=0 // pred_check_branch
    %2590 = sbr.rel (0) target = $region17
  $region16: #{cnn_cifar_forward.7} parent=0 // pred_region
    _
  $region17: #{cnn_cifar_forward.7} parent=0 // pred_fallthru
    _
  // Predicated region
  $region18: #{cnn_cifar_forward.7} parent=0 // pred_check
    _
  $region19: #{cnn_cifar_forward.7} parent=0 // pred_check_branch
    %2592 = sbr.rel (0) target = $region21
  $region20: #{cnn_cifar_forward.7} parent=0 // pred_region
    _
  $region21: #{cnn_cifar_forward.7} parent=0 // pred_fallthru
    _

// kernel: cnn_cifar_forward.8
$region0: #{cnn_cifar_forward.8}
  #allocation0 [shape = 'u32[]', space=smem, size = 0x4, offset = 0x4, fixed_abs, tag = 'smem constant byte address 0x4 - core index']
  #allocation1 [shape = 'u32[144,128]{1,0:T(1,128)}', space=vmem, size = 0x12000, scoped, tag = 'internal scratch']
  %s0 = inlined_call_operand.vmem [shape: f32[9,32,128], index: 0, kind: input, shape index: {}]
  %s1 = inlined_call_operand.vmem [shape: f32[32,128], index: 1, kind: output, shape index: {}]
  %s2 = sld [smem:[#allocation0]]
  $region14: #{cnn_cifar_forward.8} parent=0
    _
  %s4 = ssub.s32 1, %s2
  %s5 = scalar_select 0, %s4, %s2
  // Predicated region
  $region2: #{cnn_cifar_forward.8} parent=0 // pred_check
    _
  $region3: #{cnn_cifar_forward.8} parent=0 // pred_check_branch
    %7 = sbr.rel (0) target = $region5
  $region4: #{cnn_cifar_forward.8} parent=0 // pred_region
    _
  $region5: #{cnn_cifar_forward.8} parent=0 // pred_fallthru
    _
  %v8 = vld [vmem:[%s0] sm:$0xff]
  %v9 = vld [vmem:[%s0 + $0x8] sm:$0xff]
  %v10 = vld [vmem:[%s0 + $0x10] sm:$0xff]
  %v11 = vld [vmem:[%s0 + $0x18] sm:$0xff]
  %s12 = scalar_lea.vmem %s0, 32
  %v13 = vld [vmem:[%s12] sm:$0xff]
  %v14 = vld [vmem:[%s12 + $0x8] sm:$0xff]
  %v15 = vld [vmem:[%s12 + $0x10] sm:$0xff]
  %v16 = vld [vmem:[%s12 + $0x18] sm:$0xff]
  %v17 = vmax.f32 %v8, %v13
  %v18 = vmax.f32 %v9, %v14
  %v19 = vmax.f32 %v10, %v15
  %v20 = vmax.f32 %v11, %v16
  %s21 = scalar_lea.vmem %s0, 64
  %v22 = vld [vmem:[%s21] sm:$0xff]
  %v23 = vld [vmem:[%s21 + $0x8] sm:$0xff]
  %v24 = vld [vmem:[%s21 + $0x10] sm:$0xff]
  %v25 = vld [vmem:[%s21 + $0x18] sm:$0xff]
  %v26 = vmax.f32 %v17, %v22
  %v27 = vmax.f32 %v18, %v23
  %v28 = vmax.f32 %v19, %v24
  %v29 = vmax.f32 %v20, %v25
  %s30 = scalar_lea.vmem %s0, 96
  %v31 = vld [vmem:[%s30] sm:$0xff]
  %v32 = vld [vmem:[%s30 + $0x8] sm:$0xff]
  %v33 = vld [vmem:[%s30 + $0x10] sm:$0xff]
  %v34 = vld [vmem:[%s30 + $0x18] sm:$0xff]
  %v35 = vmax.f32 %v26, %v31
  %v36 = vmax.f32 %v27, %v32
  %v37 = vmax.f32 %v28, %v33
  %v38 = vmax.f32 %v29, %v34
  %s39 = scalar_lea.vmem %s0, 128
  %v40 = vld [vmem:[%s39] sm:$0xff]
  %v41 = vld [vmem:[%s39 + $0x8] sm:$0xff]
  %v42 = vld [vmem:[%s39 + $0x10] sm:$0xff]
  %v43 = vld [vmem:[%s39 + $0x18] sm:$0xff]
  %v44 = vmax.f32 %v35, %v40
  %v45 = vmax.f32 %v36, %v41
  %v46 = vmax.f32 %v37, %v42
  %v47 = vmax.f32 %v38, %v43
  %s48 = scalar_lea.vmem %s0, 160
  %v49 = vld [vmem:[%s48] sm:$0xff]
  %v50 = vld [vmem:[%s48 + $0x8] sm:$0xff]
  %v51 = vld [vmem:[%s48 + $0x10] sm:$0xff]
  %v52 = vld [vmem:[%s48 + $0x18] sm:$0xff]
  %v53 = vmax.f32 %v44, %v49
  %v54 = vmax.f32 %v45, %v50
  %v55 = vmax.f32 %v46, %v51
  %v56 = vmax.f32 %v47, %v52
  %s57 = scalar_lea.vmem %s0, 192
  %v58 = vld [vmem:[%s57] sm:$0xff]
  %v59 = vld [vmem:[%s57 + $0x8] sm:$0xff]
  %v60 = vld [vmem:[%s57 + $0x10] sm:$0xff]
  %v61 = vld [vmem:[%s57 + $0x18] sm:$0xff]
  %v62 = vmax.f32 %v53, %v58
  %v63 = vmax.f32 %v54, %v59
  %v64 = vmax.f32 %v55, %v60
  %v65 = vmax.f32 %v56, %v61
  %s66 = scalar_lea.vmem %s0, 224
  %v67 = vld [vmem:[%s66] sm:$0xff]
  %v68 = vld [vmem:[%s66 + $0x8] sm:$0xff]
  %v69 = vld [vmem:[%s66 + $0x10] sm:$0xff]
  %v70 = vld [vmem:[%s66 + $0x18] sm:$0xff]
  %v71 = vmax.f32 %v62, %v67
  %v72 = vmax.f32 %v63, %v68
  %v73 = vmax.f32 %v64, %v69
  %v74 = vmax.f32 %v65, %v70
  %s75 = scalar_lea.vmem %s0, 256
  %v76 = vld [vmem:[%s75] sm:$0xff]
  %v77 = vld [vmem:[%s75 + $0x8] sm:$0xff]
  %v78 = vld [vmem:[%s75 + $0x10] sm:$0xff]
  %v79 = vld [vmem:[%s75 + $0x18] sm:$0xff]
  %v80 = vmax.f32 %v71, %v76
  %v81 = vmax.f32 %v72, %v77
  %v82 = vmax.f32 %v73, %v78
  %v83 = vmax.f32 %v74, %v79
  %84 = vst [vmem:[%s1] sm:$0xff] %v80
  %85 = vst [vmem:[%s1 + $0x8] sm:$0xff] %v81
  %86 = vst [vmem:[%s1 + $0x10] sm:$0xff] %v82
  %87 = vst [vmem:[%s1 + $0x18] sm:$0xff] %v83
  // Predicated region
  $region6: #{cnn_cifar_forward.8} parent=0 // pred_check
    _
  $region7: #{cnn_cifar_forward.8} parent=0 // pred_check_branch
    %89 = sbr.rel (0) target = $region9
  $region8: #{cnn_cifar_forward.8} parent=0 // pred_region
    _
  $region9: #{cnn_cifar_forward.8} parent=0 // pred_fallthru
    _
  // Predicated region
  $region10: #{cnn_cifar_forward.8} parent=0 // pred_check
    _
  $region11: #{cnn_cifar_forward.8} parent=0 // pred_check_branch
    %91 = sbr.rel (0) target = $region13
  $region12: #{cnn_cifar_forward.8} parent=0 // pred_region
    _
  $region13: #{cnn_cifar_forward.8} parent=0 // pred_fallthru
    _

// kernel: cnn_cifar_forward.9
$region0: #{cnn_cifar_forward.9}
  #allocation0 [shape = 'u32[]', space=smem, size = 0x4, offset = 0x4, fixed_abs, tag = 'smem constant byte address 0x4 - core index']
  #allocation1 [shape = 'u32[144,128]{1,0:T(1,128)}', space=vmem, size = 0x12000, scoped, tag = 'internal scratch']
  %s0 = inlined_call_operand.vmem [shape: bf16[8,1024], index: 0, kind: input, shape index: {}]
  %s1 = inlined_call_operand.vmem [shape: bf16[1024,384], index: 1, kind: input, shape index: {}]
  %s2 = inlined_call_operand.vmem [shape: f32[1,384], index: 2, kind: input, shape index: {}]
  %s3 = inlined_call_operand.vmem [shape: bf16[384,192], index: 3, kind: input, shape index: {}]
  %s4 = inlined_call_operand.vmem [shape: f32[1,192], index: 4, kind: input, shape index: {}]
  %s5 = inlined_call_operand.vmem [shape: bf16[192,10], index: 5, kind: input, shape index: {}]
  %s6 = inlined_call_operand.vmem [shape: f32[1,10], index: 6, kind: input, shape index: {}]
  %s7 = inlined_call_operand.vmem [shape: f32[8,10], index: 7, kind: output, shape index: {}]
  %s8 = sld [smem:[#allocation0]]
  $region38: #{cnn_cifar_forward.9} parent=0
    _
  %s10 = ssub.s32 1, %s8
  %s11 = scalar_select 0, %s10, %s8
  // Predicated region
  $region2: #{cnn_cifar_forward.9} parent=0 // pred_check
    _
  $region3: #{cnn_cifar_forward.9} parent=0 // pred_check_branch
    %13 = sbr.rel (0) target = $region5
  $region4: #{cnn_cifar_forward.9} parent=0 // pred_region
    _
  $region5: #{cnn_cifar_forward.9} parent=0 // pred_fallthru
    _
  // Predicated region
  $region6: #{cnn_cifar_forward.9} parent=0 // pred_check
    _
  $region7: #{cnn_cifar_forward.9} parent=0 // pred_check_branch
    %15 = sbr.rel (0) target = $region9
  $region8: #{cnn_cifar_forward.9} parent=0 // pred_region
    _
  $region9: #{cnn_cifar_forward.9} parent=0 // pred_fallthru
    _
  // Predicated region
  $region10: #{cnn_cifar_forward.9} parent=0 // pred_check
    _
  $region11: #{cnn_cifar_forward.9} parent=0 // pred_check_branch
    %17 = sbr.rel (0) target = $region13
  $region12: #{cnn_cifar_forward.9} parent=0 // pred_region
    _
  $region13: #{cnn_cifar_forward.9} parent=0 // pred_fallthru
    _
  // Predicated region
  $region14: #{cnn_cifar_forward.9} parent=0 // pred_check
    _
  $region15: #{cnn_cifar_forward.9} parent=0 // pred_check_branch
    %19 = sbr.rel (0) target = $region17
  $region16: #{cnn_cifar_forward.9} parent=0 // pred_region
    _
  $region17: #{cnn_cifar_forward.9} parent=0 // pred_fallthru
    _
  // Predicated region
  $region18: #{cnn_cifar_forward.9} parent=0 // pred_check
    _
  $region19: #{cnn_cifar_forward.9} parent=0 // pred_check_branch
    %21 = sbr.rel (0) target = $region21
  $region20: #{cnn_cifar_forward.9} parent=0 // pred_region
    _
  $region21: #{cnn_cifar_forward.9} parent=0 // pred_fallthru
    _
  // Predicated region
  $region22: #{cnn_cifar_forward.9} parent=0 // pred_check
    _
  $region23: #{cnn_cifar_forward.9} parent=0 // pred_check_branch
    %23 = sbr.rel (0) target = $region25
  $region24: #{cnn_cifar_forward.9} parent=0 // pred_region
    _
  $region25: #{cnn_cifar_forward.9} parent=0 // pred_fallthru
    _
  // Predicated region
  $region26: #{cnn_cifar_forward.9} parent=0 // pred_check
    _
  $region27: #{cnn_cifar_forward.9} parent=0 // pred_check_branch
    %25 = sbr.rel (0) target = $region29
  $region28: #{cnn_cifar_forward.9} parent=0 // pred_region
    _
  $region29: #{cnn_cifar_forward.9} parent=0 // pred_fallthru
    _
  %v27 = vld [vmem:[%s0] sm:$0xff]
  %v28 = vld [vmem:[%s0 + $0x8] sm:$0xff]
  %v29 = vld [vmem:[%s0 + $0x10] sm:$0xff]
  %v30 = vld [vmem:[%s0 + $0x18] sm:$0xff]
  %v31 = vld [vmem:[%s1] sm:$0xff]
  %v32 = vld [vmem:[%s1 + $0x8] sm:$0xf]
  %v33 = vld [vmem:[%s1 + $0xc] sm:$0xff]
  %v34 = vld [vmem:[%s1 + $0x14] sm:$0xf]
  %v35 = vld [vmem:[%s1 + $0x18] sm:$0xff]
  %v36 = vld [vmem:[%s1 + $0x20] sm:$0xf]
  %v37 = vld [vmem:[%s1 + $0x24] sm:$0xff]
  %v38 = vld [vmem:[%s1 + $0x2c] sm:$0xf]
  %v39 = vld [vmem:[%s1 + $0x30] sm:$0xff]
  %v40 = vld [vmem:[%s1 + $0x38] sm:$0xf]
  %v41 = vld [vmem:[%s1 + $0x3c] sm:$0xff]
  %v42 = vld [vmem:[%s1 + $0x44] sm:$0xf]
  %v43 = vld [vmem:[%s1 + $0x48] sm:$0xff]
  %v44 = vld [vmem:[%s1 + $0x50] sm:$0xf]
  %v45 = vld [vmem:[%s1 + $0x54] sm:$0xff]
  %v46 = vld [vmem:[%s1 + $0x5c] sm:$0xf]
  %v47 = vld [vmem:[%s1 + $0x60] sm:$0xff]
  %v48 = vld [vmem:[%s1 + $0x68] sm:$0xf]
  %v49 = vld [vmem:[%s1 + $0x6c] sm:$0xff]
  %v50 = vld [vmem:[%s1 + $0x74] sm:$0xf]
  %v51 = vld [vmem:[%s1 + $0x78] sm:$0xff]
  %v52 = vld [vmem:[%s1 + $0x80] sm:$0xf]
  %v53 = vld [vmem:[%s1 + $0x84] sm:$0xff]
  %v54 = vld [vmem:[%s1 + $0x8c] sm:$0xf]
  %v55 = vld [vmem:[%s1 + $0x90] sm:$0xff]
  %v56 = vld [vmem:[%s1 + $0x98] sm:$0xf]
  %v57 = vld [vmem:[%s1 + $0x9c] sm:$0xff]
  %v58 = vld [vmem:[%s1 + $0xa4] sm:$0xf]
  %v59 = vld [vmem:[%s1 + $0xa8] sm:$0xff]
  %v60 = vld [vmem:[%s1 + $0xb0] sm:$0xf]
  %v61 = vld [vmem:[%s1 + $0xb4] sm:$0xff]
  %v62 = vld [vmem:[%s1 + $0xbc] sm:$0xf]
  %v63 = vld [vmem:[%s1 + $0xc0] sm:$0xff]
  %v64 = vld [vmem:[%s1 + $0xc8] sm:$0xf]
  %v65 = vld [vmem:[%s1 + $0xcc] sm:$0xff]
  %v66 = vld [vmem:[%s1 + $0xd4] sm:$0xf]
  %v67 = vld [vmem:[%s1 + $0xd8] sm:$0xff]
  %v68 = vld [vmem:[%s1 + $0xe0] sm:$0xf]
  %v69 = vld [vmem:[%s1 + $0xe4] sm:$0xff]
  %v70 = vld [vmem:[%s1 + $0xec] sm:$0xf]
  %v71 = vld [vmem:[%s1 + $0xf0] sm:$0xff]
  %v72 = vld [vmem:[%s1 + $0xf8] sm:$0xf]
  %v73 = vld [vmem:[%s1 + $0xfc] sm:$0xff]
  %v74 = vld [vmem:[%s1 + $0x104] sm:$0xf]
  %v75 = vld [vmem:[%s1 + $0x108] sm:$0xff]
  %v76 = vld [vmem:[%s1 + $0x110] sm:$0xf]
  %v77 = vld [vmem:[%s1 + $0x114] sm:$0xff]
  %v78 = vld [vmem:[%s1 + $0x11c] sm:$0xf]
  %v79 = vld [vmem:[%s1 + $0x120] sm:$0xff]
  %v80 = vld [vmem:[%s1 + $0x128] sm:$0xf]
  %v81 = vld [vmem:[%s1 + $0x12c] sm:$0xff]
  %v82 = vld [vmem:[%s1 + $0x134] sm:$0xf]
  %v83 = vld [vmem:[%s1 + $0x138] sm:$0xff]
  %v84 = vld [vmem:[%s1 + $0x140] sm:$0xf]
  %v85 = vld [vmem:[%s1 + $0x144] sm:$0xff]
  %v86 = vld [vmem:[%s1 + $0x14c] sm:$0xf]
  %v87 = vld [vmem:[%s1 + $0x150] sm:$0xff]
  %v88 = vld [vmem:[%s1 + $0x158] sm:$0xf]
  %v89 = vld [vmem:[%s1 + $0x15c] sm:$0xff]
  %v90 = vld [vmem:[%s1 + $0x164] sm:$0xf]
  %v91 = vld [vmem:[%s1 + $0x168] sm:$0xff]
  %v92 = vld [vmem:[%s1 + $0x170] sm:$0xf]
  %v93 = vld [vmem:[%s1 + $0x174] sm:$0xff]
  %v94 = vld [vmem:[%s1 + $0x17c] sm:$0xf]
  %v95 = vld [vmem:[%s1 + $0x180] sm:$0xff]
  %v96 = vld [vmem:[%s1 + $0x188] sm:$0xf]
  %v97 = vld [vmem:[%s1 + $0x18c] sm:$0xff]
  %v98 = vld [vmem:[%s1 + $0x194] sm:$0xf]
  %v99 = vld [vmem:[%s1 + $0x198] sm:$0xff]
  %v100 = vld [vmem:[%s1 + $0x1a0] sm:$0xf]
  %v101 = vld [vmem:[%s1 + $0x1a4] sm:$0xff]
  %v102 = vld [vmem:[%s1 + $0x1ac] sm:$0xf]
  %v103 = vld [vmem:[%s1 + $0x1b0] sm:$0xff]
  %v104 = vld [vmem:[%s1 + $0x1b8] sm:$0xf]
  %v105 = vld [vmem:[%s1 + $0x1bc] sm:$0xff]
  %v106 = vld [vmem:[%s1 + $0x1c4] sm:$0xf]
  %v107 = vld [vmem:[%s1 + $0x1c8] sm:$0xff]
  %v108 = vld [vmem:[%s1 + $0x1d0] sm:$0xf]
  %v109 = vld [vmem:[%s1 + $0x1d4] sm:$0xff]
  %v110 = vld [vmem:[%s1 + $0x1dc] sm:$0xf]
  %v111 = vld [vmem:[%s1 + $0x1e0] sm:$0xff]
  %v112 = vld [vmem:[%s1 + $0x1e8] sm:$0xf]
  %v113 = vld [vmem:[%s1 + $0x1ec] sm:$0xff]
  %v114 = vld [vmem:[%s1 + $0x1f4] sm:$0xf]
  %v115 = vld [vmem:[%s1 + $0x1f8] sm:$0xff]
  %v116 = vld [vmem:[%s1 + $0x200] sm:$0xf]
  %v117 = vld [vmem:[%s1 + $0x204] sm:$0xff]
  %v118 = vld [vmem:[%s1 + $0x20c] sm:$0xf]
  %v119 = vld [vmem:[%s1 + $0x210] sm:$0xff]
  %v120 = vld [vmem:[%s1 + $0x218] sm:$0xf]
  %v121 = vld [vmem:[%s1 + $0x21c] sm:$0xff]
  %v122 = vld [vmem:[%s1 + $0x224] sm:$0xf]
  %v123 = vld [vmem:[%s1 + $0x228] sm:$0xff]
  %v124 = vld [vmem:[%s1 + $0x230] sm:$0xf]
  %v125 = vld [vmem:[%s1 + $0x234] sm:$0xff]
  %v126 = vld [vmem:[%s1 + $0x23c] sm:$0xf]
  %v127 = vld [vmem:[%s1 + $0x240] sm:$0xff]
  %v128 = vld [vmem:[%s1 + $0x248] sm:$0xf]
  %v129 = vld [vmem:[%s1 + $0x24c] sm:$0xff]
  %v130 = vld [vmem:[%s1 + $0x254] sm:$0xf]
  %v131 = vld [vmem:[%s1 + $0x258] sm:$0xff]
  %v132 = vld [vmem:[%s1 + $0x260] sm:$0xf]
  %v133 = vld [vmem:[%s1 + $0x264] sm:$0xff]
  %v134 = vld [vmem:[%s1 + $0x26c] sm:$0xf]
  %v135 = vld [vmem:[%s1 + $0x270] sm:$0xff]
  %v136 = vld [vmem:[%s1 + $0x278] sm:$0xf]
  %v137 = vld [vmem:[%s1 + $0x27c] sm:$0xff]
  %v138 = vld [vmem:[%s1 + $0x284] sm:$0xf]
  %v139 = vld [vmem:[%s1 + $0x288] sm:$0xff]
  %v140 = vld [vmem:[%s1 + $0x290] sm:$0xf]
  %v141 = vld [vmem:[%s1 + $0x294] sm:$0xff]
  %v142 = vld [vmem:[%s1 + $0x29c] sm:$0xf]
  %v143 = vld [vmem:[%s1 + $0x2a0] sm:$0xff]
  %v144 = vld [vmem:[%s1 + $0x2a8] sm:$0xf]
  %v145 = vld [vmem:[%s1 + $0x2ac] sm:$0xff]
  %v146 = vld [vmem:[%s1 + $0x2b4] sm:$0xf]
  %v147 = vld [vmem:[%s1 + $0x2b8] sm:$0xff]
  %v148 = vld [vmem:[%s1 + $0x2c0] sm:$0xf]
  %v149 = vld [vmem:[%s1 + $0x2c4] sm:$0xff]
  %v150 = vld [vmem:[%s1 + $0x2cc] sm:$0xf]
  %v151 = vld [vmem:[%s1 + $0x2d0] sm:$0xff]
  %v152 = vld [vmem:[%s1 + $0x2d8] sm:$0xf]
  %v153 = vld [vmem:[%s1 + $0x2dc] sm:$0xff]
  %v154 = vld [vmem:[%s1 + $0x2e4] sm:$0xf]
  %v155 = vld [vmem:[%s1 + $0x2e8] sm:$0xff]
  %v156 = vld [vmem:[%s1 + $0x2f0] sm:$0xf]
  %v157 = vld [vmem:[%s1 + $0x2f4] sm:$0xff]
  %v158 = vld [vmem:[%s1 + $0x2fc] sm:$0xf]
  %v159 = vld [vmem:[%s1 + $0x300] sm:$0xff]
  %v160 = vld [vmem:[%s1 + $0x308] sm:$0xf]
  %v161 = vld [vmem:[%s1 + $0x30c] sm:$0xff]
  %v162 = vld [vmem:[%s1 + $0x314] sm:$0xf]
  %v163 = vld [vmem:[%s1 + $0x318] sm:$0xff]
  %v164 = vld [vmem:[%s1 + $0x320] sm:$0xf]
  %v165 = vld [vmem:[%s1 + $0x324] sm:$0xff]
  %v166 = vld [vmem:[%s1 + $0x32c] sm:$0xf]
  %v167 = vld [vmem:[%s1 + $0x330] sm:$0xff]
  %v168 = vld [vmem:[%s1 + $0x338] sm:$0xf]
  %v169 = vld [vmem:[%s1 + $0x33c] sm:$0xff]
  %v170 = vld [vmem:[%s1 + $0x344] sm:$0xf]
  %v171 = vld [vmem:[%s1 + $0x348] sm:$0xff]
  %v172 = vld [vmem:[%s1 + $0x350] sm:$0xf]
  %v173 = vld [vmem:[%s1 + $0x354] sm:$0xff]
  %v174 = vld [vmem:[%s1 + $0x35c] sm:$0xf]
  %v175 = vld [vmem:[%s1 + $0x360] sm:$0xff]
  %v176 = vld [vmem:[%s1 + $0x368] sm:$0xf]
  %v177 = vld [vmem:[%s1 + $0x36c] sm:$0xff]
  %v178 = vld [vmem:[%s1 + $0x374] sm:$0xf]
  %v179 = vld [vmem:[%s1 + $0x378] sm:$0xff]
  %v180 = vld [vmem:[%s1 + $0x380] sm:$0xf]
  %v181 = vld [vmem:[%s1 + $0x384] sm:$0xff]
  %v182 = vld [vmem:[%s1 + $0x38c] sm:$0xf]
  %v183 = vld [vmem:[%s1 + $0x390] sm:$0xff]
  %v184 = vld [vmem:[%s1 + $0x398] sm:$0xf]
  %v185 = vld [vmem:[%s1 + $0x39c] sm:$0xff]
  %v186 = vld [vmem:[%s1 + $0x3a4] sm:$0xf]
  %v187 = vld [vmem:[%s1 + $0x3a8] sm:$0xff]
  %v188 = vld [vmem:[%s1 + $0x3b0] sm:$0xf]
  %v189 = vld [vmem:[%s1 + $0x3b4] sm:$0xff]
  %v190 = vld [vmem:[%s1 + $0x3bc] sm:$0xf]
  %v191 = vld [vmem:[%s1 + $0x3c0] sm:$0xff]
  %v192 = vld [vmem:[%s1 + $0x3c8] sm:$0xf]
  %v193 = vld [vmem:[%s1 + $0x3cc] sm:$0xff]
  %v194 = vld [vmem:[%s1 + $0x3d4] sm:$0xf]
  %v195 = vld [vmem:[%s1 + $0x3d8] sm:$0xff]
  %v196 = vld [vmem:[%s1 + $0x3e0] sm:$0xf]
  %v197 = vld [vmem:[%s1 + $0x3e4] sm:$0xff]
  %v198 = vld [vmem:[%s1 + $0x3ec] sm:$0xf]
  %v199 = vld [vmem:[%s1 + $0x3f0] sm:$0xff]
  %v200 = vld [vmem:[%s1 + $0x3f8] sm:$0xf]
  %v201 = vld [vmem:[%s1 + $0x3fc] sm:$0xff]
  %v202 = vld [vmem:[%s1 + $0x404] sm:$0xf]
  %v203 = vld [vmem:[%s1 + $0x408] sm:$0xff]
  %v204 = vld [vmem:[%s1 + $0x410] sm:$0xf]
  %v205 = vld [vmem:[%s1 + $0x414] sm:$0xff]
  %v206 = vld [vmem:[%s1 + $0x41c] sm:$0xf]
  %v207 = vld [vmem:[%s1 + $0x420] sm:$0xff]
  %v208 = vld [vmem:[%s1 + $0x428] sm:$0xf]
  %v209 = vld [vmem:[%s1 + $0x42c] sm:$0xff]
  %v210 = vld [vmem:[%s1 + $0x434] sm:$0xf]
  %v211 = vld [vmem:[%s1 + $0x438] sm:$0xff]
  %v212 = vld [vmem:[%s1 + $0x440] sm:$0xf]
  %v213 = vld [vmem:[%s1 + $0x444] sm:$0xff]
  %v214 = vld [vmem:[%s1 + $0x44c] sm:$0xf]
  %v215 = vld [vmem:[%s1 + $0x450] sm:$0xff]
  %v216 = vld [vmem:[%s1 + $0x458] sm:$0xf]
  %v217 = vld [vmem:[%s1 + $0x45c] sm:$0xff]
  %v218 = vld [vmem:[%s1 + $0x464] sm:$0xf]
  %v219 = vld [vmem:[%s1 + $0x468] sm:$0xff]
  %v220 = vld [vmem:[%s1 + $0x470] sm:$0xf]
  %v221 = vld [vmem:[%s1 + $0x474] sm:$0xff]
  %v222 = vld [vmem:[%s1 + $0x47c] sm:$0xf]
  %v223 = vld [vmem:[%s1 + $0x480] sm:$0xff]
  %v224 = vld [vmem:[%s1 + $0x488] sm:$0xf]
  %v225 = vld [vmem:[%s1 + $0x48c] sm:$0xff]
  %v226 = vld [vmem:[%s1 + $0x494] sm:$0xf]
  %v227 = vld [vmem:[%s1 + $0x498] sm:$0xff]
  %v228 = vld [vmem:[%s1 + $0x4a0] sm:$0xf]
  %v229 = vld [vmem:[%s1 + $0x4a4] sm:$0xff]
  %v230 = vld [vmem:[%s1 + $0x4ac] sm:$0xf]
  %v231 = vld [vmem:[%s1 + $0x4b0] sm:$0xff]
  %v232 = vld [vmem:[%s1 + $0x4b8] sm:$0xf]
  %v233 = vld [vmem:[%s1 + $0x4bc] sm:$0xff]
  %v234 = vld [vmem:[%s1 + $0x4c4] sm:$0xf]
  %v235 = vld [vmem:[%s1 + $0x4c8] sm:$0xff]
  %v236 = vld [vmem:[%s1 + $0x4d0] sm:$0xf]
  %v237 = vld [vmem:[%s1 + $0x4d4] sm:$0xff]
  %v238 = vld [vmem:[%s1 + $0x4dc] sm:$0xf]
  %v239 = vld [vmem:[%s1 + $0x4e0] sm:$0xff]
  %v240 = vld [vmem:[%s1 + $0x4e8] sm:$0xf]
  %v241 = vld [vmem:[%s1 + $0x4ec] sm:$0xff]
  %v242 = vld [vmem:[%s1 + $0x4f4] sm:$0xf]
  %v243 = vld [vmem:[%s1 + $0x4f8] sm:$0xff]
  %v244 = vld [vmem:[%s1 + $0x500] sm:$0xf]
  %v245 = vld [vmem:[%s1 + $0x504] sm:$0xff]
  %v246 = vld [vmem:[%s1 + $0x50c] sm:$0xf]
  %v247 = vld [vmem:[%s1 + $0x510] sm:$0xff]
  %v248 = vld [vmem:[%s1 + $0x518] sm:$0xf]
  %v249 = vld [vmem:[%s1 + $0x51c] sm:$0xff]
  %v250 = vld [vmem:[%s1 + $0x524] sm:$0xf]
  %v251 = vld [vmem:[%s1 + $0x528] sm:$0xff]
  %v252 = vld [vmem:[%s1 + $0x530] sm:$0xf]
  %v253 = vld [vmem:[%s1 + $0x534] sm:$0xff]
  %v254 = vld [vmem:[%s1 + $0x53c] sm:$0xf]
  %v255 = vld [vmem:[%s1 + $0x540] sm:$0xff]
  %v256 = vld [vmem:[%s1 + $0x548] sm:$0xf]
  %v257 = vld [vmem:[%s1 + $0x54c] sm:$0xff]
  %v258 = vld [vmem:[%s1 + $0x554] sm:$0xf]
  %v259 = vld [vmem:[%s1 + $0x558] sm:$0xff]
  %v260 = vld [vmem:[%s1 + $0x560] sm:$0xf]
  %v261 = vld [vmem:[%s1 + $0x564] sm:$0xff]
  %v262 = vld [vmem:[%s1 + $0x56c] sm:$0xf]
  %v263 = vld [vmem:[%s1 + $0x570] sm:$0xff]
  %v264 = vld [vmem:[%s1 + $0x578] sm:$0xf]
  %v265 = vld [vmem:[%s1 + $0x57c] sm:$0xff]
  %v266 = vld [vmem:[%s1 + $0x584] sm:$0xf]
  %v267 = vld [vmem:[%s1 + $0x588] sm:$0xff]
  %v268 = vld [vmem:[%s1 + $0x590] sm:$0xf]
  %v269 = vld [vmem:[%s1 + $0x594] sm:$0xff]
  %v270 = vld [vmem:[%s1 + $0x59c] sm:$0xf]
  %v271 = vld [vmem:[%s1 + $0x5a0] sm:$0xff]
  %v272 = vld [vmem:[%s1 + $0x5a8] sm:$0xf]
  %v273 = vld [vmem:[%s1 + $0x5ac] sm:$0xff]
  %v274 = vld [vmem:[%s1 + $0x5b4] sm:$0xf]
  %v275 = vld [vmem:[%s1 + $0x5b8] sm:$0xff]
  %v276 = vld [vmem:[%s1 + $0x5c0] sm:$0xf]
  %v277 = vld [vmem:[%s1 + $0x5c4] sm:$0xff]
  %v278 = vld [vmem:[%s1 + $0x5cc] sm:$0xf]
  %v279 = vld [vmem:[%s1 + $0x5d0] sm:$0xff]
  %v280 = vld [vmem:[%s1 + $0x5d8] sm:$0xf]
  %v281 = vld [vmem:[%s1 + $0x5dc] sm:$0xff]
  %v282 = vld [vmem:[%s1 + $0x5e4] sm:$0xf]
  %v283 = vld [vmem:[%s1 + $0x5e8] sm:$0xff]
  %v284 = vld [vmem:[%s1 + $0x5f0] sm:$0xf]
  %v285 = vld [vmem:[%s1 + $0x5f4] sm:$0xff]
  %v286 = vld [vmem:[%s1 + $0x5fc] sm:$0xf]
  %v287 = vld [vmem:[%s2] sm:$0x7]
  %v289 = vlaneseq
  %v290 = vshrl.u32 %v289, 7
  %v291 = vsub.s32 0, %v290
  %v292 = vrot.slane %v287, %v291
  %v293 = vlaneseq
  %v294 = vshrl.u32 %v293, 7
  %v295 = vsub.s32 1, %v294
  %v296 = vrot.slane %v287, %v295
  %v297 = vlaneseq
  %v298 = vshrl.u32 %v297, 7
  %v299 = vsub.s32 2, %v298
  %v300 = vrot.slane %v287, %v299
  %v308 = vunpack.c.l.b16 %v27
  %v309 = vunpack.c.h.b16 %v27
  %v310 = vunpack.c.l.b16 %v28
  %v311 = vunpack.c.h.b16 %v28
  %v312 = vunpack.c.l.b16 %v29
  %v313 = vunpack.c.h.b16 %v29
  %v314 = vunpack.c.l.b16 %v30
  %v315 = vunpack.c.h.b16 %v30
  %v316 = vpack.c.b16 %v308, %v308
  %v317 = vpack.c.b16 %v309, %v309
  %v318 = vpack.c.b16 %v310, %v310
  %v319 = vpack.c.b16 %v311, %v311
  %v320 = vpack.c.b16 %v312, %v312
  %v321 = vpack.c.b16 %v313, %v313
  %v322 = vpack.c.b16 %v314, %v314
  %v323 = vpack.c.b16 %v315, %v315
  %v588 = vunpack.c.l.b16 %v31
  %v589 = vunpack.c.h.b16 %v31
  %v590 = vunpack.c.l.b16 %v32
  %v591 = vunpack.c.l.b16 %v33
  %v592 = vunpack.c.h.b16 %v33
  %v593 = vunpack.c.l.b16 %v34
  %v594 = vunpack.c.l.b16 %v35
  %v595 = vunpack.c.h.b16 %v35
  %v596 = vunpack.c.l.b16 %v36
  %v597 = vunpack.c.l.b16 %v37
  %v598 = vunpack.c.h.b16 %v37
  %v599 = vunpack.c.l.b16 %v38
  %v600 = vunpack.c.l.b16 %v39
  %v601 = vunpack.c.h.b16 %v39
  %v602 = vunpack.c.l.b16 %v40
  %v603 = vunpack.c.l.b16 %v41
  %v604 = vunpack.c.h.b16 %v41
  %v605 = vunpack.c.l.b16 %v42
  %v606 = vunpack.c.l.b16 %v43
  %v607 = vunpack.c.h.b16 %v43
  %v608 = vunpack.c.l.b16 %v44
  %v609 = vunpack.c.l.b16 %v45
  %v610 = vunpack.c.h.b16 %v45
  %v611 = vunpack.c.l.b16 %v46
  %v612 = vunpack.c.l.b16 %v47
  %v613 = vunpack.c.h.b16 %v47
  %v614 = vunpack.c.l.b16 %v48
  %v615 = vunpack.c.l.b16 %v49
  %v616 = vunpack.c.h.b16 %v49
  %v617 = vunpack.c.l.b16 %v50
  %v618 = vunpack.c.l.b16 %v51
  %v619 = vunpack.c.h.b16 %v51
  %v620 = vunpack.c.l.b16 %v52
  %v621 = vunpack.c.l.b16 %v53
  %v622 = vunpack.c.h.b16 %v53
  %v623 = vunpack.c.l.b16 %v54
  %v624 = vunpack.c.l.b16 %v55
  %v625 = vunpack.c.h.b16 %v55
  %v626 = vunpack.c.l.b16 %v56
  %v627 = vunpack.c.l.b16 %v57
  %v628 = vunpack.c.h.b16 %v57
  %v629 = vunpack.c.l.b16 %v58
  %v630 = vunpack.c.l.b16 %v59
  %v631 = vunpack.c.h.b16 %v59
  %v632 = vunpack.c.l.b16 %v60
  %v633 = vunpack.c.l.b16 %v61
  %v634 = vunpack.c.h.b16 %v61
  %v635 = vunpack.c.l.b16 %v62
  %v636 = vunpack.c.l.b16 %v63
  %v637 = vunpack.c.h.b16 %v63
  %v638 = vunpack.c.l.b16 %v64
  %v639 = vunpack.c.l.b16 %v65
  %v640 = vunpack.c.h.b16 %v65
  %v641 = vunpack.c.l.b16 %v66
  %v642 = vunpack.c.l.b16 %v67
  %v643 = vunpack.c.h.b16 %v67
  %v644 = vunpack.c.l.b16 %v68
  %v645 = vunpack.c.l.b16 %v69
  %v646 = vunpack.c.h.b16 %v69
  %v647 = vunpack.c.l.b16 %v70
  %v648 = vunpack.c.l.b16 %v71
  %v649 = vunpack.c.h.b16 %v71
  %v650 = vunpack.c.l.b16 %v72
  %v651 = vunpack.c.l.b16 %v73
  %v652 = vunpack.c.h.b16 %v73
  %v653 = vunpack.c.l.b16 %v74
  %v654 = vunpack.c.l.b16 %v75
  %v655 = vunpack.c.h.b16 %v75
  %v656 = vunpack.c.l.b16 %v76
  %v657 = vunpack.c.l.b16 %v77
  %v658 = vunpack.c.h.b16 %v77
  %v659 = vunpack.c.l.b16 %v78
  %v660 = vunpack.c.l.b16 %v79
  %v661 = vunpack.c.h.b16 %v79
  %v662 = vunpack.c.l.b16 %v80
  %v663 = vunpack.c.l.b16 %v81
  %v664 = vunpack.c.h.b16 %v81
  %v665 = vunpack.c.l.b16 %v82
  %v666 = vunpack.c.l.b16 %v83
  %v667 = vunpack.c.h.b16 %v83
  %v668 = vunpack.c.l.b16 %v84
  %v669 = vunpack.c.l.b16 %v85
  %v670 = vunpack.c.h.b16 %v85
  %v671 = vunpack.c.l.b16 %v86
  %v672 = vunpack.c.l.b16 %v87
  %v673 = vunpack.c.h.b16 %v87
  %v674 = vunpack.c.l.b16 %v88
  %v675 = vunpack.c.l.b16 %v89
  %v676 = vunpack.c.h.b16 %v89
  %v677 = vunpack.c.l.b16 %v90
  %v678 = vunpack.c.l.b16 %v91
  %v679 = vunpack.c.h.b16 %v91
  %v680 = vunpack.c.l.b16 %v92
  %v681 = vunpack.c.l.b16 %v93
  %v682 = vunpack.c.h.b16 %v93
  %v683 = vunpack.c.l.b16 %v94
  %v684 = vunpack.c.l.b16 %v95
  %v685 = vunpack.c.h.b16 %v95
  %v686 = vunpack.c.l.b16 %v96
  %v687 = vunpack.c.l.b16 %v97
  %v688 = vunpack.c.h.b16 %v97
  %v689 = vunpack.c.l.b16 %v98
  %v690 = vunpack.c.l.b16 %v99
  %v691 = vunpack.c.h.b16 %v99
  %v692 = vunpack.c.l.b16 %v100
  %v693 = vunpack.c.l.b16 %v101
  %v694 = vunpack.c.h.b16 %v101
  %v695 = vunpack.c.l.b16 %v102
  %v696 = vunpack.c.l.b16 %v103
  %v697 = vunpack.c.h.b16 %v103
  %v698 = vunpack.c.l.b16 %v104
  %v699 = vunpack.c.l.b16 %v105
  %v700 = vunpack.c.h.b16 %v105
  %v701 = vunpack.c.l.b16 %v106
  %v702 = vunpack.c.l.b16 %v107
  %v703 = vunpack.c.h.b16 %v107
  %v704 = vunpack.c.l.b16 %v108
  %v705 = vunpack.c.l.b16 %v109
  %v706 = vunpack.c.h.b16 %v109
  %v707 = vunpack.c.l.b16 %v110
  %v708 = vunpack.c.l.b16 %v111
  %v709 = vunpack.c.h.b16 %v111
  %v710 = vunpack.c.l.b16 %v112
  %v711 = vunpack.c.l.b16 %v113
  %v712 = vunpack.c.h.b16 %v113
  %v713 = vunpack.c.l.b16 %v114
  %v714 = vunpack.c.l.b16 %v115
  %v715 = vunpack.c.h.b16 %v115
  %v716 = vunpack.c.l.b16 %v116
  %v717 = vunpack.c.l.b16 %v117
  %v718 = vunpack.c.h.b16 %v117
  %v719 = vunpack.c.l.b16 %v118
  %v720 = vunpack.c.l.b16 %v119
  %v721 = vunpack.c.h.b16 %v119
  %v722 = vunpack.c.l.b16 %v120
  %v723 = vunpack.c.l.b16 %v121
  %v724 = vunpack.c.h.b16 %v121
  %v725 = vunpack.c.l.b16 %v122
  %v726 = vunpack.c.l.b16 %v123
  %v727 = vunpack.c.h.b16 %v123
  %v728 = vunpack.c.l.b16 %v124
  %v729 = vunpack.c.l.b16 %v125
  %v730 = vunpack.c.h.b16 %v125
  %v731 = vunpack.c.l.b16 %v126
  %v732 = vunpack.c.l.b16 %v127
  %v733 = vunpack.c.h.b16 %v127
  %v734 = vunpack.c.l.b16 %v128
  %v735 = vunpack.c.l.b16 %v129
  %v736 = vunpack.c.h.b16 %v129
  %v737 = vunpack.c.l.b16 %v130
  %v738 = vunpack.c.l.b16 %v131
  %v739 = vunpack.c.h.b16 %v131
  %v740 = vunpack.c.l.b16 %v132
  %v741 = vunpack.c.l.b16 %v133
  %v742 = vunpack.c.h.b16 %v133
  %v743 = vunpack.c.l.b16 %v134
  %v744 = vunpack.c.l.b16 %v135
  %v745 = vunpack.c.h.b16 %v135
  %v746 = vunpack.c.l.b16 %v136
  %v747 = vunpack.c.l.b16 %v137
  %v748 = vunpack.c.h.b16 %v137
  %v749 = vunpack.c.l.b16 %v138
  %v750 = vunpack.c.l.b16 %v139
  %v751 = vunpack.c.h.b16 %v139
  %v752 = vunpack.c.l.b16 %v140
  %v753 = vunpack.c.l.b16 %v141
  %v754 = vunpack.c.h.b16 %v141
  %v755 = vunpack.c.l.b16 %v142
  %v756 = vunpack.c.l.b16 %v143
  %v757 = vunpack.c.h.b16 %v143
  %v758 = vunpack.c.l.b16 %v144
  %v759 = vunpack.c.l.b16 %v145
  %v760 = vunpack.c.h.b16 %v145
  %v761 = vunpack.c.l.b16 %v146
  %v762 = vunpack.c.l.b16 %v147
  %v763 = vunpack.c.h.b16 %v147
  %v764 = vunpack.c.l.b16 %v148
  %v765 = vunpack.c.l.b16 %v149
  %v766 = vunpack.c.h.b16 %v149
  %v767 = vunpack.c.l.b16 %v150
  %v768 = vunpack.c.l.b16 %v151
  %v769 = vunpack.c.h.b16 %v151
  %v770 = vunpack.c.l.b16 %v152
  %v771 = vunpack.c.l.b16 %v153
  %v772 = vunpack.c.h.b16 %v153
  %v773 = vunpack.c.l.b16 %v154
  %v774 = vunpack.c.l.b16 %v155
  %v775 = vunpack.c.h.b16 %v155
  %v776 = vunpack.c.l.b16 %v156
  %v777 = vunpack.c.l.b16 %v157
  %v778 = vunpack.c.h.b16 %v157
  %v779 = vunpack.c.l.b16 %v158
  %v780 = vunpack.c.l.b16 %v159
  %v781 = vunpack.c.h.b16 %v159
  %v782 = vunpack.c.l.b16 %v160
  %v783 = vunpack.c.l.b16 %v161
  %v784 = vunpack.c.h.b16 %v161
  %v785 = vunpack.c.l.b16 %v162
  %v786 = vunpack.c.l.b16 %v163
  %v787 = vunpack.c.h.b16 %v163
  %v788 = vunpack.c.l.b16 %v164
  %v789 = vunpack.c.l.b16 %v165
  %v790 = vunpack.c.h.b16 %v165
  %v791 = vunpack.c.l.b16 %v166
  %v792 = vunpack.c.l.b16 %v167
  %v793 = vunpack.c.h.b16 %v167
  %v794 = vunpack.c.l.b16 %v168
  %v795 = vunpack.c.l.b16 %v169
  %v796 = vunpack.c.h.b16 %v169
  %v797 = vunpack.c.l.b16 %v170
  %v798 = vunpack.c.l.b16 %v171
  %v799 = vunpack.c.h.b16 %v171
  %v800 = vunpack.c.l.b16 %v172
  %v801 = vunpack.c.l.b16 %v173
  %v802 = vunpack.c.h.b16 %v173
  %v803 = vunpack.c.l.b16 %v174
  %v804 = vunpack.c.l.b16 %v175
  %v805 = vunpack.c.h.b16 %v175
  %v806 = vunpack.c.l.b16 %v176
  %v807 = vunpack.c.l.b16 %v177
  %v808 = vunpack.c.h.b16 %v177
  %v809 = vunpack.c.l.b16 %v178
  %v810 = vunpack.c.l.b16 %v179
  %v811 = vunpack.c.h.b16 %v179
  %v812 = vunpack.c.l.b16 %v180
  %v813 = vunpack.c.l.b16 %v181
  %v814 = vunpack.c.h.b16 %v181
  %v815 = vunpack.c.l.b16 %v182
  %v816 = vunpack.c.l.b16 %v183
  %v817 = vunpack.c.h.b16 %v183
  %v818 = vunpack.c.l.b16 %v184
  %v819 = vunpack.c.l.b16 %v185
  %v820 = vunpack.c.h.b16 %v185
  %v821 = vunpack.c.l.b16 %v186
  %v822 = vunpack.c.l.b16 %v187
  %v823 = vunpack.c.h.b16 %v187
  %v824 = vunpack.c.l.b16 %v188
  %v825 = vunpack.c.l.b16 %v189
  %v826 = vunpack.c.h.b16 %v189
  %v827 = vunpack.c.l.b16 %v190
  %v828 = vunpack.c.l.b16 %v191
  %v829 = vunpack.c.h.b16 %v191
  %v830 = vunpack.c.l.b16 %v192
  %v831 = vunpack.c.l.b16 %v193
  %v832 = vunpack.c.h.b16 %v193
  %v833 = vunpack.c.l.b16 %v194
  %v834 = vunpack.c.l.b16 %v195
  %v835 = vunpack.c.h.b16 %v195
  %v836 = vunpack.c.l.b16 %v196
  %v837 = vunpack.c.l.b16 %v197
  %v838 = vunpack.c.h.b16 %v197
  %v839 = vunpack.c.l.b16 %v198
  %v840 = vunpack.c.l.b16 %v199
  %v841 = vunpack.c.h.b16 %v199
  %v842 = vunpack.c.l.b16 %v200
  %v843 = vunpack.c.l.b16 %v201
  %v844 = vunpack.c.h.b16 %v201
  %v845 = vunpack.c.l.b16 %v202
  %v846 = vunpack.c.l.b16 %v203
  %v847 = vunpack.c.h.b16 %v203
  %v848 = vunpack.c.l.b16 %v204
  %v849 = vunpack.c.l.b16 %v205
  %v850 = vunpack.c.h.b16 %v205
  %v851 = vunpack.c.l.b16 %v206
  %v852 = vunpack.c.l.b16 %v207
  %v853 = vunpack.c.h.b16 %v207
  %v854 = vunpack.c.l.b16 %v208
  %v855 = vunpack.c.l.b16 %v209
  %v856 = vunpack.c.h.b16 %v209
  %v857 = vunpack.c.l.b16 %v210
  %v858 = vunpack.c.l.b16 %v211
  %v859 = vunpack.c.h.b16 %v211
  %v860 = vunpack.c.l.b16 %v212
  %v861 = vunpack.c.l.b16 %v213
  %v862 = vunpack.c.h.b16 %v213
  %v863 = vunpack.c.l.b16 %v214
  %v864 = vunpack.c.l.b16 %v215
  %v865 = vunpack.c.h.b16 %v215
  %v866 = vunpack.c.l.b16 %v216
  %v867 = vunpack.c.l.b16 %v217
  %v868 = vunpack.c.h.b16 %v217
  %v869 = vunpack.c.l.b16 %v218
  %v870 = vunpack.c.l.b16 %v219
  %v871 = vunpack.c.h.b16 %v219
  %v872 = vunpack.c.l.b16 %v220
  %v873 = vunpack.c.l.b16 %v221
  %v874 = vunpack.c.h.b16 %v221
  %v875 = vunpack.c.l.b16 %v222
  %v876 = vunpack.c.l.b16 %v223
  %v877 = vunpack.c.h.b16 %v223
  %v878 = vunpack.c.l.b16 %v224
  %v879 = vunpack.c.l.b16 %v225
  %v880 = vunpack.c.h.b16 %v225
  %v881 = vunpack.c.l.b16 %v226
  %v882 = vunpack.c.l.b16 %v227
  %v883 = vunpack.c.h.b16 %v227
  %v884 = vunpack.c.l.b16 %v228
  %v885 = vunpack.c.l.b16 %v229
  %v886 = vunpack.c.h.b16 %v229
  %v887 = vunpack.c.l.b16 %v230
  %v888 = vunpack.c.l.b16 %v231
  %v889 = vunpack.c.h.b16 %v231
  %v890 = vunpack.c.l.b16 %v232
  %v891 = vunpack.c.l.b16 %v233
  %v892 = vunpack.c.h.b16 %v233
  %v893 = vunpack.c.l.b16 %v234
  %v894 = vunpack.c.l.b16 %v235
  %v895 = vunpack.c.h.b16 %v235
  %v896 = vunpack.c.l.b16 %v236
  %v897 = vunpack.c.l.b16 %v237
  %v898 = vunpack.c.h.b16 %v237
  %v899 = vunpack.c.l.b16 %v238
  %v900 = vunpack.c.l.b16 %v239
  %v901 = vunpack.c.h.b16 %v239
  %v902 = vunpack.c.l.b16 %v240
  %v903 = vunpack.c.l.b16 %v241
  %v904 = vunpack.c.h.b16 %v241
  %v905 = vunpack.c.l.b16 %v242
  %v906 = vunpack.c.l.b16 %v243
  %v907 = vunpack.c.h.b16 %v243
  %v908 = vunpack.c.l.b16 %v244
  %v909 = vunpack.c.l.b16 %v245
  %v910 = vunpack.c.h.b16 %v245
  %v911 = vunpack.c.l.b16 %v246
  %v912 = vunpack.c.l.b16 %v247
  %v913 = vunpack.c.h.b16 %v247
  %v914 = vunpack.c.l.b16 %v248
  %v915 = vunpack.c.l.b16 %v249
  %v916 = vunpack.c.h.b16 %v249
  %v917 = vunpack.c.l.b16 %v250
  %v918 = vunpack.c.l.b16 %v251
  %v919 = vunpack.c.h.b16 %v251
  %v920 = vunpack.c.l.b16 %v252
  %v921 = vunpack.c.l.b16 %v253
  %v922 = vunpack.c.h.b16 %v253
  %v923 = vunpack.c.l.b16 %v254
  %v924 = vunpack.c.l.b16 %v255
  %v925 = vunpack.c.h.b16 %v255
  %v926 = vunpack.c.l.b16 %v256
  %v927 = vunpack.c.l.b16 %v257
  %v928 = vunpack.c.h.b16 %v257
  %v929 = vunpack.c.l.b16 %v258
  %v930 = vunpack.c.l.b16 %v259
  %v931 = vunpack.c.h.b16 %v259
  %v932 = vunpack.c.l.b16 %v260
  %v933 = vunpack.c.l.b16 %v261
  %v934 = vunpack.c.h.b16 %v261
  %v935 = vunpack.c.l.b16 %v262
  %v936 = vunpack.c.l.b16 %v263
  %v937 = vunpack.c.h.b16 %v263
  %v938 = vunpack.c.l.b16 %v264
  %v939 = vunpack.c.l.b16 %v265
  %v940 = vunpack.c.h.b16 %v265
  %v941 = vunpack.c.l.b16 %v266
  %v942 = vunpack.c.l.b16 %v267
  %v943 = vunpack.c.h.b16 %v267
  %v944 = vunpack.c.l.b16 %v268
  %v945 = vunpack.c.l.b16 %v269
  %v946 = vunpack.c.h.b16 %v269
  %v947 = vunpack.c.l.b16 %v270
  %v948 = vunpack.c.l.b16 %v271
  %v949 = vunpack.c.h.b16 %v271
  %v950 = vunpack.c.l.b16 %v272
  %v951 = vunpack.c.l.b16 %v273
  %v952 = vunpack.c.h.b16 %v273
  %v953 = vunpack.c.l.b16 %v274
  %v954 = vunpack.c.l.b16 %v275
  %v955 = vunpack.c.h.b16 %v275
  %v956 = vunpack.c.l.b16 %v276
  %v957 = vunpack.c.l.b16 %v277
  %v958 = vunpack.c.h.b16 %v277
  %v959 = vunpack.c.l.b16 %v278
  %v960 = vunpack.c.l.b16 %v279
  %v961 = vunpack.c.h.b16 %v279
  %v962 = vunpack.c.l.b16 %v280
  %v963 = vunpack.c.l.b16 %v281
  %v964 = vunpack.c.h.b16 %v281
  %v965 = vunpack.c.l.b16 %v282
  %v966 = vunpack.c.l.b16 %v283
  %v967 = vunpack.c.h.b16 %v283
  %v968 = vunpack.c.l.b16 %v284
  %v969 = vunpack.c.l.b16 %v285
  %v970 = vunpack.c.h.b16 %v285
  %v971 = vunpack.c.l.b16 %v286
  %v972 = vpack.c.b16 %v591, %v588
  %v973 = vpack.c.b16 %v592, %v589
  %v974 = vpack.c.b16 %v593, %v590
  %v975 = vpack.c.b16 %v597, %v594
  %v976 = vpack.c.b16 %v598, %v595
  %v977 = vpack.c.b16 %v599, %v596
  %v978 = vpack.c.b16 %v603, %v600
  %v979 = vpack.c.b16 %v604, %v601
  %v980 = vpack.c.b16 %v605, %v602
  %v981 = vpack.c.b16 %v609, %v606
  %v982 = vpack.c.b16 %v610, %v607
  %v983 = vpack.c.b16 %v611, %v608
  %v984 = vpack.c.b16 %v615, %v612
  %v985 = vpack.c.b16 %v616, %v613
  %v986 = vpack.c.b16 %v617, %v614
  %v987 = vpack.c.b16 %v621, %v618
  %v988 = vpack.c.b16 %v622, %v619
  %v989 = vpack.c.b16 %v623, %v620
  %v990 = vpack.c.b16 %v627, %v624
  %v991 = vpack.c.b16 %v628, %v625
  %v992 = vpack.c.b16 %v629, %v626
  %v993 = vpack.c.b16 %v633, %v630
  %v994 = vpack.c.b16 %v634, %v631
  %v995 = vpack.c.b16 %v635, %v632
  %v996 = vpack.c.b16 %v639, %v636
  %v997 = vpack.c.b16 %v640, %v637
  %v998 = vpack.c.b16 %v641, %v638
  %v999 = vpack.c.b16 %v645, %v642
  %v1000 = vpack.c.b16 %v646, %v643
  %v1001 = vpack.c.b16 %v647, %v644
  %v1002 = vpack.c.b16 %v651, %v648
  %v1003 = vpack.c.b16 %v652, %v649
  %v1004 = vpack.c.b16 %v653, %v650
  %v1005 = vpack.c.b16 %v657, %v654
  %v1006 = vpack.c.b16 %v658, %v655
  %v1007 = vpack.c.b16 %v659, %v656
  %v1008 = vpack.c.b16 %v663, %v660
  %v1009 = vpack.c.b16 %v664, %v661
  %v1010 = vpack.c.b16 %v665, %v662
  %v1011 = vpack.c.b16 %v669, %v666
  %v1012 = vpack.c.b16 %v670, %v667
  %v1013 = vpack.c.b16 %v671, %v668
  %v1014 = vpack.c.b16 %v675, %v672
  %v1015 = vpack.c.b16 %v676, %v673
  %v1016 = vpack.c.b16 %v677, %v674
  %v1017 = vpack.c.b16 %v681, %v678
  %v1018 = vpack.c.b16 %v682, %v679
  %v1019 = vpack.c.b16 %v683, %v680
  %v1020 = vpack.c.b16 %v687, %v684
  %v1021 = vpack.c.b16 %v688, %v685
  %v1022 = vpack.c.b16 %v689, %v686
  %v1023 = vpack.c.b16 %v693, %v690
  %v1024 = vpack.c.b16 %v694, %v691
  %v1025 = vpack.c.b16 %v695, %v692
  %v1026 = vpack.c.b16 %v699, %v696
  %v1027 = vpack.c.b16 %v700, %v697
  %v1028 = vpack.c.b16 %v701, %v698
  %v1029 = vpack.c.b16 %v705, %v702
  %v1030 = vpack.c.b16 %v706, %v703
  %v1031 = vpack.c.b16 %v707, %v704
  %v1032 = vpack.c.b16 %v711, %v708
  %v1033 = vpack.c.b16 %v712, %v709
  %v1034 = vpack.c.b16 %v713, %v710
  %v1035 = vpack.c.b16 %v717, %v714
  %v1036 = vpack.c.b16 %v718, %v715
  %v1037 = vpack.c.b16 %v719, %v716
  %v1038 = vpack.c.b16 %v723, %v720
  %v1039 = vpack.c.b16 %v724, %v721
  %v1040 = vpack.c.b16 %v725, %v722
  %v1041 = vpack.c.b16 %v729, %v726
  %v1042 = vpack.c.b16 %v730, %v727
  %v1043 = vpack.c.b16 %v731, %v728
  %v1044 = vpack.c.b16 %v735, %v732
  %v1045 = vpack.c.b16 %v736, %v733
  %v1046 = vpack.c.b16 %v737, %v734
  %v1047 = vpack.c.b16 %v741, %v738
  %v1048 = vpack.c.b16 %v742, %v739
  %v1049 = vpack.c.b16 %v743, %v740
  %v1050 = vpack.c.b16 %v747, %v744
  %v1051 = vpack.c.b16 %v748, %v745
  %v1052 = vpack.c.b16 %v749, %v746
  %v1053 = vpack.c.b16 %v753, %v750
  %v1054 = vpack.c.b16 %v754, %v751
  %v1055 = vpack.c.b16 %v755, %v752
  %v1056 = vpack.c.b16 %v759, %v756
  %v1057 = vpack.c.b16 %v760, %v757
  %v1058 = vpack.c.b16 %v761, %v758
  %v1059 = vpack.c.b16 %v765, %v762
  %v1060 = vpack.c.b16 %v766, %v763
  %v1061 = vpack.c.b16 %v767, %v764
  %v1062 = vpack.c.b16 %v771, %v768
  %v1063 = vpack.c.b16 %v772, %v769
  %v1064 = vpack.c.b16 %v773, %v770
  %v1065 = vpack.c.b16 %v777, %v774
  %v1066 = vpack.c.b16 %v778, %v775
  %v1067 = vpack.c.b16 %v779, %v776
  %v1068 = vpack.c.b16 %v783, %v780
  %v1069 = vpack.c.b16 %v784, %v781
  %v1070 = vpack.c.b16 %v785, %v782
  %v1071 = vpack.c.b16 %v789, %v786
  %v1072 = vpack.c.b16 %v790, %v787
  %v1073 = vpack.c.b16 %v791, %v788
  %v1074 = vpack.c.b16 %v795, %v792
  %v1075 = vpack.c.b16 %v796, %v793
  %v1076 = vpack.c.b16 %v797, %v794
  %v1077 = vpack.c.b16 %v801, %v798
  %v1078 = vpack.c.b16 %v802, %v799
  %v1079 = vpack.c.b16 %v803, %v800
  %v1080 = vpack.c.b16 %v807, %v804
  %v1081 = vpack.c.b16 %v808, %v805
  %v1082 = vpack.c.b16 %v809, %v806
  %v1083 = vpack.c.b16 %v813, %v810
  %v1084 = vpack.c.b16 %v814, %v811
  %v1085 = vpack.c.b16 %v815, %v812
  %v1086 = vpack.c.b16 %v819, %v816
  %v1087 = vpack.c.b16 %v820, %v817
  %v1088 = vpack.c.b16 %v821, %v818
  %v1089 = vpack.c.b16 %v825, %v822
  %v1090 = vpack.c.b16 %v826, %v823
  %v1091 = vpack.c.b16 %v827, %v824
  %v1092 = vpack.c.b16 %v831, %v828
  %v1093 = vpack.c.b16 %v832, %v829
  %v1094 = vpack.c.b16 %v833, %v830
  %v1095 = vpack.c.b16 %v837, %v834
  %v1096 = vpack.c.b16 %v838, %v835
  %v1097 = vpack.c.b16 %v839, %v836
  %v1098 = vpack.c.b16 %v843, %v840
  %v1099 = vpack.c.b16 %v844, %v841
  %v1100 = vpack.c.b16 %v845, %v842
  %v1101 = vpack.c.b16 %v849, %v846
  %v1102 = vpack.c.b16 %v850, %v847
  %v1103 = vpack.c.b16 %v851, %v848
  %v1104 = vpack.c.b16 %v855, %v852
  %v1105 = vpack.c.b16 %v856, %v853
  %v1106 = vpack.c.b16 %v857, %v854
  %v1107 = vpack.c.b16 %v861, %v858
  %v1108 = vpack.c.b16 %v862, %v859
  %v1109 = vpack.c.b16 %v863, %v860
  %v1110 = vpack.c.b16 %v867, %v864
  %v1111 = vpack.c.b16 %v868, %v865
  %v1112 = vpack.c.b16 %v869, %v866
  %v1113 = vpack.c.b16 %v873, %v870
  %v1114 = vpack.c.b16 %v874, %v871
  %v1115 = vpack.c.b16 %v875, %v872
  %v1116 = vpack.c.b16 %v879, %v876
  %v1117 = vpack.c.b16 %v880, %v877
  %v1118 = vpack.c.b16 %v881, %v878
  %v1119 = vpack.c.b16 %v885, %v882
  %v1120 = vpack.c.b16 %v886, %v883
  %v1121 = vpack.c.b16 %v887, %v884
  %v1122 = vpack.c.b16 %v891, %v888
  %v1123 = vpack.c.b16 %v892, %v889
  %v1124 = vpack.c.b16 %v893, %v890
  %v1125 = vpack.c.b16 %v897, %v894
  %v1126 = vpack.c.b16 %v898, %v895
  %v1127 = vpack.c.b16 %v899, %v896
  %v1128 = vpack.c.b16 %v903, %v900
  %v1129 = vpack.c.b16 %v904, %v901
  %v1130 = vpack.c.b16 %v905, %v902
  %v1131 = vpack.c.b16 %v909, %v906
  %v1132 = vpack.c.b16 %v910, %v907
  %v1133 = vpack.c.b16 %v911, %v908
  %v1134 = vpack.c.b16 %v915, %v912
  %v1135 = vpack.c.b16 %v916, %v913
  %v1136 = vpack.c.b16 %v917, %v914
  %v1137 = vpack.c.b16 %v921, %v918
  %v1138 = vpack.c.b16 %v922, %v919
  %v1139 = vpack.c.b16 %v923, %v920
  %v1140 = vpack.c.b16 %v927, %v924
  %v1141 = vpack.c.b16 %v928, %v925
  %v1142 = vpack.c.b16 %v929, %v926
  %v1143 = vpack.c.b16 %v933, %v930
  %v1144 = vpack.c.b16 %v934, %v931
  %v1145 = vpack.c.b16 %v935, %v932
  %v1146 = vpack.c.b16 %v939, %v936
  %v1147 = vpack.c.b16 %v940, %v937
  %v1148 = vpack.c.b16 %v941, %v938
  %v1149 = vpack.c.b16 %v945, %v942
  %v1150 = vpack.c.b16 %v946, %v943
  %v1151 = vpack.c.b16 %v947, %v944
  %v1152 = vpack.c.b16 %v951, %v948
  %v1153 = vpack.c.b16 %v952, %v949
  %v1154 = vpack.c.b16 %v953, %v950
  %v1155 = vpack.c.b16 %v957, %v954
  %v1156 = vpack.c.b16 %v958, %v955
  %v1157 = vpack.c.b16 %v959, %v956
  %v1158 = vpack.c.b16 %v963, %v960
  %v1159 = vpack.c.b16 %v964, %v961
  %v1160 = vpack.c.b16 %v965, %v962
  %v1161 = vpack.c.b16 %v969, %v966
  %v1162 = vpack.c.b16 %v970, %v967
  %v1163 = vpack.c.b16 %v971, %v968
  %1356 = vmatprep.subr.bf16.mxu0 %v973
  %1357 = vmatpush1.bf16.msra.mxu0 %v972
  %1358 = vmatprep.subr.bf16.mxu0 %v976
  %1359 = vmatpush1.bf16.msra.mxu0 %v975
  %1360 = vmatprep.subr.bf16.mxu0 %v979
  %1361 = vmatpush1.bf16.msra.mxu0 %v978
  %1362 = vmatprep.subr.bf16.mxu0 %v982
  %1363 = vmatpush1.bf16.msra.mxu0 %v981
  %1364 = vmatprep.subr.bf16.mxu0 %v985
  %1365 = vmatpush1.bf16.msra.mxu0 %v984
  %1366 = vmatprep.subr.bf16.mxu0 %v988
  %1367 = vmatpush1.bf16.msra.mxu0 %v987
  %1368 = vmatprep.subr.bf16.mxu0 %v991
  %1369 = vmatpush1.bf16.msra.mxu0 %v990
  %1370 = vmatprep.subr.bf16.mxu0 %v994
  %1371 = vmatpush1.bf16.msra.mxu0 %v993
  %1372 = vmatprep.subr.bf16.mxu0 %v997
  %1373 = vmatpush1.bf16.msra.mxu0 %v996
  %1374 = vmatprep.subr.bf16.mxu0 %v1000
  %1375 = vmatpush1.bf16.msra.mxu0 %v999
  %1376 = vmatprep.subr.bf16.mxu0 %v1003
  %1377 = vmatpush1.bf16.msra.mxu0 %v1002
  %1378 = vmatprep.subr.bf16.mxu0 %v1006
  %1379 = vmatpush1.bf16.msra.mxu0 %v1005
  %1380 = vmatprep.subr.bf16.mxu0 %v1009
  %1381 = vmatpush1.bf16.msra.mxu0 %v1008
  %1382 = vmatprep.subr.bf16.mxu0 %v1012
  %1383 = vmatpush1.bf16.msra.mxu0 %v1011
  %1384 = vmatprep.subr.bf16.mxu0 %v1015
  %1385 = vmatpush1.bf16.msra.mxu0 %v1014
  %1386 = vmatprep.subr.bf16.mxu0 %v1018
  %1387 = vmatpush1.bf16.msra.mxu0 %v1017
  %1388 = vmatprep.mubr.bf16.mxu0 %v317
  %1389 = vmatmul.mubr.bf16.gmra.mrb[0].mxu0 %v316
  %v1390 = vpop.f32.mrb[0].mxu0
  %v1391 = vadd.f32 %v292, %v1390
  %v1392 = vpop.f32.mrb[0].mxu0
  %v1393 = vadd.f32 %v296, %v1392
  %v1394 = vpop.f32.mrb[0].mxu0
  %v1395 = vpop.f32.mrb[0].mxu0
  %1396 = vdwg.mxu0
  %1397 = vmatprep.subr.bf16.mxu0 %v1021
  %1398 = vmatpush1.bf16.msra.mxu0 %v1020
  %1399 = vmatprep.subr.bf16.mxu0 %v1024
  %1400 = vmatpush1.bf16.msra.mxu0 %v1023
  %1401 = vmatprep.subr.bf16.mxu0 %v1027
  %1402 = vmatpush1.bf16.msra.mxu0 %v1026
  %1403 = vmatprep.subr.bf16.mxu0 %v1030
  %1404 = vmatpush1.bf16.msra.mxu0 %v1029
  %1405 = vmatprep.subr.bf16.mxu0 %v1033
  %1406 = vmatpush1.bf16.msra.mxu0 %v1032
  %1407 = vmatprep.subr.bf16.mxu0 %v1036
  %1408 = vmatpush1.bf16.msra.mxu0 %v1035
  %1409 = vmatprep.subr.bf16.mxu0 %v1039
  %1410 = vmatpush1.bf16.msra.mxu0 %v1038
  %1411 = vmatprep.subr.bf16.mxu0 %v1042
  %1412 = vmatpush1.bf16.msra.mxu0 %v1041
  %1413 = vmatprep.subr.bf16.mxu0 %v1045
  %1414 = vmatpush1.bf16.msra.mxu0 %v1044
  %1415 = vmatprep.subr.bf16.mxu0 %v1048
  %1416 = vmatpush1.bf16.msra.mxu0 %v1047
  %1417 = vmatprep.subr.bf16.mxu0 %v1051
  %1418 = vmatpush1.bf16.msra.mxu0 %v1050
  %1419 = vmatprep.subr.bf16.mxu0 %v1054
  %1420 = vmatpush1.bf16.msra.mxu0 %v1053
  %1421 = vmatprep.subr.bf16.mxu0 %v1057
  %1422 = vmatpush1.bf16.msra.mxu0 %v1056
  %1423 = vmatprep.subr.bf16.mxu0 %v1060
  %1424 = vmatpush1.bf16.msra.mxu0 %v1059
  %1425 = vmatprep.subr.bf16.mxu0 %v1063
  %1426 = vmatpush1.bf16.msra.mxu0 %v1062
  %1427 = vmatprep.subr.bf16.mxu0 %v1066
  %1428 = vmatpush1.bf16.msra.mxu0 %v1065
  %1429 = vmatprep.mubr.bf16.mxu0 %v319
  %1430 = vmatmul.mubr.bf16.gmra.mrb[0].mxu0 %v318
  %v1431 = vpop.f32.mrb[0].mxu0
  %v1432 = vadd.f32 %v1391, %v1431
  %v1433 = vpop.f32.mrb[0].mxu0
  %v1434 = vadd.f32 %v1393, %v1433
  %v1435 = vpop.f32.mrb[0].mxu0
  %v1436 = vpop.f32.mrb[0].mxu0
  %1437 = vdwg.mxu0
  %1438 = vmatprep.subr.bf16.mxu0 %v1069
  %1439 = vmatpush1.bf16.msra.mxu0 %v1068
  %1440 = vmatprep.subr.bf16.mxu0 %v1072
  %1441 = vmatpush1.bf16.msra.mxu0 %v1071
  %1442 = vmatprep.subr.bf16.mxu0 %v1075
  %1443 = vmatpush1.bf16.msra.mxu0 %v1074
  %1444 = vmatprep.subr.bf16.mxu0 %v1078
  %1445 = vmatpush1.bf16.msra.mxu0 %v1077
  %1446 = vmatprep.subr.bf16.mxu0 %v1081
  %1447 = vmatpush1.bf16.msra.mxu0 %v1080
  %1448 = vmatprep.subr.bf16.mxu0 %v1084
  %1449 = vmatpush1.bf16.msra.mxu0 %v1083
  %1450 = vmatprep.subr.bf16.mxu0 %v1087
  %1451 = vmatpush1.bf16.msra.mxu0 %v1086
  %1452 = vmatprep.subr.bf16.mxu0 %v1090
  %1453 = vmatpush1.bf16.msra.mxu0 %v1089
  %1454 = vmatprep.subr.bf16.mxu0 %v1093
  %1455 = vmatpush1.bf16.msra.mxu0 %v1092
  %1456 = vmatprep.subr.bf16.mxu0 %v1096
  %1457 = vmatpush1.bf16.msra.mxu0 %v1095
  %1458 = vmatprep.subr.bf16.mxu0 %v1099
  %1459 = vmatpush1.bf16.msra.mxu0 %v1098
  %1460 = vmatprep.subr.bf16.mxu0 %v1102
  %1461 = vmatpush1.bf16.msra.mxu0 %v1101
  %1462 = vmatprep.subr.bf16.mxu0 %v1105
  %1463 = vmatpush1.bf16.msra.mxu0 %v1104
  %1464 = vmatprep.subr.bf16.mxu0 %v1108
  %1465 = vmatpush1.bf16.msra.mxu0 %v1107
  %1466 = vmatprep.subr.bf16.mxu0 %v1111
  %1467 = vmatpush1.bf16.msra.mxu0 %v1110
  %1468 = vmatprep.subr.bf16.mxu0 %v1114
  %1469 = vmatpush1.bf16.msra.mxu0 %v1113
  %1470 = vmatprep.mubr.bf16.mxu0 %v321
  %1471 = vmatmul.mubr.bf16.gmra.mrb[0].mxu0 %v320
  %v1472 = vpop.f32.mrb[0].mxu0
  %v1473 = vadd.f32 %v1432, %v1472
  %v1474 = vpop.f32.mrb[0].mxu0
  %v1475 = vadd.f32 %v1434, %v1474
  %v1476 = vpop.f32.mrb[0].mxu0
  %v1477 = vpop.f32.mrb[0].mxu0
  %1478 = vdwg.mxu0
  %1479 = vmatprep.subr.bf16.mxu0 %v1117
  %1480 = vmatpush1.bf16.msra.mxu0 %v1116
  %1481 = vmatprep.subr.bf16.mxu0 %v1120
  %1482 = vmatpush1.bf16.msra.mxu0 %v1119
  %1483 = vmatprep.subr.bf16.mxu0 %v1123
  %1484 = vmatpush1.bf16.msra.mxu0 %v1122
  %1485 = vmatprep.subr.bf16.mxu0 %v1126
  %1486 = vmatpush1.bf16.msra.mxu0 %v1125
  %1487 = vmatprep.subr.bf16.mxu0 %v1129
  %1488 = vmatpush1.bf16.msra.mxu0 %v1128
  %1489 = vmatprep.subr.bf16.mxu0 %v1132
  %1490 = vmatpush1.bf16.msra.mxu0 %v1131
  %1491 = vmatprep.subr.bf16.mxu0 %v1135
  %1492 = vmatpush1.bf16.msra.mxu0 %v1134
  %1493 = vmatprep.subr.bf16.mxu0 %v1138
  %1494 = vmatpush1.bf16.msra.mxu0 %v1137
  %1495 = vmatprep.subr.bf16.mxu0 %v1141
  %1496 = vmatpush1.bf16.msra.mxu0 %v1140
  %1497 = vmatprep.subr.bf16.mxu0 %v1144
  %1498 = vmatpush1.bf16.msra.mxu0 %v1143
  %1499 = vmatprep.subr.bf16.mxu0 %v1147
  %1500 = vmatpush1.bf16.msra.mxu0 %v1146
  %1501 = vmatprep.subr.bf16.mxu0 %v1150
  %1502 = vmatpush1.bf16.msra.mxu0 %v1149
  %1503 = vmatprep.subr.bf16.mxu0 %v1153
  %1504 = vmatpush1.bf16.msra.mxu0 %v1152
  %1505 = vmatprep.subr.bf16.mxu0 %v1156
  %1506 = vmatpush1.bf16.msra.mxu0 %v1155
  %1507 = vmatprep.subr.bf16.mxu0 %v1159
  %1508 = vmatpush1.bf16.msra.mxu0 %v1158
  %1509 = vmatprep.subr.bf16.mxu0 %v1162
  %1510 = vmatpush1.bf16.msra.mxu0 %v1161
  %1511 = vmatprep.mubr.bf16.mxu0 %v323
  %1512 = vmatmul.mubr.bf16.gmra.mrb[0].mxu0 %v322
  %v1513 = vpop.f32.mrb[0].mxu0
  %v1514 = vadd.f32 %v1473, %v1513
  %v1515 = vpop.f32.mrb[0].mxu0
  %v1516 = vadd.f32 %v1475, %v1515
  %v1517 = vpop.f32.mrb[0].mxu0
  %v1518 = vpop.f32.mrb[0].mxu0
  %1519 = vdwg.mxu0
  %1520 = vmatprep.subr.bf16.mxu0 0
  %1521 = vmatpush1.bf16.msra.mxu0 %v974
  %1522 = vmatprep.subr.bf16.mxu0 0
  %1523 = vmatpush1.bf16.msra.mxu0 %v977
  %1524 = vmatprep.subr.bf16.mxu0 0
  %1525 = vmatpush1.bf16.msra.mxu0 %v980
  %1526 = vmatprep.subr.bf16.mxu0 0
  %1527 = vmatpush1.bf16.msra.mxu0 %v983
  %1528 = vmatprep.subr.bf16.mxu0 0
  %1529 = vmatpush1.bf16.msra.mxu0 %v986
  %1530 = vmatprep.subr.bf16.mxu0 0
  %1531 = vmatpush1.bf16.msra.mxu0 %v989
  %1532 = vmatprep.subr.bf16.mxu0 0
  %1533 = vmatpush1.bf16.msra.mxu0 %v992
  %1534 = vmatprep.subr.bf16.mxu0 0
  %1535 = vmatpush1.bf16.msra.mxu0 %v995
  %1536 = vmatprep.subr.bf16.mxu0 0
  %1537 = vmatpush1.bf16.msra.mxu0 %v998
  %1538 = vmatprep.subr.bf16.mxu0 0
  %1539 = vmatpush1.bf16.msra.mxu0 %v1001
  %1540 = vmatprep.subr.bf16.mxu0 0
  %1541 = vmatpush1.bf16.msra.mxu0 %v1004
  %1542 = vmatprep.subr.bf16.mxu0 0
  %1543 = vmatpush1.bf16.msra.mxu0 %v1007
  %1544 = vmatprep.subr.bf16.mxu0 0
  %1545 = vmatpush1.bf16.msra.mxu0 %v1010
  %1546 = vmatprep.subr.bf16.mxu0 0
  %1547 = vmatpush1.bf16.msra.mxu0 %v1013
  %1548 = vmatprep.subr.bf16.mxu0 0
  %1549 = vmatpush1.bf16.msra.mxu0 %v1016
  %1550 = vmatprep.subr.bf16.mxu0 0
  %1551 = vmatpush1.bf16.msra.mxu0 %v1019
  %1552 = vmatprep.mubr.bf16.mxu0 %v317
  %1553 = vmatmul.mubr.bf16.gmra.mrb[0].mxu0 %v316
  %v1554 = vpop.f32.mrb[0].mxu0
  %v1555 = vadd.f32 %v300, %v1554
  %v1556 = vpop.f32.mrb[0].mxu0
  %v1557 = vpop.f32.mrb[0].mxu0
  %v1558 = vpop.f32.mrb[0].mxu0
  %1559 = vdwg.mxu0
  %1560 = vmatprep.subr.bf16.mxu0 0
  %1561 = vmatpush1.bf16.msra.mxu0 %v1022
  %1562 = vmatprep.subr.bf16.mxu0 0
  %1563 = vmatpush1.bf16.msra.mxu0 %v1025
  %1564 = vmatprep.subr.bf16.mxu0 0
  %1565 = vmatpush1.bf16.msra.mxu0 %v1028
  %1566 = vmatprep.subr.bf16.mxu0 0
  %1567 = vmatpush1.bf16.msra.mxu0 %v1031
  %1568 = vmatprep.subr.bf16.mxu0 0
  %1569 = vmatpush1.bf16.msra.mxu0 %v1034
  %1570 = vmatprep.subr.bf16.mxu0 0
  %1571 = vmatpush1.bf16.msra.mxu0 %v1037
  %1572 = vmatprep.subr.bf16.mxu0 0
  %1573 = vmatpush1.bf16.msra.mxu0 %v1040
  %1574 = vmatprep.subr.bf16.mxu0 0
  %1575 = vmatpush1.bf16.msra.mxu0 %v1043
  %1576 = vmatprep.subr.bf16.mxu0 0
  %1577 = vmatpush1.bf16.msra.mxu0 %v1046
  %1578 = vmatprep.subr.bf16.mxu0 0
  %1579 = vmatpush1.bf16.msra.mxu0 %v1049
  %1580 = vmatprep.subr.bf16.mxu0 0
  %1581 = vmatpush1.bf16.msra.mxu0 %v1052
  %1582 = vmatprep.subr.bf16.mxu0 0
  %1583 = vmatpush1.bf16.msra.mxu0 %v1055
  %1584 = vmatprep.subr.bf16.mxu0 0
  %1585 = vmatpush1.bf16.msra.mxu0 %v1058
  %1586 = vmatprep.subr.bf16.mxu0 0
  %1587 = vmatpush1.bf16.msra.mxu0 %v1061
  %1588 = vmatprep.subr.bf16.mxu0 0
  %1589 = vmatpush1.bf16.msra.mxu0 %v1064
  %1590 = vmatprep.subr.bf16.mxu0 0
  %1591 = vmatpush1.bf16.msra.mxu0 %v1067
  %1592 = vmatprep.mubr.bf16.mxu0 %v319
  %1593 = vmatmul.mubr.bf16.gmra.mrb[0].mxu0 %v318
  %v1594 = vpop.f32.mrb[0].mxu0
  %v1595 = vadd.f32 %v1555, %v1594
  %v1596 = vpop.f32.mrb[0].mxu0
  %v1597 = vpop.f32.mrb[0].mxu0
  %v1598 = vpop.f32.mrb[0].mxu0
  %1599 = vdwg.mxu0
  %1600 = vmatprep.subr.bf16.mxu0 0
  %1601 = vmatpush1.bf16.msra.mxu0 %v1070
  %1602 = vmatprep.subr.bf16.mxu0 0
  %1603 = vmatpush1.bf16.msra.mxu0 %v1073
  %1604 = vmatprep.subr.bf16.mxu0 0
  %1605 = vmatpush1.bf16.msra.mxu0 %v1076
  %1606 = vmatprep.subr.bf16.mxu0 0
  %1607 = vmatpush1.bf16.msra.mxu0 %v1079
  %1608 = vmatprep.subr.bf16.mxu0 0
  %1609 = vmatpush1.bf16.msra.mxu0 %v1082
  %1610 = vmatprep.subr.bf16.mxu0 0
  %1611 = vmatpush1.bf16.msra.mxu0 %v1085
  %1612 = vmatprep.subr.bf16.mxu0 0
  %1613 = vmatpush1.bf16.msra.mxu0 %v1088
  %1614 = vmatprep.subr.bf16.mxu0 0
  %1615 = vmatpush1.bf16.msra.mxu0 %v1091
  %1616 = vmatprep.subr.bf16.mxu0 0
  %1617 = vmatpush1.bf16.msra.mxu0 %v1094
  %1618 = vmatprep.subr.bf16.mxu0 0
  %1619 = vmatpush1.bf16.msra.mxu0 %v1097
  %1620 = vmatprep.subr.bf16.mxu0 0
  %1621 = vmatpush1.bf16.msra.mxu0 %v1100
  %1622 = vmatprep.subr.bf16.mxu0 0
  %1623 = vmatpush1.bf16.msra.mxu0 %v1103
  %1624 = vmatprep.subr.bf16.mxu0 0
  %1625 = vmatpush1.bf16.msra.mxu0 %v1106
  %1626 = vmatprep.subr.bf16.mxu0 0
  %1627 = vmatpush1.bf16.msra.mxu0 %v1109
  %1628 = vmatprep.subr.bf16.mxu0 0
  %1629 = vmatpush1.bf16.msra.mxu0 %v1112
  %1630 = vmatprep.subr.bf16.mxu0 0
  %1631 = vmatpush1.bf16.msra.mxu0 %v1115
  %1632 = vmatprep.mubr.bf16.mxu0 %v321
  %1633 = vmatmul.mubr.bf16.gmra.mrb[0].mxu0 %v320
  %v1634 = vpop.f32.mrb[0].mxu0
  %v1635 = vadd.f32 %v1595, %v1634
  %v1636 = vpop.f32.mrb[0].mxu0
  %v1637 = vpop.f32.mrb[0].mxu0
  %v1638 = vpop.f32.mrb[0].mxu0
  %1639 = vdwg.mxu0
  %1640 = vmatprep.subr.bf16.mxu0 0
  %1641 = vmatpush1.bf16.msra.mxu0 %v1118
  %1642 = vmatprep.subr.bf16.mxu0 0
  %1643 = vmatpush1.bf16.msra.mxu0 %v1121
  %1644 = vmatprep.subr.bf16.mxu0 0
  %1645 = vmatpush1.bf16.msra.mxu0 %v1124
  %1646 = vmatprep.subr.bf16.mxu0 0
  %1647 = vmatpush1.bf16.msra.mxu0 %v1127
  %1648 = vmatprep.subr.bf16.mxu0 0
  %1649 = vmatpush1.bf16.msra.mxu0 %v1130
  %1650 = vmatprep.subr.bf16.mxu0 0
  %1651 = vmatpush1.bf16.msra.mxu0 %v1133
  %1652 = vmatprep.subr.bf16.mxu0 0
  %1653 = vmatpush1.bf16.msra.mxu0 %v1136
  %1654 = vmatprep.subr.bf16.mxu0 0
  %1655 = vmatpush1.bf16.msra.mxu0 %v1139
  %1656 = vmatprep.subr.bf16.mxu0 0
  %1657 = vmatpush1.bf16.msra.mxu0 %v1142
  %1658 = vmatprep.subr.bf16.mxu0 0
  %1659 = vmatpush1.bf16.msra.mxu0 %v1145
  %1660 = vmatprep.subr.bf16.mxu0 0
  %1661 = vmatpush1.bf16.msra.mxu0 %v1148
  %1662 = vmatprep.subr.bf16.mxu0 0
  %1663 = vmatpush1.bf16.msra.mxu0 %v1151
  %1664 = vmatprep.subr.bf16.mxu0 0
  %1665 = vmatpush1.bf16.msra.mxu0 %v1154
  %1666 = vmatprep.subr.bf16.mxu0 0
  %1667 = vmatpush1.bf16.msra.mxu0 %v1157
  %1668 = vmatprep.subr.bf16.mxu0 0
  %1669 = vmatpush1.bf16.msra.mxu0 %v1160
  %1670 = vmatprep.subr.bf16.mxu0 0
  %1671 = vmatpush1.bf16.msra.mxu0 %v1163
  %1672 = vmatprep.mubr.bf16.mxu0 %v323
  %1673 = vmatmul.mubr.bf16.gmra.mrb[0].mxu0 %v322
  %v1674 = vpop.f32.mrb[0].mxu0
  %v1675 = vadd.f32 %v1635, %v1674
  %v1676 = vpop.f32.mrb[0].mxu0
  %v1677 = vpop.f32.mrb[0].mxu0
  %v1678 = vpop.f32.mrb[0].mxu0
  %1679 = vdwg.mxu0
  %v1680 = vmax.f32 %v1514, 0.0
  %v1681 = vmax.f32 %v1516, 0.0
  %v1682 = vmax.f32 %v1675, 0.0
  %v1683 = vpack.c.bf16 %v1680, %v1680
  %v1684 = vpack.c.bf16 %v1681, %v1681
  %v1685 = vpack.c.bf16 %v1682, %v1682
  %v1686 = vld [vmem:[%s3] sm:$0xff]
  %v1687 = vld [vmem:[%s3 + $0x8] sm:$0xff]
  %v1688 = vld [vmem:[%s3 + $0x10] sm:$0xff]
  %v1689 = vld [vmem:[%s3 + $0x18] sm:$0xff]
  %v1690 = vld [vmem:[%s3 + $0x20] sm:$0xff]
  %v1691 = vld [vmem:[%s3 + $0x28] sm:$0xff]
  %v1692 = vld [vmem:[%s3 + $0x30] sm:$0xff]
  %v1693 = vld [vmem:[%s3 + $0x38] sm:$0xff]
  %v1694 = vld [vmem:[%s3 + $0x40] sm:$0xff]
  %v1695 = vld [vmem:[%s3 + $0x48] sm:$0xff]
  %v1696 = vld [vmem:[%s3 + $0x50] sm:$0xff]
  %v1697 = vld [vmem:[%s3 + $0x58] sm:$0xff]
  %v1698 = vld [vmem:[%s3 + $0x60] sm:$0xff]
  %v1699 = vld [vmem:[%s3 + $0x68] sm:$0xff]
  %v1700 = vld [vmem:[%s3 + $0x70] sm:$0xff]
  %v1701 = vld [vmem:[%s3 + $0x78] sm:$0xff]
  %v1702 = vld [vmem:[%s3 + $0x80] sm:$0xff]
  %v1703 = vld [vmem:[%s3 + $0x88] sm:$0xff]
  %v1704 = vld [vmem:[%s3 + $0x90] sm:$0xff]
  %v1705 = vld [vmem:[%s3 + $0x98] sm:$0xff]
  %v1706 = vld [vmem:[%s3 + $0xa0] sm:$0xff]
  %v1707 = vld [vmem:[%s3 + $0xa8] sm:$0xff]
  %v1708 = vld [vmem:[%s3 + $0xb0] sm:$0xff]
  %v1709 = vld [vmem:[%s3 + $0xb8] sm:$0xff]
  %v1710 = vld [vmem:[%s3 + $0xc0] sm:$0xff]
  %v1711 = vld [vmem:[%s3 + $0xc8] sm:$0xff]
  %v1712 = vld [vmem:[%s3 + $0xd0] sm:$0xff]
  %v1713 = vld [vmem:[%s3 + $0xd8] sm:$0xff]
  %v1714 = vld [vmem:[%s3 + $0xe0] sm:$0xff]
  %v1715 = vld [vmem:[%s3 + $0xe8] sm:$0xff]
  %v1716 = vld [vmem:[%s3 + $0xf0] sm:$0xff]
  %v1717 = vld [vmem:[%s3 + $0xf8] sm:$0xff]
  %v1718 = vld [vmem:[%s3 + $0x100] sm:$0xff]
  %v1719 = vld [vmem:[%s3 + $0x108] sm:$0xff]
  %v1720 = vld [vmem:[%s3 + $0x110] sm:$0xff]
  %v1721 = vld [vmem:[%s3 + $0x118] sm:$0xff]
  %v1722 = vld [vmem:[%s3 + $0x120] sm:$0xff]
  %v1723 = vld [vmem:[%s3 + $0x128] sm:$0xff]
  %v1724 = vld [vmem:[%s3 + $0x130] sm:$0xff]
  %v1725 = vld [vmem:[%s3 + $0x138] sm:$0xff]
  %v1726 = vld [vmem:[%s3 + $0x140] sm:$0xff]
  %v1727 = vld [vmem:[%s3 + $0x148] sm:$0xff]
  %v1728 = vld [vmem:[%s3 + $0x150] sm:$0xff]
  %v1729 = vld [vmem:[%s3 + $0x158] sm:$0xff]
  %v1730 = vld [vmem:[%s3 + $0x160] sm:$0xff]
  %v1731 = vld [vmem:[%s3 + $0x168] sm:$0xff]
  %v1732 = vld [vmem:[%s3 + $0x170] sm:$0xff]
  %v1733 = vld [vmem:[%s3 + $0x178] sm:$0xff]
  %v1734 = vld [vmem:[%s4] sm:$0x3]
  %v1736 = vlaneseq
  %v1737 = vshrl.u32 %v1736, 7
  %v1738 = vsub.s32 0, %v1737
  %v1739 = vrot.slane %v1734, %v1738
  %v1740 = vlaneseq
  %v1741 = vshrl.u32 %v1740, 7
  %v1742 = vsub.s32 1, %v1741
  %v1743 = vrot.slane %v1734, %v1742
  %v1794 = vunpack.c.l.b16 %v1686
  %v1795 = vunpack.c.h.b16 %v1686
  %v1796 = vunpack.c.l.b16 %v1687
  %v1797 = vunpack.c.h.b16 %v1687
  %v1798 = vunpack.c.l.b16 %v1688
  %v1799 = vunpack.c.h.b16 %v1688
  %v1800 = vunpack.c.l.b16 %v1689
  %v1801 = vunpack.c.h.b16 %v1689
  %v1802 = vunpack.c.l.b16 %v1690
  %v1803 = vunpack.c.h.b16 %v1690
  %v1804 = vunpack.c.l.b16 %v1691
  %v1805 = vunpack.c.h.b16 %v1691
  %v1806 = vunpack.c.l.b16 %v1692
  %v1807 = vunpack.c.h.b16 %v1692
  %v1808 = vunpack.c.l.b16 %v1693
  %v1809 = vunpack.c.h.b16 %v1693
  %v1810 = vunpack.c.l.b16 %v1694
  %v1811 = vunpack.c.h.b16 %v1694
  %v1812 = vunpack.c.l.b16 %v1695
  %v1813 = vunpack.c.h.b16 %v1695
  %v1814 = vunpack.c.l.b16 %v1696
  %v1815 = vunpack.c.h.b16 %v1696
  %v1816 = vunpack.c.l.b16 %v1697
  %v1817 = vunpack.c.h.b16 %v1697
  %v1818 = vunpack.c.l.b16 %v1698
  %v1819 = vunpack.c.h.b16 %v1698
  %v1820 = vunpack.c.l.b16 %v1699
  %v1821 = vunpack.c.h.b16 %v1699
  %v1822 = vunpack.c.l.b16 %v1700
  %v1823 = vunpack.c.h.b16 %v1700
  %v1824 = vunpack.c.l.b16 %v1701
  %v1825 = vunpack.c.h.b16 %v1701
  %v1826 = vunpack.c.l.b16 %v1702
  %v1827 = vunpack.c.h.b16 %v1702
  %v1828 = vunpack.c.l.b16 %v1703
  %v1829 = vunpack.c.h.b16 %v1703
  %v1830 = vunpack.c.l.b16 %v1704
  %v1831 = vunpack.c.h.b16 %v1704
  %v1832 = vunpack.c.l.b16 %v1705
  %v1833 = vunpack.c.h.b16 %v1705
  %v1834 = vunpack.c.l.b16 %v1706
  %v1835 = vunpack.c.h.b16 %v1706
  %v1836 = vunpack.c.l.b16 %v1707
  %v1837 = vunpack.c.h.b16 %v1707
  %v1838 = vunpack.c.l.b16 %v1708
  %v1839 = vunpack.c.h.b16 %v1708
  %v1840 = vunpack.c.l.b16 %v1709
  %v1841 = vunpack.c.h.b16 %v1709
  %v1842 = vunpack.c.l.b16 %v1710
  %v1843 = vunpack.c.h.b16 %v1710
  %v1844 = vunpack.c.l.b16 %v1711
  %v1845 = vunpack.c.h.b16 %v1711
  %v1846 = vunpack.c.l.b16 %v1712
  %v1847 = vunpack.c.h.b16 %v1712
  %v1848 = vunpack.c.l.b16 %v1713
  %v1849 = vunpack.c.h.b16 %v1713
  %v1850 = vunpack.c.l.b16 %v1714
  %v1851 = vunpack.c.h.b16 %v1714
  %v1852 = vunpack.c.l.b16 %v1715
  %v1853 = vunpack.c.h.b16 %v1715
  %v1854 = vunpack.c.l.b16 %v1716
  %v1855 = vunpack.c.h.b16 %v1716
  %v1856 = vunpack.c.l.b16 %v1717
  %v1857 = vunpack.c.h.b16 %v1717
  %v1858 = vunpack.c.l.b16 %v1718
  %v1859 = vunpack.c.h.b16 %v1718
  %v1860 = vunpack.c.l.b16 %v1719
  %v1861 = vunpack.c.h.b16 %v1719
  %v1862 = vunpack.c.l.b16 %v1720
  %v1863 = vunpack.c.h.b16 %v1720
  %v1864 = vunpack.c.l.b16 %v1721
  %v1865 = vunpack.c.h.b16 %v1721
  %v1866 = vunpack.c.l.b16 %v1722
  %v1867 = vunpack.c.h.b16 %v1722
  %v1868 = vunpack.c.l.b16 %v1723
  %v1869 = vunpack.c.h.b16 %v1723
  %v1870 = vunpack.c.l.b16 %v1724
  %v1871 = vunpack.c.h.b16 %v1724
  %v1872 = vunpack.c.l.b16 %v1725
  %v1873 = vunpack.c.h.b16 %v1725
  %v1874 = vunpack.c.l.b16 %v1726
  %v1875 = vunpack.c.h.b16 %v1726
  %v1876 = vunpack.c.l.b16 %v1727
  %v1877 = vunpack.c.h.b16 %v1727
  %v1878 = vunpack.c.l.b16 %v1728
  %v1879 = vunpack.c.h.b16 %v1728
  %v1880 = vunpack.c.l.b16 %v1729
  %v1881 = vunpack.c.h.b16 %v1729
  %v1882 = vunpack.c.l.b16 %v1730
  %v1883 = vunpack.c.h.b16 %v1730
  %v1884 = vunpack.c.l.b16 %v1731
  %v1885 = vunpack.c.h.b16 %v1731
  %v1886 = vunpack.c.l.b16 %v1732
  %v1887 = vunpack.c.h.b16 %v1732
  %v1888 = vunpack.c.l.b16 %v1733
  %v1889 = vunpack.c.h.b16 %v1733
  %v1890 = vpack.c.b16 %v1796, %v1794
  %v1891 = vpack.c.b16 %v1797, %v1795
  %v1892 = vpack.c.b16 %v1800, %v1798
  %v1893 = vpack.c.b16 %v1801, %v1799
  %v1894 = vpack.c.b16 %v1804, %v1802
  %v1895 = vpack.c.b16 %v1805, %v1803
  %v1896 = vpack.c.b16 %v1808, %v1806
  %v1897 = vpack.c.b16 %v1809, %v1807
  %v1898 = vpack.c.b16 %v1812, %v1810
  %v1899 = vpack.c.b16 %v1813, %v1811
  %v1900 = vpack.c.b16 %v1816, %v1814
  %v1901 = vpack.c.b16 %v1817, %v1815
  %v1902 = vpack.c.b16 %v1820, %v1818
  %v1903 = vpack.c.b16 %v1821, %v1819
  %v1904 = vpack.c.b16 %v1824, %v1822
  %v1905 = vpack.c.b16 %v1825, %v1823
  %v1906 = vpack.c.b16 %v1828, %v1826
  %v1907 = vpack.c.b16 %v1829, %v1827
  %v1908 = vpack.c.b16 %v1832, %v1830
  %v1909 = vpack.c.b16 %v1833, %v1831
  %v1910 = vpack.c.b16 %v1836, %v1834
  %v1911 = vpack.c.b16 %v1837, %v1835
  %v1912 = vpack.c.b16 %v1840, %v1838
  %v1913 = vpack.c.b16 %v1841, %v1839
  %v1914 = vpack.c.b16 %v1844, %v1842
  %v1915 = vpack.c.b16 %v1845, %v1843
  %v1916 = vpack.c.b16 %v1848, %v1846
  %v1917 = vpack.c.b16 %v1849, %v1847
  %v1918 = vpack.c.b16 %v1852, %v1850
  %v1919 = vpack.c.b16 %v1853, %v1851
  %v1920 = vpack.c.b16 %v1856, %v1854
  %v1921 = vpack.c.b16 %v1857, %v1855
  %v1922 = vpack.c.b16 %v1860, %v1858
  %v1923 = vpack.c.b16 %v1861, %v1859
  %v1924 = vpack.c.b16 %v1864, %v1862
  %v1925 = vpack.c.b16 %v1865, %v1863
  %v1926 = vpack.c.b16 %v1868, %v1866
  %v1927 = vpack.c.b16 %v1869, %v1867
  %v1928 = vpack.c.b16 %v1872, %v1870
  %v1929 = vpack.c.b16 %v1873, %v1871
  %v1930 = vpack.c.b16 %v1876, %v1874
  %v1931 = vpack.c.b16 %v1877, %v1875
  %v1932 = vpack.c.b16 %v1880, %v1878
  %v1933 = vpack.c.b16 %v1881, %v1879
  %v1934 = vpack.c.b16 %v1884, %v1882
  %v1935 = vpack.c.b16 %v1885, %v1883
  %v1936 = vpack.c.b16 %v1888, %v1886
  %v1937 = vpack.c.b16 %v1889, %v1887
  %1986 = vmatprep.subr.bf16.mxu0 %v1891
  %1987 = vmatpush1.bf16.msra.mxu0 %v1890
  %1988 = vmatprep.subr.bf16.mxu0 %v1893
  %1989 = vmatpush1.bf16.msra.mxu0 %v1892
  %1990 = vmatprep.subr.bf16.mxu0 %v1895
  %1991 = vmatpush1.bf16.msra.mxu0 %v1894
  %1992 = vmatprep.subr.bf16.mxu0 %v1897
  %1993 = vmatpush1.bf16.msra.mxu0 %v1896
  %1994 = vmatprep.subr.bf16.mxu0 %v1899
  %1995 = vmatpush1.bf16.msra.mxu0 %v1898
  %1996 = vmatprep.subr.bf16.mxu0 %v1901
  %1997 = vmatpush1.bf16.msra.mxu0 %v1900
  %1998 = vmatprep.subr.bf16.mxu0 %v1903
  %1999 = vmatpush1.bf16.msra.mxu0 %v1902
  %2000 = vmatprep.subr.bf16.mxu0 %v1905
  %2001 = vmatpush1.bf16.msra.mxu0 %v1904
  %2002 = vmatprep.subr.bf16.mxu0 %v1907
  %2003 = vmatpush1.bf16.msra.mxu0 %v1906
  %2004 = vmatprep.subr.bf16.mxu0 %v1909
  %2005 = vmatpush1.bf16.msra.mxu0 %v1908
  %2006 = vmatprep.subr.bf16.mxu0 %v1911
  %2007 = vmatpush1.bf16.msra.mxu0 %v1910
  %2008 = vmatprep.subr.bf16.mxu0 %v1913
  %2009 = vmatpush1.bf16.msra.mxu0 %v1912
  %2010 = vmatprep.subr.bf16.mxu0 %v1915
  %2011 = vmatpush1.bf16.msra.mxu0 %v1914
  %2012 = vmatprep.subr.bf16.mxu0 %v1917
  %2013 = vmatpush1.bf16.msra.mxu0 %v1916
  %2014 = vmatprep.subr.bf16.mxu0 %v1919
  %2015 = vmatpush1.bf16.msra.mxu0 %v1918
  %2016 = vmatprep.subr.bf16.mxu0 %v1921
  %2017 = vmatpush1.bf16.msra.mxu0 %v1920
  %2018 = vmatprep.mubr.bf16.mxu0 %v1684
  %2019 = vmatmul.mubr.bf16.gmra.mrb[0].mxu0 %v1683
  %v2020 = vpop.f32.mrb[0].mxu0
  %v2021 = vadd.f32 %v1739, %v2020
  %v2022 = vpop.f32.mrb[0].mxu0
  %v2023 = vadd.f32 %v1743, %v2022
  %v2024 = vpop.f32.mrb[0].mxu0
  %v2025 = vpop.f32.mrb[0].mxu0
  %2026 = vdwg.mxu0
  %2027 = vmatprep.subr.bf16.mxu0 %v1923
  %2028 = vmatpush1.bf16.msra.mxu0 %v1922
  %2029 = vmatprep.subr.bf16.mxu0 %v1925
  %2030 = vmatpush1.bf16.msra.mxu0 %v1924
  %2031 = vmatprep.subr.bf16.mxu0 %v1927
  %2032 = vmatpush1.bf16.msra.mxu0 %v1926
  %2033 = vmatprep.subr.bf16.mxu0 %v1929
  %2034 = vmatpush1.bf16.msra.mxu0 %v1928
  %2035 = vmatprep.subr.bf16.mxu0 %v1931
  %2036 = vmatpush1.bf16.msra.mxu0 %v1930
  %2037 = vmatprep.subr.bf16.mxu0 %v1933
  %2038 = vmatpush1.bf16.msra.mxu0 %v1932
  %2039 = vmatprep.subr.bf16.mxu0 %v1935
  %2040 = vmatpush1.bf16.msra.mxu0 %v1934
  %2041 = vmatprep.subr.bf16.mxu0 %v1937
  %2042 = vmatpush1.bf16.msra.mxu0 %v1936
  %2043 = vmatprep.subr.bf16.mxu0 0
  %2044 = vmatpush1.bf16.msra.mxu0 0
  %2045 = vmatprep.subr.bf16.mxu0 0
  %2046 = vmatpush1.bf16.msra.mxu0 0
  %2047 = vmatprep.subr.bf16.mxu0 0
  %2048 = vmatpush1.bf16.msra.mxu0 0
  %2049 = vmatprep.subr.bf16.mxu0 0
  %2050 = vmatpush1.bf16.msra.mxu0 0
  %2051 = vmatprep.subr.bf16.mxu0 0
  %2052 = vmatpush1.bf16.msra.mxu0 0
  %2053 = vmatprep.subr.bf16.mxu0 0
  %2054 = vmatpush1.bf16.msra.mxu0 0
  %2055 = vmatprep.subr.bf16.mxu0 0
  %2056 = vmatpush1.bf16.msra.mxu0 0
  %2057 = vmatprep.subr.bf16.mxu0 0
  %2058 = vmatpush1.bf16.msra.mxu0 0
  %2059 = vmatprep.mubr.bf16.mxu0 0
  %2060 = vmatmul.mubr.bf16.gmra.mrb[0].mxu0 %v1685
  %v2061 = vpop.f32.mrb[0].mxu0
  %v2062 = vadd.f32 %v2021, %v2061
  %v2063 = vpop.f32.mrb[0].mxu0
  %v2064 = vadd.f32 %v2023, %v2063
  %v2065 = vpop.f32.mrb[0].mxu0
  %v2066 = vpop.f32.mrb[0].mxu0
  %2067 = vdwg.mxu0
  %v2068 = vmax.f32 %v2062, 0.0
  %v2069 = vmax.f32 %v2064, 0.0
  %v2070 = vpack.c.bf16 %v2068, %v2068
  %v2071 = vpack.c.bf16 %v2069, %v2069
  %v2072 = vld [vmem:[%s5] sm:$0xf]
  %v2073 = vld [vmem:[%s5 + $0x4] sm:$0xf]
  %v2074 = vld [vmem:[%s5 + $0x8] sm:$0xf]
  %v2075 = vld [vmem:[%s5 + $0xc] sm:$0xf]
  %v2076 = vld [vmem:[%s5 + $0x10] sm:$0xf]
  %v2077 = vld [vmem:[%s5 + $0x14] sm:$0xf]
  %v2078 = vld [vmem:[%s5 + $0x18] sm:$0xf]
  %v2079 = vld [vmem:[%s5 + $0x1c] sm:$0xf]
  %v2080 = vld [vmem:[%s5 + $0x20] sm:$0xf]
  %v2081 = vld [vmem:[%s5 + $0x24] sm:$0xf]
  %v2082 = vld [vmem:[%s5 + $0x28] sm:$0xf]
  %v2083 = vld [vmem:[%s5 + $0x2c] sm:$0xf]
  %v2084 = vld [vmem:[%s5 + $0x30] sm:$0xf]
  %v2085 = vld [vmem:[%s5 + $0x34] sm:$0xf]
  %v2086 = vld [vmem:[%s5 + $0x38] sm:$0xf]
  %v2087 = vld [vmem:[%s5 + $0x3c] sm:$0xf]
  %v2088 = vld [vmem:[%s5 + $0x40] sm:$0xf]
  %v2089 = vld [vmem:[%s5 + $0x44] sm:$0xf]
  %v2090 = vld [vmem:[%s5 + $0x48] sm:$0xf]
  %v2091 = vld [vmem:[%s5 + $0x4c] sm:$0xf]
  %v2092 = vld [vmem:[%s5 + $0x50] sm:$0xf]
  %v2093 = vld [vmem:[%s5 + $0x54] sm:$0xf]
  %v2094 = vld [vmem:[%s5 + $0x58] sm:$0xf]
  %v2095 = vld [vmem:[%s5 + $0x5c] sm:$0xf]
  %v2096 = vld [vmem:[%s6] sm:$0x1]
  %v2098 = vlaneseq
  %v2099 = vshrl.u32 %v2098, 7
  %v2100 = vsub.s32 0, %v2099
  %v2101 = vrot.slane %v2096, %v2100
  %v2127 = vunpack.c.l.b16 %v2072
  %v2128 = vunpack.c.l.b16 %v2073
  %v2129 = vunpack.c.l.b16 %v2074
  %v2130 = vunpack.c.l.b16 %v2075
  %v2131 = vunpack.c.l.b16 %v2076
  %v2132 = vunpack.c.l.b16 %v2077
  %v2133 = vunpack.c.l.b16 %v2078
  %v2134 = vunpack.c.l.b16 %v2079
  %v2135 = vunpack.c.l.b16 %v2080
  %v2136 = vunpack.c.l.b16 %v2081
  %v2137 = vunpack.c.l.b16 %v2082
  %v2138 = vunpack.c.l.b16 %v2083
  %v2139 = vunpack.c.l.b16 %v2084
  %v2140 = vunpack.c.l.b16 %v2085
  %v2141 = vunpack.c.l.b16 %v2086
  %v2142 = vunpack.c.l.b16 %v2087
  %v2143 = vunpack.c.l.b16 %v2088
  %v2144 = vunpack.c.l.b16 %v2089
  %v2145 = vunpack.c.l.b16 %v2090
  %v2146 = vunpack.c.l.b16 %v2091
  %v2147 = vunpack.c.l.b16 %v2092
  %v2148 = vunpack.c.l.b16 %v2093
  %v2149 = vunpack.c.l.b16 %v2094
  %v2150 = vunpack.c.l.b16 %v2095
  %v2151 = vpack.c.b16 %v2128, %v2127
  %v2152 = vpack.c.b16 %v2130, %v2129
  %v2153 = vpack.c.b16 %v2132, %v2131
  %v2154 = vpack.c.b16 %v2134, %v2133
  %v2155 = vpack.c.b16 %v2136, %v2135
  %v2156 = vpack.c.b16 %v2138, %v2137
  %v2157 = vpack.c.b16 %v2140, %v2139
  %v2158 = vpack.c.b16 %v2142, %v2141
  %v2159 = vpack.c.b16 %v2144, %v2143
  %v2160 = vpack.c.b16 %v2146, %v2145
  %v2161 = vpack.c.b16 %v2148, %v2147
  %v2162 = vpack.c.b16 %v2150, %v2149
  %vm2175 = vcmask 523264
  %v2177 = vsel %vm2175, %v2071, 0
  %2179 = vmatprep.subr.bf16.mxu0 0
  %2180 = vmatpush1.bf16.msra.mxu0 %v2151
  %2181 = vmatprep.subr.bf16.mxu0 0
  %2182 = vmatpush1.bf16.msra.mxu0 %v2152
  %2183 = vmatprep.subr.bf16.mxu0 0
  %2184 = vmatpush1.bf16.msra.mxu0 %v2153
  %2185 = vmatprep.subr.bf16.mxu0 0
  %2186 = vmatpush1.bf16.msra.mxu0 %v2154
  %2187 = vmatprep.subr.bf16.mxu0 0
  %2188 = vmatpush1.bf16.msra.mxu0 %v2155
  %2189 = vmatprep.subr.bf16.mxu0 0
  %2190 = vmatpush1.bf16.msra.mxu0 %v2156
  %2191 = vmatprep.subr.bf16.mxu0 0
  %2192 = vmatpush1.bf16.msra.mxu0 %v2157
  %2193 = vmatprep.subr.bf16.mxu0 0
  %2194 = vmatpush1.bf16.msra.mxu0 %v2158
  %2195 = vmatprep.subr.bf16.mxu0 0
  %2196 = vmatpush1.bf16.msra.mxu0 %v2159
  %2197 = vmatprep.subr.bf16.mxu0 0
  %2198 = vmatpush1.bf16.msra.mxu0 %v2160
  %2199 = vmatprep.subr.bf16.mxu0 0
  %2200 = vmatpush1.bf16.msra.mxu0 %v2161
  %2201 = vmatprep.subr.bf16.mxu0 0
  %2202 = vmatpush1.bf16.msra.mxu0 %v2162
  %2203 = vmatprep.subr.bf16.mxu0 0
  %2204 = vmatpush1.bf16.msra.mxu0 0
  %2205 = vmatprep.subr.bf16.mxu0 0
  %2206 = vmatpush1.bf16.msra.mxu0 0
  %2207 = vmatprep.subr.bf16.mxu0 0
  %2208 = vmatpush1.bf16.msra.mxu0 0
  %2209 = vmatprep.subr.bf16.mxu0 0
  %2210 = vmatpush1.bf16.msra.mxu0 0
  %2211 = vmatprep.mubr.bf16.mxu0 %v2177
  %2212 = vmatmul.mubr.bf16.gmra.mrb[0].mxu0 %v2070
  %v2213 = vpop.f32.mrb[0].mxu0
  %v2214 = vadd.f32 %v2101, %v2213
  %v2215 = vpop.f32.mrb[0].mxu0
  %v2216 = vpop.f32.mrb[0].mxu0
  %v2217 = vpop.f32.mrb[0].mxu0
  %2218 = vdwg.mxu0
  %vm2219 = vcmask 80896
  %v2220 = vsel %vm2219, %v2214, -inf
  %2221 = vmax.xlane.f32.xlu0 %v2220
  %v2222 = vpop.xlane.xlu0 %2221
  %v2223 = vsub.f32 %v2214, %v2222
  %v2224 = vmul.f32 %v2223, 1.442695
  %v2225 = vpow.pop %v2224
  %v2226 = vsel %vm2219, %v2225, 0.0
  %2227 = vadd.xlane.f32.xlu0 %v2226
  %v2228 = vpop.xlane.xlu0 %2227
  %v2229 = vlog2.pop %v2228
  %v2230 = vmul.f32 %v2229, 0.6931472
  %v2231 = vsub.f32 %v2223, %v2230
  %2232 = vst.msk [vmem:[%s7] sm:$0xff] %vm2219, %v2231
  // Predicated region
  $region30: #{cnn_cifar_forward.9} parent=0 // pred_check
    _
  $region31: #{cnn_cifar_forward.9} parent=0 // pred_check_branch
    %2234 = sbr.rel (0) target = $region33
  $region32: #{cnn_cifar_forward.9} parent=0 // pred_region
    _
  $region33: #{cnn_cifar_forward.9} parent=0 // pred_fallthru
    _
  // Predicated region
  $region34: #{cnn_cifar_forward.9} parent=0 // pred_check
    _
  $region35: #{cnn_cifar_forward.9} parent=0 // pred_check_branch
    %2236 = sbr.rel (0) target = $region37
  $region36: #{cnn_cifar_forward.9} parent=0 // pred_region
    _
  $region37: #{cnn_cifar_forward.9} parent=0 // pred_fallthru
    _

</llo_original>
